<compile_context>
chip_gen: v6e
topology: v6e:2x2x1
jax: 0.10.0
libtpu: 0.0.40
codegen_flags: <defaults>
</compile_context>

<pallas_src>
import math
from collections import OrderedDict

import numpy as np
import jax
import jax.numpy as jnp
from jax.experimental import pallas as pl
from jax.experimental.pallas import tpu as pltpu


PAD_TOP = 8  # sublane-aligned start row for pad-scratch interiors (f32 tile = 8)


# --------------------------------------------------------------------------
# Host-side weight preprocessing: convs -> banded / block-diagonal matrices
# acting on the lane-flattened [H, W*C] activation layout.
# --------------------------------------------------------------------------

def _conv3x3_banded(w, w_in, stride):
    """w: [3,3,Cin,Cout] -> 3 matrices [W_in*Cin, W_out*Cout] (one per ky).
    Column taps (kx), zero padding along W and the stride live in the band."""
    w = np.asarray(w, np.float32)
    _, _, cin, cout = w.shape
    w_out = w_in // stride
    mats = []
    for ky in range(3):
        m = np.zeros((w_in * cin, w_out * cout), np.float32)
        for jo in range(w_out):
            for kx in range(3):
                jin = stride * jo + kx - 1          # input column (unpadded)
                if 0 <= jin < w_in:
                    m[jin * cin:(jin + 1) * cin,
                      jo * cout:(jo + 1) * cout] = w[ky, kx]
        mats.append(m)
    return mats


def _conv1x1_blockdiag(w, w_sp):
    """w: [Cin, Cout] -> block-diagonal [W*Cin, W*Cout]."""
    return np.kron(np.eye(w_sp, dtype=np.float32), np.asarray(w, np.float32))


def _tiled_bias(b, w_sp):
    """b: [Cout] -> [1, W*Cout] (bias repeated per output column)."""
    return np.tile(np.asarray(b, np.float32), w_sp)[None, :]


def _wdup_matrix(w_small, co):
    """Nearest-2x duplication along W as a right matmul:
    [w_small*co, 2*w_small*co] 0/1 matrix, output block j = input block j//2."""
    d = np.zeros((w_small * co, 2 * w_small * co), np.float32)
    eye = np.eye(co, dtype=np.float32)
    for m in range(w_small):
        d[m * co:(m + 1) * co, (2 * m) * co:(2 * m + 1) * co] = eye
        d[m * co:(m + 1) * co, (2 * m + 1) * co:(2 * m + 2) * co] = eye
    return d


def _rdup_matrix(h_big, h_small):
    """Nearest-2x duplication along H as a left matmul: [h_big, h_small],
    output row r = input row r // 2."""
    r = np.zeros((h_big, h_small), np.float32)
    r[np.arange(h_big), np.arange(h_big) // 2] = 1.0
    return r


# --------------------------- parameter init -------------------------------

def _kaiming_uniform(key, shape, fan_in, a=1.0):
    bound = math.sqrt(6.0 / ((1.0 + a * a) * fan_in))
    return jax.random.uniform(key, shape, jnp.float32, -bound, bound)


def init_params(key, in_ch, backbone_channels, out_channels):
    params = {'backbone': [], 'inner': [], 'layer': []}
    keys = iter(jax.random.split(key, 4 * len(backbone_channels) + 2))
    # TODO(synk): generic nn.Module named_children introspection
    # (IntermediateLayerGetter over an arbitrary backbone) has no Pallas
    # equivalent; the backbone is synthesized in-script with fixed 3x3 stages.
    prev = in_ch
    for c in backbone_channels:
        fan_in = 9 * prev
        w = _kaiming_uniform(next(keys), (3, 3, prev, c), fan_in, a=math.sqrt(5))
        bb = 1.0 / math.sqrt(fan_in)
        b = jax.random.uniform(next(keys), (c,), jnp.float32, -bb, bb)
        params['backbone'].append((w, b))
        prev = c
    # FPN blocks: kaiming_uniform_(a=1), bias = 0 (exactly as in the module)
    for c in backbone_channels:
        wi = _kaiming_uniform(next(keys), (c, out_channels), fan_in=c, a=1.0)
        bi = jnp.zeros((out_channels,), jnp.float32)
        wl = _kaiming_uniform(next(keys), (3, 3, out_channels, out_channels),
                              fan_in=9 * out_channels, a=1.0)
        bl = jnp.zeros((out_channels,), jnp.float32)
        params['inner'].append((wi, bi))
        params['layer'].append((wl, bl))
    return params


def prepare_fused(params, in_ch, height, width, out_channels):
    """Fold conv weights into MXU-friendly banded / bf16 matrices and record
    the static per-level shape configuration used by the fused kernel."""
    bb, inner, layer = params['backbone'], params['inner'], params['layer']

    bb_in, feat_dims = [], []
    h, w, c = height, width, in_ch
    for (wc, _) in bb:
        bb_in.append((h, w, c))
        c = wc.shape[-1]
        h, w = h // 2, w // 2
        feat_dims.append((h, w, c))

    flat = []
    # backbone: (3x3 conv pad1 + ReLU) then 2x subsample  ==  stride-2 conv
    for s, (wc, b) in enumerate(bb):
        _, w_in, _ = bb_in[s]
        for m in _conv3x3_banded(wc, w_in, stride=2):
            flat.append(jnp.asarray(m, dtype=jnp.bfloat16))
        flat.append(jnp.asarray(_tiled_bias(b, w_in // 2), dtype=jnp.float32))
    # FPN lateral 1x1 convs
    for l, (wi, bi) in enumerate(inner):
        _, w_l, _ = feat_dims[l]
        flat.append(jnp.asarray(_conv1x1_blockdiag(wi, w_l), dtype=jnp.bfloat16))
        flat.append(jnp.asarray(_tiled_bias(bi, w_l), dtype=jnp.float32))
    # FPN 3x3 output convs
    for l, (wl, bl) in enumerate(layer):
        _, w_l, _ = feat_dims[l]
        for m in _conv3x3_banded(wl, w_l, stride=1):
            flat.append(jnp.asarray(m, dtype=jnp.bfloat16))
        flat.append(jnp.asarray(_tiled_bias(bl, w_l), dtype=jnp.float32))
    # nearest-2x upsample as two 0/1 matmuls per finer level (rows / W-blocks)
    for l in range(len(feat_dims) - 1):
        h_l, w_l, _ = feat_dims[l]
        h_s, w_s, _ = feat_dims[l + 1]
        flat.append(jnp.asarray(_rdup_matrix(h_l, h_s), dtype=jnp.bfloat16))
        flat.append(jnp.asarray(_wdup_matrix(w_s, out_channels),
                                dtype=jnp.bfloat16))

    cfg = dict(bb_in=tuple(bb_in), feat_dims=tuple(feat_dims),
               out_channels=out_channels, in_ch=in_ch,
               height=height, width=width)
    return flat, cfg


# ------------------------------ fused kernel --------------------------------

def _make_fused_kernel(cfg):
    n_lv = len(cfg['feat_dims'])
    co = cfg['out_channels']
    bb_in = cfg['bb_in']
    feat_dims = cfg['feat_dims']

    def conv3x3(pad_ref, h_out, stride, w_refs, b_ref, relu):
        """pad_ref holds: rows [0..PAD_TOP-1] zeros (only PAD_TOP-1 is read),
        data at rows [PAD_TOP .. PAD_TOP+h_in-1], and (stride-1 only) one zero
        row below the data.  Output is [h_out, Lout] f32 via 3 banded MXU
        matmuls; for stride 2 the operand rows are read with a strided slice
        so M = h_in//2 (no wasted FLOPs, no post-matmul subsample)."""
        lout = w_refs[0].shape[1]
        acc = jnp.zeros((h_out, lout), jnp.float32)
        for ky in range(3):
            if stride == 2:
                rows = pad_ref[pl.ds(PAD_TOP - 1 + ky, h_out, stride=2), :]
            else:
                rows = pad_ref[pl.ds(PAD_TOP - 1 + ky, h_out), :]
            acc = acc + jnp.dot(rows.astype(jnp.bfloat16), w_refs[ky][...],
                                preferred_element_type=jnp.float32)
        acc = acc + b_ref[...]
        if relu:
            acc = jnp.maximum(acc, 0.0)
        return acc

    def kernel(*refs):
        refs = list(refs)
        pos = 0

        def take(k):
            nonlocal pos
            out = refs[pos:pos + k]
            pos += k
            return out

        (x_ref,) = take(1)
        bb_w, bb_b = [], []
        for _ in range(n_lv):
            bb_w.append(take(3))
            bb_b.append(take(1)[0])
        in_w, in_b = [], []
        for _ in range(n_lv):
            in_w.append(take(1)[0])
            in_b.append(take(1)[0])
        ly_w, ly_b = [], []
        for _ in range(n_lv):
            ly_w.append(take(3))
            ly_b.append(take(1)[0])
        dup = take(2 * (n_lv - 1))
        rdup_w = [dup[2 * l] for l in range(n_lv - 1)]
        wdup_w = [dup[2 * l + 1] for l in range(n_lv - 1)]
        out_refs = take(n_lv)
        pad_bb = take(n_lv)
        pad_ly = take(n_lv)

        # ---- backbone: stride-2 3x3 conv (pad 1) + ReLU per stage ----------
        cur = x_ref[0, :, :]                               # [H0, W0*Cin]
        feats = []
        for s in range(n_lv):
            h_in, w_in, c_in = bb_in[s]
            lin = w_in * c_in
            pad = pad_bb[s]
            # only the single row above the data must be zero (ky=0 taps);
            # cheap per-step rewrite keeps it correct under megacore sharding.
            pad[PAD_TOP - 1:PAD_TOP, :] = jnp.zeros((1, lin), jnp.float32)
            pad[PAD_TOP:PAD_TOP + h_in, :] = cur           # aligned full store
            cur = conv3x3(pad, h_in // 2, 2, bb_w[s], bb_b[s], relu=True)
            feats.append(cur)

        # ---- FPN top-down pathway ------------------------------------------
        results = [None] * n_lv

        def layer_conv(l, v):
            h_l, w_l, _ = feat_dims[l]
            lco = w_l * co
            pad = pad_ly[l]
            pad[PAD_TOP - 1:PAD_TOP, :] = jnp.zeros((1, lco), jnp.float32)
            pad[PAD_TOP + h_l:PAD_TOP + h_l + 1, :] = (
                jnp.zeros((1, lco), jnp.float32))
            pad[PAD_TOP:PAD_TOP + h_l, :] = v              # aligned full store
            return conv3x3(pad, h_l, 1, ly_w[l], ly_b[l], relu=False)

        # coarsest level: lateral 1x1 only
        lc = n_lv - 1
        last_inner = jnp.dot(feats[lc].astype(jnp.bfloat16), in_w[lc][...],
                             preferred_element_type=jnp.float32) + in_b[lc][...]
        results[lc] = layer_conv(lc, last_inner)

        for l in range(n_lv - 2, -1, -1):
            h_l, w_l, _ = feat_dims[l]
            lat = jnp.dot(feats[l].astype(jnp.bfloat16), in_w[l][...],
                          preferred_element_type=jnp.float32) + in_b[l][...]
            # nearest-2x upsample of last_inner as two tiny 0/1 MXU matmuls:
            #   W-block duplication (right), then row duplication (left).
            small = jnp.dot(last_inner.astype(jnp.bfloat16), wdup_w[l][...],
                            preferred_element_type=jnp.float32)   # [h_s, w_l*co]
            up = jnp.dot(rdup_w[l][...], small.astype(jnp.bfloat16),
                         preferred_element_type=jnp.float32)      # [h_l, w_l*co]
            last_inner = lat + up                      # one lane-dense add
            results[l] = layer_conv(l, last_inner)     # one aligned full store

        # ---- write the FPN outputs (pool is computed in the wrapper) -------
        for l in range(n_lv):
            out_refs[l][0, :, :] = results[l]

    return kernel


# ------------------------------ forward ------------------------------------

def backbone_with_fpn_forward(prepped, x_nchw):
    flat_w, cfg = prepped
    n, c, h, w = x_nchw.shape
    assert (h, w, c) == (cfg['height'], cfg['width'], cfg['in_ch'])
    n_lv = len(cfg['feat_dims'])
    co = cfg['out_channels']

    # NCHW (PyTorch) -> lane-flattened NHWC slab [N, H, W*C]
    x = jnp.transpose(x_nchw, (0, 2, 3, 1)).reshape(n, h, w * c)

    def _const_spec(a):
        nd = a.ndim
        return pl.BlockSpec(a.shape, lambda b: (0,) * nd)

    in_specs = [pl.BlockSpec((1, h, w * c), lambda b: (b, 0, 0))]
    in_specs += [_const_spec(a) for a in flat_w]

    out_shapes, out_specs, out_hw = [], [], []
    for (h_l, w_l, _) in cfg['feat_dims']:
        out_shapes.append(jax.ShapeDtypeStruct((n, h_l, w_l * co), jnp.float32))
        out_specs.append(pl.BlockSpec((1, h_l, w_l * co), lambda b: (b, 0, 0)))
        out_hw.append((h_l, w_l))

    # pad scratch: 8 alignment rows above the data (row 7 is the zero row),
    # plus 1 zero row below for the stride-1 FPN convs.
    scratch = [pltpu.VMEM((PAD_TOP + hi, wi * ci), jnp.float32)
               for (hi, wi, ci) in cfg['bb_in']]
    scratch += [pltpu.VMEM((PAD_TOP + h_l + 1, w_l * co), jnp.float32)
                for (h_l, w_l, _) in cfg['feat_dims']]

    # explicit VMEM budget (weights are double-buffered by the pipeline)
    w_bytes = 2 * sum(int(a.size) * a.dtype.itemsize for a in flat_w)
    pad_bytes = 4 * (sum((PAD_TOP + hi) * wi * ci
                         for (hi, wi, ci) in cfg['bb_in'])
                     + sum((PAD_TOP + hl + 1) * wl * co
                           for (hl, wl, _) in cfg['feat_dims']))
    io_bytes = 2 * 4 * (h * w * c + sum(hl * wl * co
                                        for (hl, wl, _) in cfg['feat_dims']))
    vmem_limit = int(min(max(2 * (w_bytes + pad_bytes + io_bytes) + (4 << 20),
                             32 << 20), 48 << 20))

    outs = pl.pallas_call(
        _make_fused_kernel(cfg),
        out_shape=tuple(out_shapes),
        grid_spec=pltpu.PrefetchScalarGridSpec(
            num_scalar_prefetch=0,
            grid=(n,),
            in_specs=in_specs,
            out_specs=tuple(out_specs),
            scratch_shapes=scratch,
        ),
        compiler_params=pltpu.CompilerParams(
            dimension_semantics=("parallel",),
            vmem_limit_bytes=vmem_limit),
    )(x, *flat_w)

    # back to NCHW to match the PyTorch output convention
    names = ['feat{}'.format(i) for i in range(n_lv)]
    result = OrderedDict()
    for name, o, (h_l, w_l) in zip(names, outs, out_hw):
        result[name] = jnp.transpose(o.reshape(n, h_l, w_l, co), (0, 3, 1, 2))
    # LastLevelMaxPool with k=1, s=2 == strided subsample of the coarsest FPN
    # output; done in XLA on the already-materialized HBM result (per review).
    result['pool'] = result[names[-1]][:, :, ::2, ::2]
    return result


# -------------------------------- main --------------------------------------

if __name__ == "__main__":
    key = jax.random.PRNGKey(0)
    kx, kp = jax.random.split(key)

    # NCHW input, like the PyTorch module would receive.
    x = jax.random.normal(kx, (2, 4, 16, 16), jnp.float32)

    params = init_params(kp, in_ch=4, backbone_channels=(8, 16, 32),
                         out_channels=32)
    prepped = prepare_fused(params, in_ch=4, height=16, width=16,
                            out_channels=32)

    out = backbone_with_fpn_forward(prepped, x)
    out = jax.block_until_ready(out)

    expected = {
        'feat0': (2, 32, 8, 8),
        'feat1': (2, 32, 4, 4),
        'feat2': (2, 32, 2, 2),
        'pool': (2, 32, 1, 1),
    }
    assert list(out.keys()) == list(expected.keys())
    for k, v in out.items():
        assert tuple(v.shape) == expected[k], (k, v.shape)
        assert v.dtype == jnp.float32

    print("KERNEL_OK")
</pallas_src>

<mosaic_0001>
module attributes {stable_mosaic.version = 11 : i64} {
  func.func @kernel(%arg0: i32, %arg1: memref<1x16x64xf32, #tpu.memory_space<vmem>>, %arg2: memref<64x64xbf16, #tpu.memory_space<vmem>>, %arg3: memref<64x64xbf16, #tpu.memory_space<vmem>>, %arg4: memref<64x64xbf16, #tpu.memory_space<vmem>>, %arg5: memref<1x64xf32, #tpu.memory_space<vmem>>, %arg6: memref<64x64xbf16, #tpu.memory_space<vmem>>, %arg7: memref<64x64xbf16, #tpu.memory_space<vmem>>, %arg8: memref<64x64xbf16, #tpu.memory_space<vmem>>, %arg9: memref<1x64xf32, #tpu.memory_space<vmem>>, %arg10: memref<64x64xbf16, #tpu.memory_space<vmem>>, %arg11: memref<64x64xbf16, #tpu.memory_space<vmem>>, %arg12: memref<64x64xbf16, #tpu.memory_space<vmem>>, %arg13: memref<1x64xf32, #tpu.memory_space<vmem>>, %arg14: memref<64x256xbf16, #tpu.memory_space<vmem>>, %arg15: memref<1x256xf32, #tpu.memory_space<vmem>>, %arg16: memref<64x128xbf16, #tpu.memory_space<vmem>>, %arg17: memref<1x128xf32, #tpu.memory_space<vmem>>, %arg18: memref<64x64xbf16, #tpu.memory_space<vmem>>, %arg19: memref<1x64xf32, #tpu.memory_space<vmem>>, %arg20: memref<256x256xbf16, #tpu.memory_space<vmem>>, %arg21: memref<256x256xbf16, #tpu.memory_space<vmem>>, %arg22: memref<256x256xbf16, #tpu.memory_space<vmem>>, %arg23: memref<1x256xf32, #tpu.memory_space<vmem>>, %arg24: memref<128x128xbf16, #tpu.memory_space<vmem>>, %arg25: memref<128x128xbf16, #tpu.memory_space<vmem>>, %arg26: memref<128x128xbf16, #tpu.memory_space<vmem>>, %arg27: memref<1x128xf32, #tpu.memory_space<vmem>>, %arg28: memref<64x64xbf16, #tpu.memory_space<vmem>>, %arg29: memref<64x64xbf16, #tpu.memory_space<vmem>>, %arg30: memref<64x64xbf16, #tpu.memory_space<vmem>>, %arg31: memref<1x64xf32, #tpu.memory_space<vmem>>, %arg32: memref<8x4xbf16, #tpu.memory_space<vmem>>, %arg33: memref<128x256xbf16, #tpu.memory_space<vmem>>, %arg34: memref<4x2xbf16, #tpu.memory_space<vmem>>, %arg35: memref<64x128xbf16, #tpu.memory_space<vmem>>, %arg36: memref<1x8x256xf32, #tpu.memory_space<vmem>>, %arg37: memref<1x4x128xf32, #tpu.memory_space<vmem>>, %arg38: memref<1x2x64xf32, #tpu.memory_space<vmem>>, %arg39: memref<24x64xf32, #tpu.memory_space<vmem>>, %arg40: memref<16x64xf32, #tpu.memory_space<vmem>>, %arg41: memref<12x64xf32, #tpu.memory_space<vmem>>, %arg42: memref<17x256xf32, #tpu.memory_space<vmem>>, %arg43: memref<13x128xf32, #tpu.memory_space<vmem>>, %arg44: memref<11x64xf32, #tpu.memory_space<vmem>>) attributes {dimension_semantics = [#tpu.dimension_semantics<parallel>], iteration_bounds = array<i64: 2>, scalar_prefetch = 0 : i64, scratch_operands = 6 : i64, tpu.core_type = #tpu.core_type<tc>, window_params = [{transform_indices = @transform_0, window_bounds = array<i64: 1, 16, 64>}, {pipeline_mode = #tpu.pipeline_mode<synchronous>, transform_indices = @transform_1, window_bounds = array<i64: 64, 64>}, {pipeline_mode = #tpu.pipeline_mode<synchronous>, transform_indices = @transform_2, window_bounds = array<i64: 64, 64>}, {pipeline_mode = #tpu.pipeline_mode<synchronous>, transform_indices = @transform_3, window_bounds = array<i64: 64, 64>}, {pipeline_mode = #tpu.pipeline_mode<synchronous>, transform_indices = @transform_4, window_bounds = array<i64: 1, 64>}, {pipeline_mode = #tpu.pipeline_mode<synchronous>, transform_indices = @transform_5, window_bounds = array<i64: 64, 64>}, {pipeline_mode = #tpu.pipeline_mode<synchronous>, transform_indices = @transform_6, window_bounds = array<i64: 64, 64>}, {pipeline_mode = #tpu.pipeline_mode<synchronous>, transform_indices = @transform_7, window_bounds = array<i64: 64, 64>}, {pipeline_mode = #tpu.pipeline_mode<synchronous>, transform_indices = @transform_8, window_bounds = array<i64: 1, 64>}, {pipeline_mode = #tpu.pipeline_mode<synchronous>, transform_indices = @transform_9, window_bounds = array<i64: 64, 64>}, {pipeline_mode = #tpu.pipeline_mode<synchronous>, transform_indices = @transform_10, window_bounds = array<i64: 64, 64>}, {pipeline_mode = #tpu.pipeline_mode<synchronous>, transform_indices = @transform_11, window_bounds = array<i64: 64, 64>}, {pipeline_mode = #tpu.pipeline_mode<synchronous>, transform_indices = @transform_12, window_bounds = array<i64: 1, 64>}, {pipeline_mode = #tpu.pipeline_mode<synchronous>, transform_indices = @transform_13, window_bounds = array<i64: 64, 256>}, {pipeline_mode = #tpu.pipeline_mode<synchronous>, transform_indices = @transform_14, window_bounds = array<i64: 1, 256>}, {pipeline_mode = #tpu.pipeline_mode<synchronous>, transform_indices = @transform_15, window_bounds = array<i64: 64, 128>}, {pipeline_mode = #tpu.pipeline_mode<synchronous>, transform_indices = @transform_16, window_bounds = array<i64: 1, 128>}, {pipeline_mode = #tpu.pipeline_mode<synchronous>, transform_indices = @transform_17, window_bounds = array<i64: 64, 64>}, {pipeline_mode = #tpu.pipeline_mode<synchronous>, transform_indices = @transform_18, window_bounds = array<i64: 1, 64>}, {pipeline_mode = #tpu.pipeline_mode<synchronous>, transform_indices = @transform_19, window_bounds = array<i64: 256, 256>}, {pipeline_mode = #tpu.pipeline_mode<synchronous>, transform_indices = @transform_20, window_bounds = array<i64: 256, 256>}, {pipeline_mode = #tpu.pipeline_mode<synchronous>, transform_indices = @transform_21, window_bounds = array<i64: 256, 256>}, {pipeline_mode = #tpu.pipeline_mode<synchronous>, transform_indices = @transform_22, window_bounds = array<i64: 1, 256>}, {pipeline_mode = #tpu.pipeline_mode<synchronous>, transform_indices = @transform_23, window_bounds = array<i64: 128, 128>}, {pipeline_mode = #tpu.pipeline_mode<synchronous>, transform_indices = @transform_24, window_bounds = array<i64: 128, 128>}, {pipeline_mode = #tpu.pipeline_mode<synchronous>, transform_indices = @transform_25, window_bounds = array<i64: 128, 128>}, {pipeline_mode = #tpu.pipeline_mode<synchronous>, transform_indices = @transform_26, window_bounds = array<i64: 1, 128>}, {pipeline_mode = #tpu.pipeline_mode<synchronous>, transform_indices = @transform_27, window_bounds = array<i64: 64, 64>}, {pipeline_mode = #tpu.pipeline_mode<synchronous>, transform_indices = @transform_28, window_bounds = array<i64: 64, 64>}, {pipeline_mode = #tpu.pipeline_mode<synchronous>, transform_indices = @transform_29, window_bounds = array<i64: 64, 64>}, {pipeline_mode = #tpu.pipeline_mode<synchronous>, transform_indices = @transform_30, window_bounds = array<i64: 1, 64>}, {pipeline_mode = #tpu.pipeline_mode<synchronous>, transform_indices = @transform_31, window_bounds = array<i64: 8, 4>}, {pipeline_mode = #tpu.pipeline_mode<synchronous>, transform_indices = @transform_32, window_bounds = array<i64: 128, 256>}, {pipeline_mode = #tpu.pipeline_mode<synchronous>, transform_indices = @transform_33, window_bounds = array<i64: 4, 2>}, {pipeline_mode = #tpu.pipeline_mode<synchronous>, transform_indices = @transform_34, window_bounds = array<i64: 64, 128>}, {transform_indices = @transform_35, window_bounds = array<i64: 1, 8, 256>}, {transform_indices = @transform_36, window_bounds = array<i64: 1, 4, 128>}, {transform_indices = @transform_37, window_bounds = array<i64: 1, 2, 64>}]} {
    %c0 = arith.constant 0 : index
    %c0_0 = arith.constant 0 : index
    %c0_1 = arith.constant 0 : index
    %0 = vector.load %arg1[%c0, %c0_0, %c0_1] : memref<1x16x64xf32, #tpu.memory_space<vmem>>, vector<1x16x64xf32>
    %1 = vector.shape_cast %0 : vector<1x16x64xf32> to vector<16x64xf32>
    %cst = arith.constant 0.000000e+00 : f32
    %2 = vector.broadcast %cst : f32 to vector<1x64xf32>
    %c7 = arith.constant 7 : index
    %c0_2 = arith.constant 0 : index
    %3 = vector.load %arg39[%c7, %c0_2] : memref<24x64xf32, #tpu.memory_space<vmem>>, vector<1x64xf32>
    tpu.vector_store %arg39[%c7, %c0_2], %2 {strides = array<i32>} : memref<24x64xf32, #tpu.memory_space<vmem>>, vector<1x64xf32>,
    %c8 = arith.constant 8 : index
    %c0_3 = arith.constant 0 : index
    %4 = vector.load %arg39[%c8, %c0_3] : memref<24x64xf32, #tpu.memory_space<vmem>>, vector<16x64xf32>
    tpu.vector_store %arg39[%c8, %c0_3], %1 {strides = array<i32>} : memref<24x64xf32, #tpu.memory_space<vmem>>, vector<16x64xf32>,
    %cst_4 = arith.constant 0.000000e+00 : f32
    %5 = vector.broadcast %cst_4 : f32 to vector<8x64xf32>
    %c7_5 = arith.constant 7 : index
    %c0_6 = arith.constant 0 : index
    %6 = tpu.strided_load %arg39[%c7_5, %c0_6] {strides = array<i32: 2, 1>} : memref<24x64xf32, #tpu.memory_space<vmem>>, vector<8x64xf32>
    %7 = arith.truncf %6 : vector<8x64xf32> to vector<8x64xbf16>
    %c0_7 = arith.constant 0 : index
    %c0_8 = arith.constant 0 : index
    %8 = vector.load %arg2[%c0_7, %c0_8] : memref<64x64xbf16, #tpu.memory_space<vmem>>, vector<64x64xbf16>
    %cst_9 = arith.constant dense<0.000000e+00> : vector<8x64xf32>
    %9 = tpu.matmul %7, %8, %cst_9 {dimension_numbers = #tpu.dot_dimension_numbers<[1], [0], [0], [1], [0, 0, 1, 1], [], []>} : vector<8x64xbf16>, vector<64x64xbf16>, vector<8x64xf32> -> vector<8x64xf32>
    %10 = arith.addf %5, %9 : vector<8x64xf32>
    %c8_10 = arith.constant 8 : index
    %c0_11 = arith.constant 0 : index
    %11 = tpu.strided_load %arg39[%c8_10, %c0_11] {strides = array<i32: 2, 1>} : memref<24x64xf32, #tpu.memory_space<vmem>>, vector<8x64xf32>
    %12 = arith.truncf %11 : vector<8x64xf32> to vector<8x64xbf16>
    %c0_12 = arith.constant 0 : index
    %c0_13 = arith.constant 0 : index
    %13 = vector.load %arg3[%c0_12, %c0_13] : memref<64x64xbf16, #tpu.memory_space<vmem>>, vector<64x64xbf16>
    %cst_14 = arith.constant dense<0.000000e+00> : vector<8x64xf32>
    %14 = tpu.matmul %12, %13, %cst_14 {dimension_numbers = #tpu.dot_dimension_numbers<[1], [0], [0], [1], [0, 0, 1, 1], [], []>} : vector<8x64xbf16>, vector<64x64xbf16>, vector<8x64xf32> -> vector<8x64xf32>
    %15 = arith.addf %10, %14 : vector<8x64xf32>
    %c9 = arith.constant 9 : index
    %c0_15 = arith.constant 0 : index
    %16 = tpu.strided_load %arg39[%c9, %c0_15] {strides = array<i32: 2, 1>} : memref<24x64xf32, #tpu.memory_space<vmem>>, vector<8x64xf32>
    %17 = arith.truncf %16 : vector<8x64xf32> to vector<8x64xbf16>
    %c0_16 = arith.constant 0 : index
    %c0_17 = arith.constant 0 : index
    %18 = vector.load %arg4[%c0_16, %c0_17] : memref<64x64xbf16, #tpu.memory_space<vmem>>, vector<64x64xbf16>
    %cst_18 = arith.constant dense<0.000000e+00> : vector<8x64xf32>
    %19 = tpu.matmul %17, %18, %cst_18 {dimension_numbers = #tpu.dot_dimension_numbers<[1], [0], [0], [1], [0, 0, 1, 1], [], []>} : vector<8x64xbf16>, vector<64x64xbf16>, vector<8x64xf32> -> vector<8x64xf32>
    %20 = arith.addf %15, %19 : vector<8x64xf32>
    %c0_19 = arith.constant 0 : index
    %c0_20 = arith.constant 0 : index
    %21 = vector.load %arg5[%c0_19, %c0_20] : memref<1x64xf32, #tpu.memory_space<vmem>>, vector<1x64xf32>
    %22 = vector.broadcast %21 : vector<1x64xf32> to vector<8x64xf32>
    %23 = arith.addf %20, %22 : vector<8x64xf32>
    %cst_21 = arith.constant 0.000000e+00 : f32
    %24 = vector.broadcast %cst_21 : f32 to vector<8x64xf32>
    %25 = arith.maximumf %23, %24 : vector<8x64xf32>
    %cst_22 = arith.constant 0.000000e+00 : f32
    %26 = vector.broadcast %cst_22 : f32 to vector<1x64xf32>
    %c7_23 = arith.constant 7 : index
    %c0_24 = arith.constant 0 : index
    %27 = vector.load %arg40[%c7_23, %c0_24] : memref<16x64xf32, #tpu.memory_space<vmem>>, vector<1x64xf32>
    tpu.vector_store %arg40[%c7_23, %c0_24], %26 {strides = array<i32>} : memref<16x64xf32, #tpu.memory_space<vmem>>, vector<1x64xf32>,
    %c8_25 = arith.constant 8 : index
    %c0_26 = arith.constant 0 : index
    %28 = vector.load %arg40[%c8_25, %c0_26] : memref<16x64xf32, #tpu.memory_space<vmem>>, vector<8x64xf32>
    tpu.vector_store %arg40[%c8_25, %c0_26], %25 {strides = array<i32>} : memref<16x64xf32, #tpu.memory_space<vmem>>, vector<8x64xf32>,
    %cst_27 = arith.constant 0.000000e+00 : f32
    %29 = vector.broadcast %cst_27 : f32 to vector<4x64xf32>
    %c7_28 = arith.constant 7 : index
    %c0_29 = arith.constant 0 : index
    %30 = tpu.strided_load %arg40[%c7_28, %c0_29] {strides = array<i32: 2, 1>} : memref<16x64xf32, #tpu.memory_space<vmem>>, vector<4x64xf32>
    %31 = arith.truncf %30 : vector<4x64xf32> to vector<4x64xbf16>
    %c0_30 = arith.constant 0 : index
    %c0_31 = arith.constant 0 : index
    %32 = vector.load %arg6[%c0_30, %c0_31] : memref<64x64xbf16, #tpu.memory_space<vmem>>, vector<64x64xbf16>
    %cst_32 = arith.constant dense<0.000000e+00> : vector<4x64xf32>
    %33 = tpu.matmul %31, %32, %cst_32 {dimension_numbers = #tpu.dot_dimension_numbers<[1], [0], [0], [1], [0, 0, 1, 1], [], []>} : vector<4x64xbf16>, vector<64x64xbf16>, vector<4x64xf32> -> vector<4x64xf32>
    %34 = arith.addf %29, %33 : vector<4x64xf32>
    %c8_33 = arith.constant 8 : index
    %c0_34 = arith.constant 0 : index
    %35 = tpu.strided_load %arg40[%c8_33, %c0_34] {strides = array<i32: 2, 1>} : memref<16x64xf32, #tpu.memory_space<vmem>>, vector<4x64xf32>
    %36 = arith.truncf %35 : vector<4x64xf32> to vector<4x64xbf16>
    %c0_35 = arith.constant 0 : index
    %c0_36 = arith.constant 0 : index
    %37 = vector.load %arg7[%c0_35, %c0_36] : memref<64x64xbf16, #tpu.memory_space<vmem>>, vector<64x64xbf16>
    %cst_37 = arith.constant dense<0.000000e+00> : vector<4x64xf32>
    %38 = tpu.matmul %36, %37, %cst_37 {dimension_numbers = #tpu.dot_dimension_numbers<[1], [0], [0], [1], [0, 0, 1, 1], [], []>} : vector<4x64xbf16>, vector<64x64xbf16>, vector<4x64xf32> -> vector<4x64xf32>
    %39 = arith.addf %34, %38 : vector<4x64xf32>
    %c9_38 = arith.constant 9 : index
    %c0_39 = arith.constant 0 : index
    %40 = tpu.strided_load %arg40[%c9_38, %c0_39] {strides = array<i32: 2, 1>} : memref<16x64xf32, #tpu.memory_space<vmem>>, vector<4x64xf32>
    %41 = arith.truncf %40 : vector<4x64xf32> to vector<4x64xbf16>
    %c0_40 = arith.constant 0 : index
    %c0_41 = arith.constant 0 : index
    %42 = vector.load %arg8[%c0_40, %c0_41] : memref<64x64xbf16, #tpu.memory_space<vmem>>, vector<64x64xbf16>
    %cst_42 = arith.constant dense<0.000000e+00> : vector<4x64xf32>
    %43 = tpu.matmul %41, %42, %cst_42 {dimension_numbers = #tpu.dot_dimension_numbers<[1], [0], [0], [1], [0, 0, 1, 1], [], []>} : vector<4x64xbf16>, vector<64x64xbf16>, vector<4x64xf32> -> vector<4x64xf32>
    %44 = arith.addf %39, %43 : vector<4x64xf32>
    %c0_43 = arith.constant 0 : index
    %c0_44 = arith.constant 0 : index
    %45 = vector.load %arg9[%c0_43, %c0_44] : memref<1x64xf32, #tpu.memory_space<vmem>>, vector<1x64xf32>
    %46 = vector.broadcast %45 : vector<1x64xf32> to vector<4x64xf32>
    %47 = arith.addf %44, %46 : vector<4x64xf32>
    %cst_45 = arith.constant 0.000000e+00 : f32
    %48 = vector.broadcast %cst_45 : f32 to vector<4x64xf32>
    %49 = arith.maximumf %47, %48 : vector<4x64xf32>
    %cst_46 = arith.constant 0.000000e+00 : f32
    %50 = vector.broadcast %cst_46 : f32 to vector<1x64xf32>
    %c7_47 = arith.constant 7 : index
    %c0_48 = arith.constant 0 : index
    %51 = vector.load %arg41[%c7_47, %c0_48] : memref<12x64xf32, #tpu.memory_space<vmem>>, vector<1x64xf32>
    tpu.vector_store %arg41[%c7_47, %c0_48], %50 {strides = array<i32>} : memref<12x64xf32, #tpu.memory_space<vmem>>, vector<1x64xf32>,
    %c8_49 = arith.constant 8 : index
    %c0_50 = arith.constant 0 : index
    %52 = vector.load %arg41[%c8_49, %c0_50] : memref<12x64xf32, #tpu.memory_space<vmem>>, vector<4x64xf32>
    tpu.vector_store %arg41[%c8_49, %c0_50], %49 {strides = array<i32>} : memref<12x64xf32, #tpu.memory_space<vmem>>, vector<4x64xf32>,
    %cst_51 = arith.constant 0.000000e+00 : f32
    %53 = vector.broadcast %cst_51 : f32 to vector<2x64xf32>
    %c7_52 = arith.constant 7 : index
    %c0_53 = arith.constant 0 : index
    %54 = tpu.strided_load %arg41[%c7_52, %c0_53] {strides = array<i32: 2, 1>} : memref<12x64xf32, #tpu.memory_space<vmem>>, vector<2x64xf32>
    %55 = arith.truncf %54 : vector<2x64xf32> to vector<2x64xbf16>
    %c0_54 = arith.constant 0 : index
    %c0_55 = arith.constant 0 : index
    %56 = vector.load %arg10[%c0_54, %c0_55] : memref<64x64xbf16, #tpu.memory_space<vmem>>, vector<64x64xbf16>
    %cst_56 = arith.constant dense<0.000000e+00> : vector<2x64xf32>
    %57 = tpu.matmul %55, %56, %cst_56 {dimension_numbers = #tpu.dot_dimension_numbers<[1], [0], [0], [1], [0, 0, 1, 1], [], []>} : vector<2x64xbf16>, vector<64x64xbf16>, vector<2x64xf32> -> vector<2x64xf32>
    %58 = arith.addf %53, %57 : vector<2x64xf32>
    %c8_57 = arith.constant 8 : index
    %c0_58 = arith.constant 0 : index
    %59 = tpu.strided_load %arg41[%c8_57, %c0_58] {strides = array<i32: 2, 1>} : memref<12x64xf32, #tpu.memory_space<vmem>>, vector<2x64xf32>
    %60 = arith.truncf %59 : vector<2x64xf32> to vector<2x64xbf16>
    %c0_59 = arith.constant 0 : index
    %c0_60 = arith.constant 0 : index
    %61 = vector.load %arg11[%c0_59, %c0_60] : memref<64x64xbf16, #tpu.memory_space<vmem>>, vector<64x64xbf16>
    %cst_61 = arith.constant dense<0.000000e+00> : vector<2x64xf32>
    %62 = tpu.matmul %60, %61, %cst_61 {dimension_numbers = #tpu.dot_dimension_numbers<[1], [0], [0], [1], [0, 0, 1, 1], [], []>} : vector<2x64xbf16>, vector<64x64xbf16>, vector<2x64xf32> -> vector<2x64xf32>
    %63 = arith.addf %58, %62 : vector<2x64xf32>
    %c9_62 = arith.constant 9 : index
    %c0_63 = arith.constant 0 : index
    %64 = tpu.strided_load %arg41[%c9_62, %c0_63] {strides = array<i32: 2, 1>} : memref<12x64xf32, #tpu.memory_space<vmem>>, vector<2x64xf32>
    %65 = arith.truncf %64 : vector<2x64xf32> to vector<2x64xbf16>
    %c0_64 = arith.constant 0 : index
    %c0_65 = arith.constant 0 : index
    %66 = vector.load %arg12[%c0_64, %c0_65] : memref<64x64xbf16, #tpu.memory_space<vmem>>, vector<64x64xbf16>
    %cst_66 = arith.constant dense<0.000000e+00> : vector<2x64xf32>
    %67 = tpu.matmul %65, %66, %cst_66 {dimension_numbers = #tpu.dot_dimension_numbers<[1], [0], [0], [1], [0, 0, 1, 1], [], []>} : vector<2x64xbf16>, vector<64x64xbf16>, vector<2x64xf32> -> vector<2x64xf32>
    %68 = arith.addf %63, %67 : vector<2x64xf32>
    %c0_67 = arith.constant 0 : index
    %c0_68 = arith.constant 0 : index
    %69 = vector.load %arg13[%c0_67, %c0_68] : memref<1x64xf32, #tpu.memory_space<vmem>>, vector<1x64xf32>
    %70 = vector.broadcast %69 : vector<1x64xf32> to vector<2x64xf32>
    %71 = arith.addf %68, %70 : vector<2x64xf32>
    %cst_69 = arith.constant 0.000000e+00 : f32
    %72 = vector.broadcast %cst_69 : f32 to vector<2x64xf32>
    %73 = arith.maximumf %71, %72 : vector<2x64xf32>
    %74 = arith.truncf %73 : vector<2x64xf32> to vector<2x64xbf16>
    %c0_70 = arith.constant 0 : index
    %c0_71 = arith.constant 0 : index
    %75 = vector.load %arg18[%c0_70, %c0_71] : memref<64x64xbf16, #tpu.memory_space<vmem>>, vector<64x64xbf16>
    %cst_72 = arith.constant dense<0.000000e+00> : vector<2x64xf32>
    %76 = tpu.matmul %74, %75, %cst_72 {dimension_numbers = #tpu.dot_dimension_numbers<[1], [0], [0], [1], [0, 0, 1, 1], [], []>} : vector<2x64xbf16>, vector<64x64xbf16>, vector<2x64xf32> -> vector<2x64xf32>
    %c0_73 = arith.constant 0 : index
    %c0_74 = arith.constant 0 : index
    %77 = vector.load %arg19[%c0_73, %c0_74] : memref<1x64xf32, #tpu.memory_space<vmem>>, vector<1x64xf32>
    %78 = vector.broadcast %77 : vector<1x64xf32> to vector<2x64xf32>
    %79 = arith.addf %76, %78 : vector<2x64xf32>
    %cst_75 = arith.constant 0.000000e+00 : f32
    %80 = vector.broadcast %cst_75 : f32 to vector<1x64xf32>
    %c7_76 = arith.constant 7 : index
    %c0_77 = arith.constant 0 : index
    %81 = vector.load %arg44[%c7_76, %c0_77] : memref<11x64xf32, #tpu.memory_space<vmem>>, vector<1x64xf32>
    tpu.vector_store %arg44[%c7_76, %c0_77], %80 {strides = array<i32>} : memref<11x64xf32, #tpu.memory_space<vmem>>, vector<1x64xf32>,
    %cst_78 = arith.constant 0.000000e+00 : f32
    %82 = vector.broadcast %cst_78 : f32 to vector<1x64xf32>
    %c10 = arith.constant 10 : index
    %c0_79 = arith.constant 0 : index
    %83 = vector.load %arg44[%c10, %c0_79] : memref<11x64xf32, #tpu.memory_space<vmem>>, vector<1x64xf32>
    tpu.vector_store %arg44[%c10, %c0_79], %82 {strides = array<i32>} : memref<11x64xf32, #tpu.memory_space<vmem>>, vector<1x64xf32>,
    %c8_80 = arith.constant 8 : index
    %c0_81 = arith.constant 0 : index
    %84 = vector.load %arg44[%c8_80, %c0_81] : memref<11x64xf32, #tpu.memory_space<vmem>>, vector<2x64xf32>
    tpu.vector_store %arg44[%c8_80, %c0_81], %79 {strides = array<i32>} : memref<11x64xf32, #tpu.memory_space<vmem>>, vector<2x64xf32>,
    %cst_82 = arith.constant 0.000000e+00 : f32
    %85 = vector.broadcast %cst_82 : f32 to vector<2x64xf32>
    %c7_83 = arith.constant 7 : index
    %c0_84 = arith.constant 0 : index
    %86 = vector.load %arg44[%c7_83, %c0_84] : memref<11x64xf32, #tpu.memory_space<vmem>>, vector<2x64xf32>
    %87 = arith.truncf %86 : vector<2x64xf32> to vector<2x64xbf16>
    %c0_85 = arith.constant 0 : index
    %c0_86 = arith.constant 0 : index
    %88 = vector.load %arg28[%c0_85, %c0_86] : memref<64x64xbf16, #tpu.memory_space<vmem>>, vector<64x64xbf16>
    %cst_87 = arith.constant dense<0.000000e+00> : vector<2x64xf32>
    %89 = tpu.matmul %87, %88, %cst_87 {dimension_numbers = #tpu.dot_dimension_numbers<[1], [0], [0], [1], [0, 0, 1, 1], [], []>} : vector<2x64xbf16>, vector<64x64xbf16>, vector<2x64xf32> -> vector<2x64xf32>
    %90 = arith.addf %85, %89 : vector<2x64xf32>
    %c8_88 = arith.constant 8 : index
    %c0_89 = arith.constant 0 : index
    %91 = vector.load %arg44[%c8_88, %c0_89] : memref<11x64xf32, #tpu.memory_space<vmem>>, vector<2x64xf32>
    %92 = arith.truncf %91 : vector<2x64xf32> to vector<2x64xbf16>
    %c0_90 = arith.constant 0 : index
    %c0_91 = arith.constant 0 : index
    %93 = vector.load %arg29[%c0_90, %c0_91] : memref<64x64xbf16, #tpu.memory_space<vmem>>, vector<64x64xbf16>
    %cst_92 = arith.constant dense<0.000000e+00> : vector<2x64xf32>
    %94 = tpu.matmul %92, %93, %cst_92 {dimension_numbers = #tpu.dot_dimension_numbers<[1], [0], [0], [1], [0, 0, 1, 1], [], []>} : vector<2x64xbf16>, vector<64x64xbf16>, vector<2x64xf32> -> vector<2x64xf32>
    %95 = arith.addf %90, %94 : vector<2x64xf32>
    %c9_93 = arith.constant 9 : index
    %c0_94 = arith.constant 0 : index
    %96 = vector.load %arg44[%c9_93, %c0_94] : memref<11x64xf32, #tpu.memory_space<vmem>>, vector<2x64xf32>
    %97 = arith.truncf %96 : vector<2x64xf32> to vector<2x64xbf16>
    %c0_95 = arith.constant 0 : index
    %c0_96 = arith.constant 0 : index
    %98 = vector.load %arg30[%c0_95, %c0_96] : memref<64x64xbf16, #tpu.memory_space<vmem>>, vector<64x64xbf16>
    %cst_97 = arith.constant dense<0.000000e+00> : vector<2x64xf32>
    %99 = tpu.matmul %97, %98, %cst_97 {dimension_numbers = #tpu.dot_dimension_numbers<[1], [0], [0], [1], [0, 0, 1, 1], [], []>} : vector<2x64xbf16>, vector<64x64xbf16>, vector<2x64xf32> -> vector<2x64xf32>
    %100 = arith.addf %95, %99 : vector<2x64xf32>
    %c0_98 = arith.constant 0 : index
    %c0_99 = arith.constant 0 : index
    %101 = vector.load %arg31[%c0_98, %c0_99] : memref<1x64xf32, #tpu.memory_space<vmem>>, vector<1x64xf32>
    %102 = vector.broadcast %101 : vector<1x64xf32> to vector<2x64xf32>
    %103 = arith.addf %100, %102 : vector<2x64xf32>
    %104 = arith.truncf %49 : vector<4x64xf32> to vector<4x64xbf16>
    %c0_100 = arith.constant 0 : index
    %c0_101 = arith.constant 0 : index
    %105 = vector.load %arg16[%c0_100, %c0_101] : memref<64x128xbf16, #tpu.memory_space<vmem>>, vector<64x128xbf16>
    %cst_102 = arith.constant dense<0.000000e+00> : vector<4x128xf32>
    %106 = tpu.matmul %104, %105, %cst_102 {dimension_numbers = #tpu.dot_dimension_numbers<[1], [0], [0], [1], [0, 0, 1, 1], [], []>} : vector<4x64xbf16>, vector<64x128xbf16>, vector<4x128xf32> -> vector<4x128xf32>
    %c0_103 = arith.constant 0 : index
    %c0_104 = arith.constant 0 : index
    %107 = vector.load %arg17[%c0_103, %c0_104] : memref<1x128xf32, #tpu.memory_space<vmem>>, vector<1x128xf32>
    %108 = vector.broadcast %107 : vector<1x128xf32> to vector<4x128xf32>
    %109 = arith.addf %106, %108 : vector<4x128xf32>
    %110 = arith.truncf %79 : vector<2x64xf32> to vector<2x64xbf16>
    %c0_105 = arith.constant 0 : index
    %c0_106 = arith.constant 0 : index
    %111 = vector.load %arg35[%c0_105, %c0_106] : memref<64x128xbf16, #tpu.memory_space<vmem>>, vector<64x128xbf16>
    %cst_107 = arith.constant dense<0.000000e+00> : vector<2x128xf32>
    %112 = tpu.matmul %110, %111, %cst_107 {dimension_numbers = #tpu.dot_dimension_numbers<[1], [0], [0], [1], [0, 0, 1, 1], [], []>} : vector<2x64xbf16>, vector<64x128xbf16>, vector<2x128xf32> -> vector<2x128xf32>
    %c0_108 = arith.constant 0 : index
    %c0_109 = arith.constant 0 : index
    %113 = vector.load %arg34[%c0_108, %c0_109] : memref<4x2xbf16, #tpu.memory_space<vmem>>, vector<4x2xbf16>
    %114 = arith.truncf %112 : vector<2x128xf32> to vector<2x128xbf16>
    %cst_110 = arith.constant dense<0.000000e+00> : vector<4x128xf32>
    %115 = tpu.matmul %113, %114, %cst_110 {dimension_numbers = #tpu.dot_dimension_numbers<[1], [0], [0], [1], [0, 0, 1, 1], [], []>} : vector<4x2xbf16>, vector<2x128xbf16>, vector<4x128xf32> -> vector<4x128xf32>
    %116 = arith.addf %109, %115 : vector<4x128xf32>
    %cst_111 = arith.constant 0.000000e+00 : f32
    %117 = vector.broadcast %cst_111 : f32 to vector<1x128xf32>
    %c7_112 = arith.constant 7 : index
    %c0_113 = arith.constant 0 : index
    %118 = vector.load %arg43[%c7_112, %c0_113] : memref<13x128xf32, #tpu.memory_space<vmem>>, vector<1x128xf32>
    tpu.vector_store %arg43[%c7_112, %c0_113], %117 {strides = array<i32>} : memref<13x128xf32, #tpu.memory_space<vmem>>, vector<1x128xf32>,
    %cst_114 = arith.constant 0.000000e+00 : f32
    %119 = vector.broadcast %cst_114 : f32 to vector<1x128xf32>
    %c12 = arith.constant 12 : index
    %c0_115 = arith.constant 0 : index
    %120 = vector.load %arg43[%c12, %c0_115] : memref<13x128xf32, #tpu.memory_space<vmem>>, vector<1x128xf32>
    tpu.vector_store %arg43[%c12, %c0_115], %119 {strides = array<i32>} : memref<13x128xf32, #tpu.memory_space<vmem>>, vector<1x128xf32>,
    %c8_116 = arith.constant 8 : index
    %c0_117 = arith.constant 0 : index
    %121 = vector.load %arg43[%c8_116, %c0_117] : memref<13x128xf32, #tpu.memory_space<vmem>>, vector<4x128xf32>
    tpu.vector_store %arg43[%c8_116, %c0_117], %116 {strides = array<i32>} : memref<13x128xf32, #tpu.memory_space<vmem>>, vector<4x128xf32>,
    %cst_118 = arith.constant 0.000000e+00 : f32
    %122 = vector.broadcast %cst_118 : f32 to vector<4x128xf32>
    %c7_119 = arith.constant 7 : index
    %c0_120 = arith.constant 0 : index
    %123 = vector.load %arg43[%c7_119, %c0_120] : memref<13x128xf32, #tpu.memory_space<vmem>>, vector<4x128xf32>
    %124 = arith.truncf %123 : vector<4x128xf32> to vector<4x128xbf16>
    %c0_121 = arith.constant 0 : index
    %c0_122 = arith.constant 0 : index
    %125 = vector.load %arg24[%c0_121, %c0_122] : memref<128x128xbf16, #tpu.memory_space<vmem>>, vector<128x128xbf16>
    %cst_123 = arith.constant dense<0.000000e+00> : vector<4x128xf32>
    %126 = tpu.matmul %124, %125, %cst_123 {dimension_numbers = #tpu.dot_dimension_numbers<[1], [0], [0], [1], [0, 0, 1, 1], [], []>} : vector<4x128xbf16>, vector<128x128xbf16>, vector<4x128xf32> -> vector<4x128xf32>
    %127 = arith.addf %122, %126 : vector<4x128xf32>
    %c8_124 = arith.constant 8 : index
    %c0_125 = arith.constant 0 : index
    %128 = vector.load %arg43[%c8_124, %c0_125] : memref<13x128xf32, #tpu.memory_space<vmem>>, vector<4x128xf32>
    %129 = arith.truncf %128 : vector<4x128xf32> to vector<4x128xbf16>
    %c0_126 = arith.constant 0 : index
    %c0_127 = arith.constant 0 : index
    %130 = vector.load %arg25[%c0_126, %c0_127] : memref<128x128xbf16, #tpu.memory_space<vmem>>, vector<128x128xbf16>
    %cst_128 = arith.constant dense<0.000000e+00> : vector<4x128xf32>
    %131 = tpu.matmul %129, %130, %cst_128 {dimension_numbers = #tpu.dot_dimension_numbers<[1], [0], [0], [1], [0, 0, 1, 1], [], []>} : vector<4x128xbf16>, vector<128x128xbf16>, vector<4x128xf32> -> vector<4x128xf32>
    %132 = arith.addf %127, %131 : vector<4x128xf32>
    %c9_129 = arith.constant 9 : index
    %c0_130 = arith.constant 0 : index
    %133 = vector.load %arg43[%c9_129, %c0_130] : memref<13x128xf32, #tpu.memory_space<vmem>>, vector<4x128xf32>
    %134 = arith.truncf %133 : vector<4x128xf32> to vector<4x128xbf16>
    %c0_131 = arith.constant 0 : index
    %c0_132 = arith.constant 0 : index
    %135 = vector.load %arg26[%c0_131, %c0_132] : memref<128x128xbf16, #tpu.memory_space<vmem>>, vector<128x128xbf16>
    %cst_133 = arith.constant dense<0.000000e+00> : vector<4x128xf32>
    %136 = tpu.matmul %134, %135, %cst_133 {dimension_numbers = #tpu.dot_dimension_numbers<[1], [0], [0], [1], [0, 0, 1, 1], [], []>} : vector<4x128xbf16>, vector<128x128xbf16>, vector<4x128xf32> -> vector<4x128xf32>
    %137 = arith.addf %132, %136 : vector<4x128xf32>
    %c0_134 = arith.constant 0 : index
    %c0_135 = arith.constant 0 : index
    %138 = vector.load %arg27[%c0_134, %c0_135] : memref<1x128xf32, #tpu.memory_space<vmem>>, vector<1x128xf32>
    %139 = vector.broadcast %138 : vector<1x128xf32> to vector<4x128xf32>
    %140 = arith.addf %137, %139 : vector<4x128xf32>
    %141 = arith.truncf %25 : vector<8x64xf32> to vector<8x64xbf16>
    %c0_136 = arith.constant 0 : index
    %c0_137 = arith.constant 0 : index
    %142 = vector.load %arg14[%c0_136, %c0_137] : memref<64x256xbf16, #tpu.memory_space<vmem>>, vector<64x256xbf16>
    %cst_138 = arith.constant dense<0.000000e+00> : vector<8x256xf32>
    %143 = tpu.matmul %141, %142, %cst_138 {dimension_numbers = #tpu.dot_dimension_numbers<[1], [0], [0], [1], [0, 0, 1, 1], [], []>} : vector<8x64xbf16>, vector<64x256xbf16>, vector<8x256xf32> -> vector<8x256xf32>
    %c0_139 = arith.constant 0 : index
    %c0_140 = arith.constant 0 : index
    %144 = vector.load %arg15[%c0_139, %c0_140] : memref<1x256xf32, #tpu.memory_space<vmem>>, vector<1x256xf32>
    %145 = vector.broadcast %144 : vector<1x256xf32> to vector<8x256xf32>
    %146 = arith.addf %143, %145 : vector<8x256xf32>
    %147 = arith.truncf %116 : vector<4x128xf32> to vector<4x128xbf16>
    %c0_141 = arith.constant 0 : index
    %c0_142 = arith.constant 0 : index
    %148 = vector.load %arg33[%c0_141, %c0_142] : memref<128x256xbf16, #tpu.memory_space<vmem>>, vector<128x256xbf16>
    %cst_143 = arith.constant dense<0.000000e+00> : vector<4x256xf32>
    %149 = tpu.matmul %147, %148, %cst_143 {dimension_numbers = #tpu.dot_dimension_numbers<[1], [0], [0], [1], [0, 0, 1, 1], [], []>} : vector<4x128xbf16>, vector<128x256xbf16>, vector<4x256xf32> -> vector<4x256xf32>
    %c0_144 = arith.constant 0 : index
    %c0_145 = arith.constant 0 : index
    %150 = vector.load %arg32[%c0_144, %c0_145] : memref<8x4xbf16, #tpu.memory_space<vmem>>, vector<8x4xbf16>
    %151 = arith.truncf %149 : vector<4x256xf32> to vector<4x256xbf16>
    %cst_146 = arith.constant dense<0.000000e+00> : vector<8x256xf32>
    %152 = tpu.matmul %150, %151, %cst_146 {dimension_numbers = #tpu.dot_dimension_numbers<[1], [0], [0], [1], [0, 0, 1, 1], [], []>} : vector<8x4xbf16>, vector<4x256xbf16>, vector<8x256xf32> -> vector<8x256xf32>
    %153 = arith.addf %146, %152 : vector<8x256xf32>
    %cst_147 = arith.constant 0.000000e+00 : f32
    %154 = vector.broadcast %cst_147 : f32 to vector<1x256xf32>
    %c7_148 = arith.constant 7 : index
    %c0_149 = arith.constant 0 : index
    %155 = vector.load %arg42[%c7_148, %c0_149] : memref<17x256xf32, #tpu.memory_space<vmem>>, vector<1x256xf32>
    tpu.vector_store %arg42[%c7_148, %c0_149], %154 {strides = array<i32>} : memref<17x256xf32, #tpu.memory_space<vmem>>, vector<1x256xf32>,
    %cst_150 = arith.constant 0.000000e+00 : f32
    %156 = vector.broadcast %cst_150 : f32 to vector<1x256xf32>
    %c16 = arith.constant 16 : index
    %c0_151 = arith.constant 0 : index
    %157 = vector.load %arg42[%c16, %c0_151] : memref<17x256xf32, #tpu.memory_space<vmem>>, vector<1x256xf32>
    tpu.vector_store %arg42[%c16, %c0_151], %156 {strides = array<i32>} : memref<17x256xf32, #tpu.memory_space<vmem>>, vector<1x256xf32>,
    %c8_152 = arith.constant 8 : index
    %c0_153 = arith.constant 0 : index
    %158 = vector.load %arg42[%c8_152, %c0_153] : memref<17x256xf32, #tpu.memory_space<vmem>>, vector<8x256xf32>
    tpu.vector_store %arg42[%c8_152, %c0_153], %153 {strides = array<i32>} : memref<17x256xf32, #tpu.memory_space<vmem>>, vector<8x256xf32>,
    %cst_154 = arith.constant 0.000000e+00 : f32
    %159 = vector.broadcast %cst_154 : f32 to vector<8x256xf32>
    %c7_155 = arith.constant 7 : index
    %c0_156 = arith.constant 0 : index
    %160 = vector.load %arg42[%c7_155, %c0_156] : memref<17x256xf32, #tpu.memory_space<vmem>>, vector<8x256xf32>
    %161 = arith.truncf %160 : vector<8x256xf32> to vector<8x256xbf16>
    %c0_157 = arith.constant 0 : index
    %c0_158 = arith.constant 0 : index
    %162 = vector.load %arg20[%c0_157, %c0_158] : memref<256x256xbf16, #tpu.memory_space<vmem>>, vector<256x256xbf16>
    %cst_159 = arith.constant dense<0.000000e+00> : vector<8x256xf32>
    %163 = tpu.matmul %161, %162, %cst_159 {dimension_numbers = #tpu.dot_dimension_numbers<[1], [0], [0], [1], [0, 0, 1, 1], [], []>} : vector<8x256xbf16>, vector<256x256xbf16>, vector<8x256xf32> -> vector<8x256xf32>
    %164 = arith.addf %159, %163 : vector<8x256xf32>
    %c8_160 = arith.constant 8 : index
    %c0_161 = arith.constant 0 : index
    %165 = vector.load %arg42[%c8_160, %c0_161] : memref<17x256xf32, #tpu.memory_space<vmem>>, vector<8x256xf32>
    %166 = arith.truncf %165 : vector<8x256xf32> to vector<8x256xbf16>
    %c0_162 = arith.constant 0 : index
    %c0_163 = arith.constant 0 : index
    %167 = vector.load %arg21[%c0_162, %c0_163] : memref<256x256xbf16, #tpu.memory_space<vmem>>, vector<256x256xbf16>
    %cst_164 = arith.constant dense<0.000000e+00> : vector<8x256xf32>
    %168 = tpu.matmul %166, %167, %cst_164 {dimension_numbers = #tpu.dot_dimension_numbers<[1], [0], [0], [1], [0, 0, 1, 1], [], []>} : vector<8x256xbf16>, vector<256x256xbf16>, vector<8x256xf32> -> vector<8x256xf32>
    %169 = arith.addf %164, %168 : vector<8x256xf32>
    %c9_165 = arith.constant 9 : index
    %c0_166 = arith.constant 0 : index
    %170 = vector.load %arg42[%c9_165, %c0_166] : memref<17x256xf32, #tpu.memory_space<vmem>>, vector<8x256xf32>
    %171 = arith.truncf %170 : vector<8x256xf32> to vector<8x256xbf16>
    %c0_167 = arith.constant 0 : index
    %c0_168 = arith.constant 0 : index
    %172 = vector.load %arg22[%c0_167, %c0_168] : memref<256x256xbf16, #tpu.memory_space<vmem>>, vector<256x256xbf16>
    %cst_169 = arith.constant dense<0.000000e+00> : vector<8x256xf32>
    %173 = tpu.matmul %171, %172, %cst_169 {dimension_numbers = #tpu.dot_dimension_numbers<[1], [0], [0], [1], [0, 0, 1, 1], [], []>} : vector<8x256xbf16>, vector<256x256xbf16>, vector<8x256xf32> -> vector<8x256xf32>
    %174 = arith.addf %169, %173 : vector<8x256xf32>
    %c0_170 = arith.constant 0 : index
    %c0_171 = arith.constant 0 : index
    %175 = vector.load %arg23[%c0_170, %c0_171] : memref<1x256xf32, #tpu.memory_space<vmem>>, vector<1x256xf32>
    %176 = vector.broadcast %175 : vector<1x256xf32> to vector<8x256xf32>
    %177 = arith.addf %174, %176 : vector<8x256xf32>
    %c0_172 = arith.constant 0 : index
    %c0_173 = arith.constant 0 : index
    %c0_174 = arith.constant 0 : index
    %178 = vector.load %arg36[%c0_172, %c0_173, %c0_174] : memref<1x8x256xf32, #tpu.memory_space<vmem>>, vector<1x8x256xf32>
    %179 = vector.shape_cast %178 : vector<1x8x256xf32> to vector<8x256xf32>
    %180 = vector.shape_cast %177 : vector<8x256xf32> to vector<1x8x256xf32>
    tpu.vector_store %arg36[%c0_172, %c0_173, %c0_174], %180 {strides = array<i32>} : memref<1x8x256xf32, #tpu.memory_space<vmem>>, vector<1x8x256xf32>,
    %c0_175 = arith.constant 0 : index
    %c0_176 = arith.constant 0 : index
    %c0_177 = arith.constant 0 : index
    %181 = vector.load %arg37[%c0_175, %c0_176, %c0_177] : memref<1x4x128xf32, #tpu.memory_space<vmem>>, vector<1x4x128xf32>
    %182 = vector.shape_cast %181 : vector<1x4x128xf32> to vector<4x128xf32>
    %183 = vector.shape_cast %140 : vector<4x128xf32> to vector<1x4x128xf32>
    tpu.vector_store %arg37[%c0_175, %c0_176, %c0_177], %183 {strides = array<i32>} : memref<1x4x128xf32, #tpu.memory_space<vmem>>, vector<1x4x128xf32>,
    %c0_178 = arith.constant 0 : index
    %c0_179 = arith.constant 0 : index
    %c0_180 = arith.constant 0 : index
    %184 = vector.load %arg38[%c0_178, %c0_179, %c0_180] : memref<1x2x64xf32, #tpu.memory_space<vmem>>, vector<1x2x64xf32>
    %185 = vector.shape_cast %184 : vector<1x2x64xf32> to vector<2x64xf32>
    %186 = vector.shape_cast %103 : vector<2x64xf32> to vector<1x2x64xf32>
    tpu.vector_store %arg38[%c0_178, %c0_179, %c0_180], %186 {strides = array<i32>} : memref<1x2x64xf32, #tpu.memory_space<vmem>>, vector<1x2x64xf32>,
    return
  }
  func.func @transform_0(%arg0: i32) -> (i32, i32, i32) {
    %c0_i32 = arith.constant 0 : i32
    %c0_i32_0 = arith.constant 0 : i32
    %c0_i32_1 = arith.constant 0 : i32
    return %arg0, %c0_i32, %c0_i32_0 : i32, i32, i32
  }
  func.func @transform_1(%arg0: i32) -> (i32, i32) {
    %c0_i32 = arith.constant 0 : i32
    %c0_i32_0 = arith.constant 0 : i32
    %c0_i32_1 = arith.constant 0 : i32
    return %c0_i32, %c0_i32_0 : i32, i32
  }
  func.func @transform_2(%arg0: i32) -> (i32, i32) {
    %c0_i32 = arith.constant 0 : i32
    %c0_i32_0 = arith.constant 0 : i32
    %c0_i32_1 = arith.constant 0 : i32
    return %c0_i32, %c0_i32_0 : i32, i32
  }
  func.func @transform_3(%arg0: i32) -> (i32, i32) {
    %c0_i32 = arith.constant 0 : i32
    %c0_i32_0 = arith.constant 0 : i32
    %c0_i32_1 = arith.constant 0 : i32
    return %c0_i32, %c0_i32_0 : i32, i32
  }
  func.func @transform_4(%arg0: i32) -> (i32, i32) {
    %c0_i32 = arith.constant 0 : i32
    %c0_i32_0 = arith.constant 0 : i32
    %c0_i32_1 = arith.constant 0 : i32
    return %c0_i32, %c0_i32_0 : i32, i32
  }
  func.func @transform_5(%arg0: i32) -> (i32, i32) {
    %c0_i32 = arith.constant 0 : i32
    %c0_i32_0 = arith.constant 0 : i32
    %c0_i32_1 = arith.constant 0 : i32
    return %c0_i32, %c0_i32_0 : i32, i32
  }
  func.func @transform_6(%arg0: i32) -> (i32, i32) {
    %c0_i32 = arith.constant 0 : i32
    %c0_i32_0 = arith.constant 0 : i32
    %c0_i32_1 = arith.constant 0 : i32
    return %c0_i32, %c0_i32_0 : i32, i32
  }
  func.func @transform_7(%arg0: i32) -> (i32, i32) {
    %c0_i32 = arith.constant 0 : i32
    %c0_i32_0 = arith.constant 0 : i32
    %c0_i32_1 = arith.constant 0 : i32
    return %c0_i32, %c0_i32_0 : i32, i32
  }
  func.func @transform_8(%arg0: i32) -> (i32, i32) {
    %c0_i32 = arith.constant 0 : i32
    %c0_i32_0 = arith.constant 0 : i32
    %c0_i32_1 = arith.constant 0 : i32
    return %c0_i32, %c0_i32_0 : i32, i32
  }
  func.func @transform_9(%arg0: i32) -> (i32, i32) {
    %c0_i32 = arith.constant 0 : i32
    %c0_i32_0 = arith.constant 0 : i32
    %c0_i32_1 = arith.constant 0 : i32
    return %c0_i32, %c0_i32_0 : i32, i32
  }
  func.func @transform_10(%arg0: i32) -> (i32, i32) {
    %c0_i32 = arith.constant 0 : i32
    %c0_i32_0 = arith.constant 0 : i32
    %c0_i32_1 = arith.constant 0 : i32
    return %c0_i32, %c0_i32_0 : i32, i32
  }
  func.func @transform_11(%arg0: i32) -> (i32, i32) {
    %c0_i32 = arith.constant 0 : i32
    %c0_i32_0 = arith.constant 0 : i32
    %c0_i32_1 = arith.constant 0 : i32
    return %c0_i32, %c0_i32_0 : i32, i32
  }
  func.func @transform_12(%arg0: i32) -> (i32, i32) {
    %c0_i32 = arith.constant 0 : i32
    %c0_i32_0 = arith.constant 0 : i32
    %c0_i32_1 = arith.constant 0 : i32
    return %c0_i32, %c0_i32_0 : i32, i32
  }
  func.func @transform_13(%arg0: i32) -> (i32, i32) {
    %c0_i32 = arith.constant 0 : i32
    %c0_i32_0 = arith.constant 0 : i32
    %c0_i32_1 = arith.constant 0 : i32
    return %c0_i32, %c0_i32_0 : i32, i32
  }
  func.func @transform_14(%arg0: i32) -> (i32, i32) {
    %c0_i32 = arith.constant 0 : i32
    %c0_i32_0 = arith.constant 0 : i32
    %c0_i32_1 = arith.constant 0 : i32
    return %c0_i32, %c0_i32_0 : i32, i32
  }
  func.func @transform_15(%arg0: i32) -> (i32, i32) {
    %c0_i32 = arith.constant 0 : i32
    %c0_i32_0 = arith.constant 0 : i32
    %c0_i32_1 = arith.constant 0 : i32
    return %c0_i32, %c0_i32_0 : i32, i32
  }
  func.func @transform_16(%arg0: i32) -> (i32, i32) {
    %c0_i32 = arith.constant 0 : i32
    %c0_i32_0 = arith.constant 0 : i32
    %c0_i32_1 = arith.constant 0 : i32
    return %c0_i32, %c0_i32_0 : i32, i32
  }
  func.func @transform_17(%arg0: i32) -> (i32, i32) {
    %c0_i32 = arith.constant 0 : i32
    %c0_i32_0 = arith.constant 0 : i32
    %c0_i32_1 = arith.constant 0 : i32
    return %c0_i32, %c0_i32_0 : i32, i32
  }
  func.func @transform_18(%arg0: i32) -> (i32, i32) {
    %c0_i32 = arith.constant 0 : i32
    %c0_i32_0 = arith.constant 0 : i32
    %c0_i32_1 = arith.constant 0 : i32
    return %c0_i32, %c0_i32_0 : i32, i32
  }
  func.func @transform_19(%arg0: i32) -> (i32, i32) {
    %c0_i32 = arith.constant 0 : i32
    %c0_i32_0 = arith.constant 0 : i32
    %c0_i32_1 = arith.constant 0 : i32
    return %c0_i32, %c0_i32_0 : i32, i32
  }
  func.func @transform_20(%arg0: i32) -> (i32, i32) {
    %c0_i32 = arith.constant 0 : i32
    %c0_i32_0 = arith.constant 0 : i32
    %c0_i32_1 = arith.constant 0 : i32
    return %c0_i32, %c0_i32_0 : i32, i32
  }
  func.func @transform_21(%arg0: i32) -> (i32, i32) {
    %c0_i32 = arith.constant 0 : i32
    %c0_i32_0 = arith.constant 0 : i32
    %c0_i32_1 = arith.constant 0 : i32
    return %c0_i32, %c0_i32_0 : i32, i32
  }
  func.func @transform_22(%arg0: i32) -> (i32, i32) {
    %c0_i32 = arith.constant 0 : i32
    %c0_i32_0 = arith.constant 0 : i32
    %c0_i32_1 = arith.constant 0 : i32
    return %c0_i32, %c0_i32_0 : i32, i32
  }
  func.func @transform_23(%arg0: i32) -> (i32, i32) {
    %c0_i32 = arith.constant 0 : i32
    %c0_i32_0 = arith.constant 0 : i32
    %c0_i32_1 = arith.constant 0 : i32
    return %c0_i32, %c0_i32_0 : i32, i32
  }
  func.func @transform_24(%arg0: i32) -> (i32, i32) {
    %c0_i32 = arith.constant 0 : i32
    %c0_i32_0 = arith.constant 0 : i32
    %c0_i32_1 = arith.constant 0 : i32
    return %c0_i32, %c0_i32_0 : i32, i32
  }
  func.func @transform_25(%arg0: i32) -> (i32, i32) {
    %c0_i32 = arith.constant 0 : i32
    %c0_i32_0 = arith.constant 0 : i32
    %c0_i32_1 = arith.constant 0 : i32
    return %c0_i32, %c0_i32_0 : i32, i32
  }
  func.func @transform_26(%arg0: i32) -> (i32, i32) {
    %c0_i32 = arith.constant 0 : i32
    %c0_i32_0 = arith.constant 0 : i32
    %c0_i32_1 = arith.constant 0 : i32
    return %c0_i32, %c0_i32_0 : i32, i32
  }
  func.func @transform_27(%arg0: i32) -> (i32, i32) {
    %c0_i32 = arith.constant 0 : i32
    %c0_i32_0 = arith.constant 0 : i32
    %c0_i32_1 = arith.constant 0 : i32
    return %c0_i32, %c0_i32_0 : i32, i32
  }
  func.func @transform_28(%arg0: i32) -> (i32, i32) {
    %c0_i32 = arith.constant 0 : i32
    %c0_i32_0 = arith.constant 0 : i32
    %c0_i32_1 = arith.constant 0 : i32
    return %c0_i32, %c0_i32_0 : i32, i32
  }
  func.func @transform_29(%arg0: i32) -> (i32, i32) {
    %c0_i32 = arith.constant 0 : i32
    %c0_i32_0 = arith.constant 0 : i32
    %c0_i32_1 = arith.constant 0 : i32
    return %c0_i32, %c0_i32_0 : i32, i32
  }
  func.func @transform_30(%arg0: i32) -> (i32, i32) {
    %c0_i32 = arith.constant 0 : i32
    %c0_i32_0 = arith.constant 0 : i32
    %c0_i32_1 = arith.constant 0 : i32
    return %c0_i32, %c0_i32_0 : i32, i32
  }
  func.func @transform_31(%arg0: i32) -> (i32, i32) {
    %c0_i32 = arith.constant 0 : i32
    %c0_i32_0 = arith.constant 0 : i32
    %c0_i32_1 = arith.constant 0 : i32
    return %c0_i32, %c0_i32_0 : i32, i32
  }
  func.func @transform_32(%arg0: i32) -> (i32, i32) {
    %c0_i32 = arith.constant 0 : i32
    %c0_i32_0 = arith.constant 0 : i32
    %c0_i32_1 = arith.constant 0 : i32
    return %c0_i32, %c0_i32_0 : i32, i32
  }
  func.func @transform_33(%arg0: i32) -> (i32, i32) {
    %c0_i32 = arith.constant 0 : i32
    %c0_i32_0 = arith.constant 0 : i32
    %c0_i32_1 = arith.constant 0 : i32
    return %c0_i32, %c0_i32_0 : i32, i32
  }
  func.func @transform_34(%arg0: i32) -> (i32, i32) {
    %c0_i32 = arith.constant 0 : i32
    %c0_i32_0 = arith.constant 0 : i32
    %c0_i32_1 = arith.constant 0 : i32
    return %c0_i32, %c0_i32_0 : i32, i32
  }
  func.func @transform_35(%arg0: i32) -> (i32, i32, i32) {
    %c0_i32 = arith.constant 0 : i32
    %c0_i32_0 = arith.constant 0 : i32
    %c0_i32_1 = arith.constant 0 : i32
    return %arg0, %c0_i32, %c0_i32_0 : i32, i32, i32
  }
  func.func @transform_36(%arg0: i32) -> (i32, i32, i32) {
    %c0_i32 = arith.constant 0 : i32
    %c0_i32_0 = arith.constant 0 : i32
    %c0_i32_1 = arith.constant 0 : i32
    return %arg0, %c0_i32, %c0_i32_0 : i32, i32, i32
  }
  func.func @transform_37(%arg0: i32) -> (i32, i32, i32) {
    %c0_i32 = arith.constant 0 : i32
    %c0_i32_0 = arith.constant 0 : i32
    %c0_i32_1 = arith.constant 0 : i32
    return %arg0, %c0_i32, %c0_i32_0 : i32, i32, i32
  }
}

</mosaic_0001>

<llo_original>
// kernel: tpu_custom_call.1
$region0: #{tpu_custom_call.1}
  #allocation0 [shape = 'u32[]', space=smem, size = 0x4, offset = 0x4, fixed_abs, tag = 'smem constant byte address 0x4 - core index']
  #allocation1 [shape = 'u32[144,128]{1,0:T(1,128)}', space=vmem, size = 0x12000, scoped, tag = 'internal scratch']
  #allocation2 [shape = 'f32[24,64]{1,0:T(8,128)}', space=vmem, size = 0x3000, scoped, tag = 'scratch operand']
  #allocation3 [shape = 'f32[16,64]{1,0:T(8,128)}', space=vmem, size = 0x2000, scoped, tag = 'scratch operand']
  #allocation4 [shape = 'f32[12,64]{1,0:T(8,128)}', space=vmem, size = 0x2000, scoped, tag = 'scratch operand']
  #allocation5 [shape = 'f32[17,256]{1,0:T(8,128)}', space=vmem, size = 0x6000, scoped, tag = 'scratch operand']
  #allocation6 [shape = 'f32[13,128]{1,0:T(8,128)}', space=vmem, size = 0x2000, scoped, tag = 'scratch operand']
  #allocation7 [shape = 'f32[11,64]{1,0:T(8,128)}', space=vmem, size = 0x2000, scoped, tag = 'scratch operand']
  %s0 = inlined_call_operand.smem [shape: u32[38], index: -1, kind: input, shape index: {}]
  %s1 = sld [smem:[%s0]]
  %s2 = scalar_lea.smem %s0, 1
  %s3 = sld [smem:[%s2]]
  %s4 = scalar_lea.smem %s0, 2
  %s5 = sld [smem:[%s4]]
  %s6 = scalar_lea.smem %s0, 3
  %s7 = sld [smem:[%s6]]
  %s8 = scalar_lea.smem %s0, 4
  %s9 = sld [smem:[%s8]]
  %s10 = scalar_lea.smem %s0, 5
  %s11 = sld [smem:[%s10]]
  %s12 = scalar_lea.smem %s0, 6
  %s13 = sld [smem:[%s12]]
  %s14 = scalar_lea.smem %s0, 7
  %s15 = sld [smem:[%s14]]
  %s16 = scalar_lea.smem %s0, 8
  %s17 = sld [smem:[%s16]]
  %s18 = scalar_lea.smem %s0, 9
  %s19 = sld [smem:[%s18]]
  %s20 = scalar_lea.smem %s0, 10
  %s21 = sld [smem:[%s20]]
  %s22 = scalar_lea.smem %s0, 11
  %s23 = sld [smem:[%s22]]
  %s24 = scalar_lea.smem %s0, 12
  %s25 = sld [smem:[%s24]]
  %s26 = scalar_lea.smem %s0, 13
  %s27 = sld [smem:[%s26]]
  %s28 = scalar_lea.smem %s0, 14
  %s29 = sld [smem:[%s28]]
  %s30 = scalar_lea.smem %s0, 15
  %s31 = sld [smem:[%s30]]
  %s32 = scalar_lea.smem %s0, 16
  %s33 = sld [smem:[%s32]]
  %s34 = scalar_lea.smem %s0, 17
  %s35 = sld [smem:[%s34]]
  %s36 = scalar_lea.smem %s0, 18
  %s37 = sld [smem:[%s36]]
  %s38 = scalar_lea.smem %s0, 19
  %s39 = sld [smem:[%s38]]
  %s40 = scalar_lea.smem %s0, 20
  %s41 = sld [smem:[%s40]]
  %s42 = scalar_lea.smem %s0, 21
  %s43 = sld [smem:[%s42]]
  %s44 = scalar_lea.smem %s0, 22
  %s45 = sld [smem:[%s44]]
  %s46 = scalar_lea.smem %s0, 23
  %s47 = sld [smem:[%s46]]
  %s48 = scalar_lea.smem %s0, 24
  %s49 = sld [smem:[%s48]]
  %s50 = scalar_lea.smem %s0, 25
  %s51 = sld [smem:[%s50]]
  %s52 = scalar_lea.smem %s0, 26
  %s53 = sld [smem:[%s52]]
  %s54 = scalar_lea.smem %s0, 27
  %s55 = sld [smem:[%s54]]
  %s56 = scalar_lea.smem %s0, 28
  %s57 = sld [smem:[%s56]]
  %s58 = scalar_lea.smem %s0, 29
  %s59 = sld [smem:[%s58]]
  %s60 = scalar_lea.smem %s0, 30
  %s61 = sld [smem:[%s60]]
  %s62 = scalar_lea.smem %s0, 31
  %s63 = sld [smem:[%s62]]
  %s64 = scalar_lea.smem %s0, 32
  %s65 = sld [smem:[%s64]]
  %s66 = scalar_lea.smem %s0, 33
  %s67 = sld [smem:[%s66]]
  %s68 = scalar_lea.smem %s0, 34
  %s69 = sld [smem:[%s68]]
  %s70 = scalar_lea.smem %s0, 35
  %s71 = sld [smem:[%s70]]
  %s72 = scalar_lea.smem %s0, 36
  %s73 = sld [smem:[%s72]]
  %s74 = scalar_lea.smem %s0, 37
  %s75 = sld [smem:[%s74]]
  %76 = xla_tuple %s71, %s73, %s75
  %s77 = sld [smem:[#allocation0]]
  $region309: #{tpu_custom_call.1} parent=0
    _
  %s79 = ssub.s32 1, %s77
  %s80 = scalar_select 0, %s79, %s77
  $region1: #{tpu_custom_call.1} parent=0
    #allocation8 [shape = 'u8[16384]{0}', space=vmem, size = 0x4000, scoped, tag = 'input window, operand 0']
    #allocation9 [shape = 's32[2]{0}', space=sflag, size = 0x8, scoped, tag = 'scoped memory for tpu_custom_call.1']
    #allocation10 [shape = 's32[2]{0}', space=sflag, size = 0x8, scoped, tag = 'scoped memory for tpu_custom_call.1']
    #allocation11 [shape = 'u8[16384]{0}', space=vmem, size = 0x4000, scoped, tag = 'input window, operand 1, single buffered']
    #allocation12 [shape = 's32[1]{0}', space=sflag, size = 0x4, scoped, tag = 'scoped memory for tpu_custom_call.1']
    #allocation13 [shape = 'u8[16384]{0}', space=vmem, size = 0x4000, scoped, tag = 'input window, operand 2, single buffered']
    #allocation14 [shape = 'u8[16384]{0}', space=vmem, size = 0x4000, scoped, tag = 'input window, operand 3, single buffered']
    #allocation15 [shape = 's32[1]{0}', space=sflag, size = 0x4, scoped, tag = 'scoped memory for tpu_custom_call.1']
    #allocation16 [shape = 'u8[16384]{0}', space=vmem, size = 0x4000, scoped, tag = 'input window, operand 5, single buffered']
    #allocation17 [shape = 'u8[16384]{0}', space=vmem, size = 0x4000, scoped, tag = 'input window, operand 6, single buffered']
    #allocation18 [shape = 's32[1]{0}', space=sflag, size = 0x4, scoped, tag = 'scoped memory for tpu_custom_call.1']
    #allocation19 [shape = 'u8[16384]{0}', space=vmem, size = 0x4000, scoped, tag = 'input window, operand 7, single buffered']
    #allocation20 [shape = 'u8[512]{0}', space=vmem, size = 0x400, scoped, tag = 'input window, operand 8, single buffered']
    #allocation21 [shape = 's32[1]{0}', space=sflag, size = 0x4, scoped, tag = 'scoped memory for tpu_custom_call.1']
    #allocation22 [shape = 'u8[16384]{0}', space=vmem, size = 0x4000, scoped, tag = 'input window, operand 9, single buffered']
    #allocation23 [shape = 'u8[16384]{0}', space=vmem, size = 0x4000, scoped, tag = 'input window, operand 10, single buffered']
    #allocation24 [shape = 's32[1]{0}', space=sflag, size = 0x4, scoped, tag = 'scoped memory for tpu_custom_call.1']
    #allocation25 [shape = 'u8[16384]{0}', space=vmem, size = 0x4000, scoped, tag = 'input window, operand 11, single buffered']
    #allocation26 [shape = 'u8[512]{0}', space=vmem, size = 0x400, scoped, tag = 'input window, operand 12, single buffered']
    #allocation27 [shape = 's32[1]{0}', space=sflag, size = 0x4, scoped, tag = 'scoped memory for tpu_custom_call.1']
    #allocation28 [shape = 'u8[32768]{0}', space=vmem, size = 0x8000, scoped, tag = 'input window, operand 13, single buffered']
    #allocation29 [shape = 'u8[1024]{0}', space=vmem, size = 0x400, scoped, tag = 'input window, operand 14, single buffered']
    #allocation30 [shape = 's32[1]{0}', space=sflag, size = 0x4, scoped, tag = 'scoped memory for tpu_custom_call.1']
    #allocation31 [shape = 'u8[512]{0}', space=vmem, size = 0x400, scoped, tag = 'input window, operand 16, single buffered']
    #allocation32 [shape = 'u8[16384]{0}', space=vmem, size = 0x4000, scoped, tag = 'input window, operand 17, single buffered']
    #allocation33 [shape = 's32[1]{0}', space=sflag, size = 0x4, scoped, tag = 'scoped memory for tpu_custom_call.1']
    #allocation34 [shape = 'u8[512]{0}', space=vmem, size = 0x400, scoped, tag = 'input window, operand 18, single buffered']
    #allocation35 [shape = 'u8[131072]{0}', space=vmem, size = 0x20000, scoped, tag = 'input window, operand 19, single buffered']
    #allocation36 [shape = 's32[1]{0}', space=sflag, size = 0x4, scoped, tag = 'scoped memory for tpu_custom_call.1']
    #allocation37 [shape = 'u8[131072]{0}', space=vmem, size = 0x20000, scoped, tag = 'input window, operand 20, single buffered']
    #allocation38 [shape = 'u8[131072]{0}', space=vmem, size = 0x20000, scoped, tag = 'input window, operand 21, single buffered']
    #allocation39 [shape = 's32[1]{0}', space=sflag, size = 0x4, scoped, tag = 'scoped memory for tpu_custom_call.1']
    #allocation40 [shape = 'u8[1024]{0}', space=vmem, size = 0x400, scoped, tag = 'input window, operand 22, single buffered']
    #allocation41 [shape = 'u8[32768]{0}', space=vmem, size = 0x8000, scoped, tag = 'input window, operand 23, single buffered']
    #allocation42 [shape = 's32[1]{0}', space=sflag, size = 0x4, scoped, tag = 'scoped memory for tpu_custom_call.1']
    #allocation43 [shape = 'u8[32768]{0}', space=vmem, size = 0x8000, scoped, tag = 'input window, operand 24, single buffered']
    #allocation44 [shape = 'u8[32768]{0}', space=vmem, size = 0x8000, scoped, tag = 'input window, operand 25, single buffered']
    #allocation45 [shape = 's32[1]{0}', space=sflag, size = 0x4, scoped, tag = 'scoped memory for tpu_custom_call.1']
    #allocation46 [shape = 'u8[512]{0}', space=vmem, size = 0x400, scoped, tag = 'input window, operand 26, single buffered']
    #allocation47 [shape = 'u8[16384]{0}', space=vmem, size = 0x4000, scoped, tag = 'input window, operand 27, single buffered']
    #allocation48 [shape = 's32[1]{0}', space=sflag, size = 0x4, scoped, tag = 'scoped memory for tpu_custom_call.1']
    #allocation49 [shape = 'u8[16384]{0}', space=vmem, size = 0x4000, scoped, tag = 'input window, operand 28, single buffered']
    #allocation50 [shape = 'u8[16384]{0}', space=vmem, size = 0x4000, scoped, tag = 'input window, operand 29, single buffered']
    #allocation51 [shape = 's32[1]{0}', space=sflag, size = 0x4, scoped, tag = 'scoped memory for tpu_custom_call.1']
    #allocation52 [shape = 'u8[512]{0}', space=vmem, size = 0x400, scoped, tag = 'input window, operand 30, single buffered']
    #allocation53 [shape = 'u8[65536]{0}', space=vmem, size = 0x10000, scoped, tag = 'input window, operand 32, single buffered']
    #allocation54 [shape = 's32[1]{0}', space=sflag, size = 0x4, scoped, tag = 'scoped memory for tpu_custom_call.1']
    #allocation55 [shape = 'u8[16384]{0}', space=vmem, size = 0x4000, scoped, tag = 'output window, operand 0']
    #allocation56 [shape = 'u8[4096]{0}', space=vmem, size = 0x1000, scoped, tag = 'output window, operand 1']
    #allocation57 [shape = 's32[2]{0}', space=sflag, size = 0x8, scoped, tag = 'scoped memory for tpu_custom_call.1']
    #allocation58 [shape = 'u8[2048]{0}', space=vmem, size = 0x800, scoped, tag = 'output window, operand 2']
    %81 = vsyncpa [#allocation9], 0
    %s82 = scalar_lea.sflag [#allocation9], 1
    %83 = vsyncpa %s82, 0
    %84 = vsyncpa [#allocation12], 0
    %85 = vsyncpa [#allocation15], 0
    %86 = vsyncpa [#allocation18], 0
    %87 = vsyncpa [#allocation21], 0
    %88 = vsyncpa [#allocation24], 0
    %89 = vsyncpa [#allocation27], 0
    %90 = vsyncpa [#allocation30], 0
    %91 = vsyncpa [#allocation33], 0
    %92 = vsyncpa [#allocation36], 0
    %93 = vsyncpa [#allocation39], 0
    %94 = vsyncpa [#allocation42], 0
    %95 = vsyncpa [#allocation45], 0
    %96 = vsyncpa [#allocation48], 0
    %97 = vsyncpa [#allocation51], 0
    %98 = vsyncpa [#allocation54], 0
    %99 = vsyncpa [#allocation10], 0
    %s100 = scalar_lea.sflag [#allocation10], 1
    %101 = vsyncpa %s100, 0
    %102 = vsyncpa [#allocation57], 0
    %s103 = scalar_lea.sflag [#allocation57], 1
    %104 = vsyncpa %s103, 0
    loop: start=0, step=1, limit=4
    $region2: #{tpu_custom_call.1} parent=1 // loop_pre_header
      _
    $region3: #{tpu_custom_call.1} parent=1 // loop_header
      %s106 = sphi 0, %s110
      %p107 = scmp.ge.s32.totalorder %s106, 4
      %s116 = sphi 0, %s118
      %s119 = sphi 0, %s116
      %s120 = sphi 0, %s119
      %s136 = sphi 0, %s120
      %s140 = sphi 0, %s140
      %s142 = sphi 0, %s140
      %s143 = sphi 0, %s142
      %s157 = sphi 0, %s143
      %s161 = sphi 0, %s161
      %s163 = sphi 0, %s161
      %s164 = sphi 0, %s163
      %s178 = sphi 0, %s164
      %s182 = sphi 0, %s182
      %s184 = sphi 0, %s182
      %s185 = sphi 0, %s184
      %s199 = sphi 0, %s185
      %s203 = sphi 0, %s203
      %s205 = sphi 0, %s203
      %s206 = sphi 0, %s205
      %s220 = sphi 0, %s206
      %s224 = sphi 0, %s224
      %s226 = sphi 0, %s224
      %s227 = sphi 0, %s226
      %s241 = sphi 0, %s227
      %s245 = sphi 0, %s245
      %s247 = sphi 0, %s245
      %s248 = sphi 0, %s247
      %s262 = sphi 0, %s248
      %s266 = sphi 0, %s266
      %s268 = sphi 0, %s266
      %s269 = sphi 0, %s268
      %s283 = sphi 0, %s269
      %s287 = sphi 0, %s287
      %s289 = sphi 0, %s287
      %s290 = sphi 0, %s289
      %s304 = sphi 0, %s290
      %s308 = sphi 0, %s308
      %s310 = sphi 0, %s308
      %s311 = sphi 0, %s310
      %s325 = sphi 0, %s311
      %s329 = sphi 0, %s329
      %s331 = sphi 0, %s329
      %s332 = sphi 0, %s331
      %s346 = sphi 0, %s332
      %s350 = sphi 0, %s350
      %s352 = sphi 0, %s350
      %s353 = sphi 0, %s352
      %s367 = sphi 0, %s353
      %s371 = sphi 0, %s371
      %s373 = sphi 0, %s371
      %s374 = sphi 0, %s373
      %s388 = sphi 0, %s374
      %s392 = sphi 0, %s392
      %s394 = sphi 0, %s392
      %s395 = sphi 0, %s394
      %s409 = sphi 0, %s395
      %s413 = sphi 0, %s413
      %s415 = sphi 0, %s413
      %s416 = sphi 0, %s415
      %s430 = sphi 0, %s416
      %s434 = sphi 0, %s434
      %s436 = sphi 0, %s434
      %s437 = sphi 0, %s436
      %s451 = sphi 0, %s437
      %s455 = sphi 0, %s455
      %s457 = sphi 0, %s455
      %s458 = sphi 0, %s457
      %s472 = sphi 0, %s458
      %s476 = sphi 0, %s476
      %s478 = sphi 0, %s476
      %s479 = sphi 0, %s478
      %s493 = sphi 0, %s479
      %s497 = sphi 0, %s497
      %s499 = sphi 0, %s497
      %s500 = sphi 0, %s499
      %s514 = sphi 0, %s500
      %s518 = sphi 0, %s518
      %s520 = sphi 0, %s518
      %s521 = sphi 0, %s520
      %s535 = sphi 0, %s521
      %s539 = sphi 0, %s539
      %s541 = sphi 0, %s539
      %s542 = sphi 0, %s541
      %s556 = sphi 0, %s542
      %s560 = sphi 0, %s560
      %s562 = sphi 0, %s560
      %s563 = sphi 0, %s562
      %s577 = sphi 0, %s563
      %s581 = sphi 0, %s581
      %s583 = sphi 0, %s581
      %s584 = sphi 0, %s583
      %s598 = sphi 0, %s584
      %s602 = sphi 0, %s602
      %s604 = sphi 0, %s602
      %s605 = sphi 0, %s604
      %s619 = sphi 0, %s605
      %s623 = sphi 0, %s623
      %s625 = sphi 0, %s623
      %s626 = sphi 0, %s625
      %s640 = sphi 0, %s626
      %s644 = sphi 0, %s644
      %s646 = sphi 0, %s644
      %s647 = sphi 0, %s646
      %s661 = sphi 0, %s647
      %s665 = sphi 0, %s665
      %s667 = sphi 0, %s665
      %s668 = sphi 0, %s667
      %s682 = sphi 0, %s668
      %s686 = sphi 0, %s686
      %s688 = sphi 0, %s686
      %s689 = sphi 0, %s688
      %s703 = sphi 0, %s689
      %s707 = sphi 0, %s707
      %s709 = sphi 0, %s707
      %s710 = sphi 0, %s709
      %s724 = sphi 0, %s710
      %s728 = sphi 0, %s728
      %s730 = sphi 0, %s728
      %s731 = sphi 0, %s730
      %s745 = sphi 0, %s731
      %s749 = sphi 0, %s749
      %s751 = sphi 0, %s749
      %s752 = sphi 0, %s751
      %s766 = sphi 0, %s752
      %s770 = sphi 0, %s770
      %s772 = sphi 0, %s770
      %s773 = sphi 0, %s772
      %s787 = sphi 0, %s773
      %s791 = sphi 0, %s791
      %s793 = sphi 0, %s791
      %s794 = sphi 0, %s793
      %s808 = sphi 0, %s794
      %s812 = sphi 0, %s812
      %s814 = sphi 0, %s812
      %s815 = sphi 0, %s814
      %s829 = sphi 0, %s815
      %s833 = sphi 0, %s833
      %s835 = sphi 0, %s833
      %s836 = sphi 0, %s835
      %s850 = sphi 0, %s836
      %s856 = sphi 0, %s858
      %s859 = sphi 0, %s856
      %s860 = sphi 0, %s859
      %s876 = sphi 0, %s860
      %s882 = sphi 0, %s884
      %s885 = sphi 0, %s882
      %s886 = sphi 0, %s885
      %s902 = sphi 0, %s886
      %s908 = sphi 0, %s910
      %s911 = sphi 0, %s908
      %s912 = sphi 0, %s911
      %s928 = sphi 0, %s912
    $region4: #{tpu_custom_call.1} parent=1 // loop_header_branch
      %109 = sbr.rel (%p107) target = $region8
    $region5: #{tpu_custom_call.1} parent=1 // loop_body
      %s111 = ssub.s32 %s106, 1
      %s112 = ssub.s32 %s106, 2
      %s113 = sadd.s32 %s106, 1
      %s114 = ssub.s32 %s106, %s113
      %p115 = scmp.eq.s32.totalorder %s114, 0
      %s117 = sadd.s32 %s116, 1
      %s118 = scalar_select %p115, %s116, %s117
      %p121 = pneg %p115
      %p122 = scmp.eq.s32.totalorder %s106, 1
      %p123 = por %p121, %p122
      %p124 = scmp.ne.s32.totalorder %s116, %s119
      %p125 = scmp.eq.s32.totalorder %s106, 0
      %p126 = por %p124, %p125
      %p127 = scmp.ne.s32.totalorder %s116, %s119
      %p128 = scmp.eq.s32.totalorder %s111, 1
      %p129 = por %p127, %p128
      %p130 = scmp.ne.s32.totalorder %s119, %s120
      %p131 = scmp.eq.s32.totalorder %s111, 0
      %p132 = por %p130, %p131
      %p133 = scmp.ne.s32.totalorder %s119, %s120
      %p134 = scmp.eq.s32.totalorder %s112, 1
      %p135 = por %p133, %p134
      %p137 = scmp.ne.s32.totalorder %s120, %s136
      %p138 = scmp.eq.s32.totalorder %s112, 0
      %p139 = por %p137, %p138
      %s141 = sadd.s32 %s140, 1
      %p144 = scmp.eq.s32.totalorder %s106, 1
      %p145 = scmp.ne.s32.totalorder %s140, %s142
      %p146 = scmp.eq.s32.totalorder %s106, 0
      %p147 = por %p145, %p146
      %p148 = scmp.ne.s32.totalorder %s140, %s142
      %p149 = scmp.eq.s32.totalorder %s111, 1
      %p150 = por %p148, %p149
      %p151 = scmp.ne.s32.totalorder %s142, %s143
      %p152 = scmp.eq.s32.totalorder %s111, 0
      %p153 = por %p151, %p152
      %p154 = scmp.ne.s32.totalorder %s142, %s143
      %p155 = scmp.eq.s32.totalorder %s112, 1
      %p156 = por %p154, %p155
      %p158 = scmp.ne.s32.totalorder %s143, %s157
      %p159 = scmp.eq.s32.totalorder %s112, 0
      %p160 = por %p158, %p159
      %s162 = sadd.s32 %s161, 1
      %p165 = scmp.eq.s32.totalorder %s106, 1
      %p166 = scmp.ne.s32.totalorder %s161, %s163
      %p167 = scmp.eq.s32.totalorder %s106, 0
      %p168 = por %p166, %p167
      %p169 = scmp.ne.s32.totalorder %s161, %s163
      %p170 = scmp.eq.s32.totalorder %s111, 1
      %p171 = por %p169, %p170
      %p172 = scmp.ne.s32.totalorder %s163, %s164
      %p173 = scmp.eq.s32.totalorder %s111, 0
      %p174 = por %p172, %p173
      %p175 = scmp.ne.s32.totalorder %s163, %s164
      %p176 = scmp.eq.s32.totalorder %s112, 1
      %p177 = por %p175, %p176
      %p179 = scmp.ne.s32.totalorder %s164, %s178
      %p180 = scmp.eq.s32.totalorder %s112, 0
      %p181 = por %p179, %p180
      %s183 = sadd.s32 %s182, 1
      %p186 = scmp.eq.s32.totalorder %s106, 1
      %p187 = scmp.ne.s32.totalorder %s182, %s184
      %p188 = scmp.eq.s32.totalorder %s106, 0
      %p189 = por %p187, %p188
      %p190 = scmp.ne.s32.totalorder %s182, %s184
      %p191 = scmp.eq.s32.totalorder %s111, 1
      %p192 = por %p190, %p191
      %p193 = scmp.ne.s32.totalorder %s184, %s185
      %p194 = scmp.eq.s32.totalorder %s111, 0
      %p195 = por %p193, %p194
      %p196 = scmp.ne.s32.totalorder %s184, %s185
      %p197 = scmp.eq.s32.totalorder %s112, 1
      %p198 = por %p196, %p197
      %p200 = scmp.ne.s32.totalorder %s185, %s199
      %p201 = scmp.eq.s32.totalorder %s112, 0
      %p202 = por %p200, %p201
      %s204 = sadd.s32 %s203, 1
      %p207 = scmp.eq.s32.totalorder %s106, 1
      %p208 = scmp.ne.s32.totalorder %s203, %s205
      %p209 = scmp.eq.s32.totalorder %s106, 0
      %p210 = por %p208, %p209
      %p211 = scmp.ne.s32.totalorder %s203, %s205
      %p212 = scmp.eq.s32.totalorder %s111, 1
      %p213 = por %p211, %p212
      %p214 = scmp.ne.s32.totalorder %s205, %s206
      %p215 = scmp.eq.s32.totalorder %s111, 0
      %p216 = por %p214, %p215
      %p217 = scmp.ne.s32.totalorder %s205, %s206
      %p218 = scmp.eq.s32.totalorder %s112, 1
      %p219 = por %p217, %p218
      %p221 = scmp.ne.s32.totalorder %s206, %s220
      %p222 = scmp.eq.s32.totalorder %s112, 0
      %p223 = por %p221, %p222
      %s225 = sadd.s32 %s224, 1
      %p228 = scmp.eq.s32.totalorder %s106, 1
      %p229 = scmp.ne.s32.totalorder %s224, %s226
      %p230 = scmp.eq.s32.totalorder %s106, 0
      %p231 = por %p229, %p230
      %p232 = scmp.ne.s32.totalorder %s224, %s226
      %p233 = scmp.eq.s32.totalorder %s111, 1
      %p234 = por %p232, %p233
      %p235 = scmp.ne.s32.totalorder %s226, %s227
      %p236 = scmp.eq.s32.totalorder %s111, 0
      %p237 = por %p235, %p236
      %p238 = scmp.ne.s32.totalorder %s226, %s227
      %p239 = scmp.eq.s32.totalorder %s112, 1
      %p240 = por %p238, %p239
      %p242 = scmp.ne.s32.totalorder %s227, %s241
      %p243 = scmp.eq.s32.totalorder %s112, 0
      %p244 = por %p242, %p243
      %s246 = sadd.s32 %s245, 1
      %p249 = scmp.eq.s32.totalorder %s106, 1
      %p250 = scmp.ne.s32.totalorder %s245, %s247
      %p251 = scmp.eq.s32.totalorder %s106, 0
      %p252 = por %p250, %p251
      %p253 = scmp.ne.s32.totalorder %s245, %s247
      %p254 = scmp.eq.s32.totalorder %s111, 1
      %p255 = por %p253, %p254
      %p256 = scmp.ne.s32.totalorder %s247, %s248
      %p257 = scmp.eq.s32.totalorder %s111, 0
      %p258 = por %p256, %p257
      %p259 = scmp.ne.s32.totalorder %s247, %s248
      %p260 = scmp.eq.s32.totalorder %s112, 1
      %p261 = por %p259, %p260
      %p263 = scmp.ne.s32.totalorder %s248, %s262
      %p264 = scmp.eq.s32.totalorder %s112, 0
      %p265 = por %p263, %p264
      %s267 = sadd.s32 %s266, 1
      %p270 = scmp.eq.s32.totalorder %s106, 1
      %p271 = scmp.ne.s32.totalorder %s266, %s268
      %p272 = scmp.eq.s32.totalorder %s106, 0
      %p273 = por %p271, %p272
      %p274 = scmp.ne.s32.totalorder %s266, %s268
      %p275 = scmp.eq.s32.totalorder %s111, 1
      %p276 = por %p274, %p275
      %p277 = scmp.ne.s32.totalorder %s268, %s269
      %p278 = scmp.eq.s32.totalorder %s111, 0
      %p279 = por %p277, %p278
      %p280 = scmp.ne.s32.totalorder %s268, %s269
      %p281 = scmp.eq.s32.totalorder %s112, 1
      %p282 = por %p280, %p281
      %p284 = scmp.ne.s32.totalorder %s269, %s283
      %p285 = scmp.eq.s32.totalorder %s112, 0
      %p286 = por %p284, %p285
      %s288 = sadd.s32 %s287, 1
      %p291 = scmp.eq.s32.totalorder %s106, 1
      %p292 = scmp.ne.s32.totalorder %s287, %s289
      %p293 = scmp.eq.s32.totalorder %s106, 0
      %p294 = por %p292, %p293
      %p295 = scmp.ne.s32.totalorder %s287, %s289
      %p296 = scmp.eq.s32.totalorder %s111, 1
      %p297 = por %p295, %p296
      %p298 = scmp.ne.s32.totalorder %s289, %s290
      %p299 = scmp.eq.s32.totalorder %s111, 0
      %p300 = por %p298, %p299
      %p301 = scmp.ne.s32.totalorder %s289, %s290
      %p302 = scmp.eq.s32.totalorder %s112, 1
      %p303 = por %p301, %p302
      %p305 = scmp.ne.s32.totalorder %s290, %s304
      %p306 = scmp.eq.s32.totalorder %s112, 0
      %p307 = por %p305, %p306
      %s309 = sadd.s32 %s308, 1
      %p312 = scmp.eq.s32.totalorder %s106, 1
      %p313 = scmp.ne.s32.totalorder %s308, %s310
      %p314 = scmp.eq.s32.totalorder %s106, 0
      %p315 = por %p313, %p314
      %p316 = scmp.ne.s32.totalorder %s308, %s310
      %p317 = scmp.eq.s32.totalorder %s111, 1
      %p318 = por %p316, %p317
      %p319 = scmp.ne.s32.totalorder %s310, %s311
      %p320 = scmp.eq.s32.totalorder %s111, 0
      %p321 = por %p319, %p320
      %p322 = scmp.ne.s32.totalorder %s310, %s311
      %p323 = scmp.eq.s32.totalorder %s112, 1
      %p324 = por %p322, %p323
      %p326 = scmp.ne.s32.totalorder %s311, %s325
      %p327 = scmp.eq.s32.totalorder %s112, 0
      %p328 = por %p326, %p327
      %s330 = sadd.s32 %s329, 1
      %p333 = scmp.eq.s32.totalorder %s106, 1
      %p334 = scmp.ne.s32.totalorder %s329, %s331
      %p335 = scmp.eq.s32.totalorder %s106, 0
      %p336 = por %p334, %p335
      %p337 = scmp.ne.s32.totalorder %s329, %s331
      %p338 = scmp.eq.s32.totalorder %s111, 1
      %p339 = por %p337, %p338
      %p340 = scmp.ne.s32.totalorder %s331, %s332
      %p341 = scmp.eq.s32.totalorder %s111, 0
      %p342 = por %p340, %p341
      %p343 = scmp.ne.s32.totalorder %s331, %s332
      %p344 = scmp.eq.s32.totalorder %s112, 1
      %p345 = por %p343, %p344
      %p347 = scmp.ne.s32.totalorder %s332, %s346
      %p348 = scmp.eq.s32.totalorder %s112, 0
      %p349 = por %p347, %p348
      %s351 = sadd.s32 %s350, 1
      %p354 = scmp.eq.s32.totalorder %s106, 1
      %p355 = scmp.ne.s32.totalorder %s350, %s352
      %p356 = scmp.eq.s32.totalorder %s106, 0
      %p357 = por %p355, %p356
      %p358 = scmp.ne.s32.totalorder %s350, %s352
      %p359 = scmp.eq.s32.totalorder %s111, 1
      %p360 = por %p358, %p359
      %p361 = scmp.ne.s32.totalorder %s352, %s353
      %p362 = scmp.eq.s32.totalorder %s111, 0
      %p363 = por %p361, %p362
      %p364 = scmp.ne.s32.totalorder %s352, %s353
      %p365 = scmp.eq.s32.totalorder %s112, 1
      %p366 = por %p364, %p365
      %p368 = scmp.ne.s32.totalorder %s353, %s367
      %p369 = scmp.eq.s32.totalorder %s112, 0
      %p370 = por %p368, %p369
      %s372 = sadd.s32 %s371, 1
      %p375 = scmp.eq.s32.totalorder %s106, 1
      %p376 = scmp.ne.s32.totalorder %s371, %s373
      %p377 = scmp.eq.s32.totalorder %s106, 0
      %p378 = por %p376, %p377
      %p379 = scmp.ne.s32.totalorder %s371, %s373
      %p380 = scmp.eq.s32.totalorder %s111, 1
      %p381 = por %p379, %p380
      %p382 = scmp.ne.s32.totalorder %s373, %s374
      %p383 = scmp.eq.s32.totalorder %s111, 0
      %p384 = por %p382, %p383
      %p385 = scmp.ne.s32.totalorder %s373, %s374
      %p386 = scmp.eq.s32.totalorder %s112, 1
      %p387 = por %p385, %p386
      %p389 = scmp.ne.s32.totalorder %s374, %s388
      %p390 = scmp.eq.s32.totalorder %s112, 0
      %p391 = por %p389, %p390
      %s393 = sadd.s32 %s392, 1
      %p396 = scmp.eq.s32.totalorder %s106, 1
      %p397 = scmp.ne.s32.totalorder %s392, %s394
      %p398 = scmp.eq.s32.totalorder %s106, 0
      %p399 = por %p397, %p398
      %p400 = scmp.ne.s32.totalorder %s392, %s394
      %p401 = scmp.eq.s32.totalorder %s111, 1
      %p402 = por %p400, %p401
      %p403 = scmp.ne.s32.totalorder %s394, %s395
      %p404 = scmp.eq.s32.totalorder %s111, 0
      %p405 = por %p403, %p404
      %p406 = scmp.ne.s32.totalorder %s394, %s395
      %p407 = scmp.eq.s32.totalorder %s112, 1
      %p408 = por %p406, %p407
      %p410 = scmp.ne.s32.totalorder %s395, %s409
      %p411 = scmp.eq.s32.totalorder %s112, 0
      %p412 = por %p410, %p411
      %s414 = sadd.s32 %s413, 1
      %p417 = scmp.eq.s32.totalorder %s106, 1
      %p418 = scmp.ne.s32.totalorder %s413, %s415
      %p419 = scmp.eq.s32.totalorder %s106, 0
      %p420 = por %p418, %p419
      %p421 = scmp.ne.s32.totalorder %s413, %s415
      %p422 = scmp.eq.s32.totalorder %s111, 1
      %p423 = por %p421, %p422
      %p424 = scmp.ne.s32.totalorder %s415, %s416
      %p425 = scmp.eq.s32.totalorder %s111, 0
      %p426 = por %p424, %p425
      %p427 = scmp.ne.s32.totalorder %s415, %s416
      %p428 = scmp.eq.s32.totalorder %s112, 1
      %p429 = por %p427, %p428
      %p431 = scmp.ne.s32.totalorder %s416, %s430
      %p432 = scmp.eq.s32.totalorder %s112, 0
      %p433 = por %p431, %p432
      %s435 = sadd.s32 %s434, 1
      %p438 = scmp.eq.s32.totalorder %s106, 1
      %p439 = scmp.ne.s32.totalorder %s434, %s436
      %p440 = scmp.eq.s32.totalorder %s106, 0
      %p441 = por %p439, %p440
      %p442 = scmp.ne.s32.totalorder %s434, %s436
      %p443 = scmp.eq.s32.totalorder %s111, 1
      %p444 = por %p442, %p443
      %p445 = scmp.ne.s32.totalorder %s436, %s437
      %p446 = scmp.eq.s32.totalorder %s111, 0
      %p447 = por %p445, %p446
      %p448 = scmp.ne.s32.totalorder %s436, %s437
      %p449 = scmp.eq.s32.totalorder %s112, 1
      %p450 = por %p448, %p449
      %p452 = scmp.ne.s32.totalorder %s437, %s451
      %p453 = scmp.eq.s32.totalorder %s112, 0
      %p454 = por %p452, %p453
      %s456 = sadd.s32 %s455, 1
      %p459 = scmp.eq.s32.totalorder %s106, 1
      %p460 = scmp.ne.s32.totalorder %s455, %s457
      %p461 = scmp.eq.s32.totalorder %s106, 0
      %p462 = por %p460, %p461
      %p463 = scmp.ne.s32.totalorder %s455, %s457
      %p464 = scmp.eq.s32.totalorder %s111, 1
      %p465 = por %p463, %p464
      %p466 = scmp.ne.s32.totalorder %s457, %s458
      %p467 = scmp.eq.s32.totalorder %s111, 0
      %p468 = por %p466, %p467
      %p469 = scmp.ne.s32.totalorder %s457, %s458
      %p470 = scmp.eq.s32.totalorder %s112, 1
      %p471 = por %p469, %p470
      %p473 = scmp.ne.s32.totalorder %s458, %s472
      %p474 = scmp.eq.s32.totalorder %s112, 0
      %p475 = por %p473, %p474
      %s477 = sadd.s32 %s476, 1
      %p480 = scmp.eq.s32.totalorder %s106, 1
      %p481 = scmp.ne.s32.totalorder %s476, %s478
      %p482 = scmp.eq.s32.totalorder %s106, 0
      %p483 = por %p481, %p482
      %p484 = scmp.ne.s32.totalorder %s476, %s478
      %p485 = scmp.eq.s32.totalorder %s111, 1
      %p486 = por %p484, %p485
      %p487 = scmp.ne.s32.totalorder %s478, %s479
      %p488 = scmp.eq.s32.totalorder %s111, 0
      %p489 = por %p487, %p488
      %p490 = scmp.ne.s32.totalorder %s478, %s479
      %p491 = scmp.eq.s32.totalorder %s112, 1
      %p492 = por %p490, %p491
      %p494 = scmp.ne.s32.totalorder %s479, %s493
      %p495 = scmp.eq.s32.totalorder %s112, 0
      %p496 = por %p494, %p495
      %s498 = sadd.s32 %s497, 1
      %p501 = scmp.eq.s32.totalorder %s106, 1
      %p502 = scmp.ne.s32.totalorder %s497, %s499
      %p503 = scmp.eq.s32.totalorder %s106, 0
      %p504 = por %p502, %p503
      %p505 = scmp.ne.s32.totalorder %s497, %s499
      %p506 = scmp.eq.s32.totalorder %s111, 1
      %p507 = por %p505, %p506
      %p508 = scmp.ne.s32.totalorder %s499, %s500
      %p509 = scmp.eq.s32.totalorder %s111, 0
      %p510 = por %p508, %p509
      %p511 = scmp.ne.s32.totalorder %s499, %s500
      %p512 = scmp.eq.s32.totalorder %s112, 1
      %p513 = por %p511, %p512
      %p515 = scmp.ne.s32.totalorder %s500, %s514
      %p516 = scmp.eq.s32.totalorder %s112, 0
      %p517 = por %p515, %p516
      %s519 = sadd.s32 %s518, 1
      %p522 = scmp.eq.s32.totalorder %s106, 1
      %p523 = scmp.ne.s32.totalorder %s518, %s520
      %p524 = scmp.eq.s32.totalorder %s106, 0
      %p525 = por %p523, %p524
      %p526 = scmp.ne.s32.totalorder %s518, %s520
      %p527 = scmp.eq.s32.totalorder %s111, 1
      %p528 = por %p526, %p527
      %p529 = scmp.ne.s32.totalorder %s520, %s521
      %p530 = scmp.eq.s32.totalorder %s111, 0
      %p531 = por %p529, %p530
      %p532 = scmp.ne.s32.totalorder %s520, %s521
      %p533 = scmp.eq.s32.totalorder %s112, 1
      %p534 = por %p532, %p533
      %p536 = scmp.ne.s32.totalorder %s521, %s535
      %p537 = scmp.eq.s32.totalorder %s112, 0
      %p538 = por %p536, %p537
      %s540 = sadd.s32 %s539, 1
      %p543 = scmp.eq.s32.totalorder %s106, 1
      %p544 = scmp.ne.s32.totalorder %s539, %s541
      %p545 = scmp.eq.s32.totalorder %s106, 0
      %p546 = por %p544, %p545
      %p547 = scmp.ne.s32.totalorder %s539, %s541
      %p548 = scmp.eq.s32.totalorder %s111, 1
      %p549 = por %p547, %p548
      %p550 = scmp.ne.s32.totalorder %s541, %s542
      %p551 = scmp.eq.s32.totalorder %s111, 0
      %p552 = por %p550, %p551
      %p553 = scmp.ne.s32.totalorder %s541, %s542
      %p554 = scmp.eq.s32.totalorder %s112, 1
      %p555 = por %p553, %p554
      %p557 = scmp.ne.s32.totalorder %s542, %s556
      %p558 = scmp.eq.s32.totalorder %s112, 0
      %p559 = por %p557, %p558
      %s561 = sadd.s32 %s560, 1
      %p564 = scmp.eq.s32.totalorder %s106, 1
      %p565 = scmp.ne.s32.totalorder %s560, %s562
      %p566 = scmp.eq.s32.totalorder %s106, 0
      %p567 = por %p565, %p566
      %p568 = scmp.ne.s32.totalorder %s560, %s562
      %p569 = scmp.eq.s32.totalorder %s111, 1
      %p570 = por %p568, %p569
      %p571 = scmp.ne.s32.totalorder %s562, %s563
      %p572 = scmp.eq.s32.totalorder %s111, 0
      %p573 = por %p571, %p572
      %p574 = scmp.ne.s32.totalorder %s562, %s563
      %p575 = scmp.eq.s32.totalorder %s112, 1
      %p576 = por %p574, %p575
      %p578 = scmp.ne.s32.totalorder %s563, %s577
      %p579 = scmp.eq.s32.totalorder %s112, 0
      %p580 = por %p578, %p579
      %s582 = sadd.s32 %s581, 1
      %p585 = scmp.eq.s32.totalorder %s106, 1
      %p586 = scmp.ne.s32.totalorder %s581, %s583
      %p587 = scmp.eq.s32.totalorder %s106, 0
      %p588 = por %p586, %p587
      %p589 = scmp.ne.s32.totalorder %s581, %s583
      %p590 = scmp.eq.s32.totalorder %s111, 1
      %p591 = por %p589, %p590
      %p592 = scmp.ne.s32.totalorder %s583, %s584
      %p593 = scmp.eq.s32.totalorder %s111, 0
      %p594 = por %p592, %p593
      %p595 = scmp.ne.s32.totalorder %s583, %s584
      %p596 = scmp.eq.s32.totalorder %s112, 1
      %p597 = por %p595, %p596
      %p599 = scmp.ne.s32.totalorder %s584, %s598
      %p600 = scmp.eq.s32.totalorder %s112, 0
      %p601 = por %p599, %p600
      %s603 = sadd.s32 %s602, 1
      %p606 = scmp.eq.s32.totalorder %s106, 1
      %p607 = scmp.ne.s32.totalorder %s602, %s604
      %p608 = scmp.eq.s32.totalorder %s106, 0
      %p609 = por %p607, %p608
      %p610 = scmp.ne.s32.totalorder %s602, %s604
      %p611 = scmp.eq.s32.totalorder %s111, 1
      %p612 = por %p610, %p611
      %p613 = scmp.ne.s32.totalorder %s604, %s605
      %p614 = scmp.eq.s32.totalorder %s111, 0
      %p615 = por %p613, %p614
      %p616 = scmp.ne.s32.totalorder %s604, %s605
      %p617 = scmp.eq.s32.totalorder %s112, 1
      %p618 = por %p616, %p617
      %p620 = scmp.ne.s32.totalorder %s605, %s619
      %p621 = scmp.eq.s32.totalorder %s112, 0
      %p622 = por %p620, %p621
      %s624 = sadd.s32 %s623, 1
      %p627 = scmp.eq.s32.totalorder %s106, 1
      %p628 = scmp.ne.s32.totalorder %s623, %s625
      %p629 = scmp.eq.s32.totalorder %s106, 0
      %p630 = por %p628, %p629
      %p631 = scmp.ne.s32.totalorder %s623, %s625
      %p632 = scmp.eq.s32.totalorder %s111, 1
      %p633 = por %p631, %p632
      %p634 = scmp.ne.s32.totalorder %s625, %s626
      %p635 = scmp.eq.s32.totalorder %s111, 0
      %p636 = por %p634, %p635
      %p637 = scmp.ne.s32.totalorder %s625, %s626
      %p638 = scmp.eq.s32.totalorder %s112, 1
      %p639 = por %p637, %p638
      %p641 = scmp.ne.s32.totalorder %s626, %s640
      %p642 = scmp.eq.s32.totalorder %s112, 0
      %p643 = por %p641, %p642
      %s645 = sadd.s32 %s644, 1
      %p648 = scmp.eq.s32.totalorder %s106, 1
      %p649 = scmp.ne.s32.totalorder %s644, %s646
      %p650 = scmp.eq.s32.totalorder %s106, 0
      %p651 = por %p649, %p650
      %p652 = scmp.ne.s32.totalorder %s644, %s646
      %p653 = scmp.eq.s32.totalorder %s111, 1
      %p654 = por %p652, %p653
      %p655 = scmp.ne.s32.totalorder %s646, %s647
      %p656 = scmp.eq.s32.totalorder %s111, 0
      %p657 = por %p655, %p656
      %p658 = scmp.ne.s32.totalorder %s646, %s647
      %p659 = scmp.eq.s32.totalorder %s112, 1
      %p660 = por %p658, %p659
      %p662 = scmp.ne.s32.totalorder %s647, %s661
      %p663 = scmp.eq.s32.totalorder %s112, 0
      %p664 = por %p662, %p663
      %s666 = sadd.s32 %s665, 1
      %p669 = scmp.eq.s32.totalorder %s106, 1
      %p670 = scmp.ne.s32.totalorder %s665, %s667
      %p671 = scmp.eq.s32.totalorder %s106, 0
      %p672 = por %p670, %p671
      %p673 = scmp.ne.s32.totalorder %s665, %s667
      %p674 = scmp.eq.s32.totalorder %s111, 1
      %p675 = por %p673, %p674
      %p676 = scmp.ne.s32.totalorder %s667, %s668
      %p677 = scmp.eq.s32.totalorder %s111, 0
      %p678 = por %p676, %p677
      %p679 = scmp.ne.s32.totalorder %s667, %s668
      %p680 = scmp.eq.s32.totalorder %s112, 1
      %p681 = por %p679, %p680
      %p683 = scmp.ne.s32.totalorder %s668, %s682
      %p684 = scmp.eq.s32.totalorder %s112, 0
      %p685 = por %p683, %p684
      %s687 = sadd.s32 %s686, 1
      %p690 = scmp.eq.s32.totalorder %s106, 1
      %p691 = scmp.ne.s32.totalorder %s686, %s688
      %p692 = scmp.eq.s32.totalorder %s106, 0
      %p693 = por %p691, %p692
      %p694 = scmp.ne.s32.totalorder %s686, %s688
      %p695 = scmp.eq.s32.totalorder %s111, 1
      %p696 = por %p694, %p695
      %p697 = scmp.ne.s32.totalorder %s688, %s689
      %p698 = scmp.eq.s32.totalorder %s111, 0
      %p699 = por %p697, %p698
      %p700 = scmp.ne.s32.totalorder %s688, %s689
      %p701 = scmp.eq.s32.totalorder %s112, 1
      %p702 = por %p700, %p701
      %p704 = scmp.ne.s32.totalorder %s689, %s703
      %p705 = scmp.eq.s32.totalorder %s112, 0
      %p706 = por %p704, %p705
      %s708 = sadd.s32 %s707, 1
      %p711 = scmp.eq.s32.totalorder %s106, 1
      %p712 = scmp.ne.s32.totalorder %s707, %s709
      %p713 = scmp.eq.s32.totalorder %s106, 0
      %p714 = por %p712, %p713
      %p715 = scmp.ne.s32.totalorder %s707, %s709
      %p716 = scmp.eq.s32.totalorder %s111, 1
      %p717 = por %p715, %p716
      %p718 = scmp.ne.s32.totalorder %s709, %s710
      %p719 = scmp.eq.s32.totalorder %s111, 0
      %p720 = por %p718, %p719
      %p721 = scmp.ne.s32.totalorder %s709, %s710
      %p722 = scmp.eq.s32.totalorder %s112, 1
      %p723 = por %p721, %p722
      %p725 = scmp.ne.s32.totalorder %s710, %s724
      %p726 = scmp.eq.s32.totalorder %s112, 0
      %p727 = por %p725, %p726
      %s729 = sadd.s32 %s728, 1
      %p732 = scmp.eq.s32.totalorder %s106, 1
      %p733 = scmp.ne.s32.totalorder %s728, %s730
      %p734 = scmp.eq.s32.totalorder %s106, 0
      %p735 = por %p733, %p734
      %p736 = scmp.ne.s32.totalorder %s728, %s730
      %p737 = scmp.eq.s32.totalorder %s111, 1
      %p738 = por %p736, %p737
      %p739 = scmp.ne.s32.totalorder %s730, %s731
      %p740 = scmp.eq.s32.totalorder %s111, 0
      %p741 = por %p739, %p740
      %p742 = scmp.ne.s32.totalorder %s730, %s731
      %p743 = scmp.eq.s32.totalorder %s112, 1
      %p744 = por %p742, %p743
      %p746 = scmp.ne.s32.totalorder %s731, %s745
      %p747 = scmp.eq.s32.totalorder %s112, 0
      %p748 = por %p746, %p747
      %s750 = sadd.s32 %s749, 1
      %p753 = scmp.eq.s32.totalorder %s106, 1
      %p754 = scmp.ne.s32.totalorder %s749, %s751
      %p755 = scmp.eq.s32.totalorder %s106, 0
      %p756 = por %p754, %p755
      %p757 = scmp.ne.s32.totalorder %s749, %s751
      %p758 = scmp.eq.s32.totalorder %s111, 1
      %p759 = por %p757, %p758
      %p760 = scmp.ne.s32.totalorder %s751, %s752
      %p761 = scmp.eq.s32.totalorder %s111, 0
      %p762 = por %p760, %p761
      %p763 = scmp.ne.s32.totalorder %s751, %s752
      %p764 = scmp.eq.s32.totalorder %s112, 1
      %p765 = por %p763, %p764
      %p767 = scmp.ne.s32.totalorder %s752, %s766
      %p768 = scmp.eq.s32.totalorder %s112, 0
      %p769 = por %p767, %p768
      %s771 = sadd.s32 %s770, 1
      %p774 = scmp.eq.s32.totalorder %s106, 1
      %p775 = scmp.ne.s32.totalorder %s770, %s772
      %p776 = scmp.eq.s32.totalorder %s106, 0
      %p777 = por %p775, %p776
      %p778 = scmp.ne.s32.totalorder %s770, %s772
      %p779 = scmp.eq.s32.totalorder %s111, 1
      %p780 = por %p778, %p779
      %p781 = scmp.ne.s32.totalorder %s772, %s773
      %p782 = scmp.eq.s32.totalorder %s111, 0
      %p783 = por %p781, %p782
      %p784 = scmp.ne.s32.totalorder %s772, %s773
      %p785 = scmp.eq.s32.totalorder %s112, 1
      %p786 = por %p784, %p785
      %p788 = scmp.ne.s32.totalorder %s773, %s787
      %p789 = scmp.eq.s32.totalorder %s112, 0
      %p790 = por %p788, %p789
      %s792 = sadd.s32 %s791, 1
      %p795 = scmp.eq.s32.totalorder %s106, 1
      %p796 = scmp.ne.s32.totalorder %s791, %s793
      %p797 = scmp.eq.s32.totalorder %s106, 0
      %p798 = por %p796, %p797
      %p799 = scmp.ne.s32.totalorder %s791, %s793
      %p800 = scmp.eq.s32.totalorder %s111, 1
      %p801 = por %p799, %p800
      %p802 = scmp.ne.s32.totalorder %s793, %s794
      %p803 = scmp.eq.s32.totalorder %s111, 0
      %p804 = por %p802, %p803
      %p805 = scmp.ne.s32.totalorder %s793, %s794
      %p806 = scmp.eq.s32.totalorder %s112, 1
      %p807 = por %p805, %p806
      %p809 = scmp.ne.s32.totalorder %s794, %s808
      %p810 = scmp.eq.s32.totalorder %s112, 0
      %p811 = por %p809, %p810
      %s813 = sadd.s32 %s812, 1
      %p816 = scmp.eq.s32.totalorder %s106, 1
      %p817 = scmp.ne.s32.totalorder %s812, %s814
      %p818 = scmp.eq.s32.totalorder %s106, 0
      %p819 = por %p817, %p818
      %p820 = scmp.ne.s32.totalorder %s812, %s814
      %p821 = scmp.eq.s32.totalorder %s111, 1
      %p822 = por %p820, %p821
      %p823 = scmp.ne.s32.totalorder %s814, %s815
      %p824 = scmp.eq.s32.totalorder %s111, 0
      %p825 = por %p823, %p824
      %p826 = scmp.ne.s32.totalorder %s814, %s815
      %p827 = scmp.eq.s32.totalorder %s112, 1
      %p828 = por %p826, %p827
      %p830 = scmp.ne.s32.totalorder %s815, %s829
      %p831 = scmp.eq.s32.totalorder %s112, 0
      %p832 = por %p830, %p831
      %s834 = sadd.s32 %s833, 1
      %p837 = scmp.eq.s32.totalorder %s106, 1
      %p838 = scmp.ne.s32.totalorder %s833, %s835
      %p839 = scmp.eq.s32.totalorder %s106, 0
      %p840 = por %p838, %p839
      %p841 = scmp.ne.s32.totalorder %s833, %s835
      %p842 = scmp.eq.s32.totalorder %s111, 1
      %p843 = por %p841, %p842
      %p844 = scmp.ne.s32.totalorder %s835, %s836
      %p845 = scmp.eq.s32.totalorder %s111, 0
      %p846 = por %p844, %p845
      %p847 = scmp.ne.s32.totalorder %s835, %s836
      %p848 = scmp.eq.s32.totalorder %s112, 1
      %p849 = por %p847, %p848
      %p851 = scmp.ne.s32.totalorder %s836, %s850
      %p852 = scmp.eq.s32.totalorder %s112, 0
      %p853 = por %p851, %p852
      %s854 = ssub.s32 %s106, %s113
      %p855 = scmp.eq.s32.totalorder %s854, 0
      %s857 = sadd.s32 %s856, 1
      %s858 = scalar_select %p855, %s856, %s857
      %p861 = pneg %p855
      %p862 = scmp.eq.s32.totalorder %s106, 1
      %p863 = por %p861, %p862
      %p864 = scmp.ne.s32.totalorder %s856, %s859
      %p865 = scmp.eq.s32.totalorder %s106, 0
      %p866 = por %p864, %p865
      %p867 = scmp.ne.s32.totalorder %s856, %s859
      %p868 = scmp.eq.s32.totalorder %s111, 1
      %p869 = por %p867, %p868
      %p870 = scmp.ne.s32.totalorder %s859, %s860
      %p871 = scmp.eq.s32.totalorder %s111, 0
      %p872 = por %p870, %p871
      %p873 = scmp.ne.s32.totalorder %s859, %s860
      %p874 = scmp.eq.s32.totalorder %s112, 1
      %p875 = por %p873, %p874
      %p877 = scmp.ne.s32.totalorder %s860, %s876
      %p878 = scmp.eq.s32.totalorder %s112, 0
      %p879 = por %p877, %p878
      %s880 = ssub.s32 %s106, %s113
      %p881 = scmp.eq.s32.totalorder %s880, 0
      %s883 = sadd.s32 %s882, 1
      %s884 = scalar_select %p881, %s882, %s883
      %p887 = pneg %p881
      %p888 = scmp.eq.s32.totalorder %s106, 1
      %p889 = por %p887, %p888
      %p890 = scmp.ne.s32.totalorder %s882, %s885
      %p891 = scmp.eq.s32.totalorder %s106, 0
      %p892 = por %p890, %p891
      %p893 = scmp.ne.s32.totalorder %s882, %s885
      %p894 = scmp.eq.s32.totalorder %s111, 1
      %p895 = por %p893, %p894
      %p896 = scmp.ne.s32.totalorder %s885, %s886
      %p897 = scmp.eq.s32.totalorder %s111, 0
      %p898 = por %p896, %p897
      %p899 = scmp.ne.s32.totalorder %s885, %s886
      %p900 = scmp.eq.s32.totalorder %s112, 1
      %p901 = por %p899, %p900
      %p903 = scmp.ne.s32.totalorder %s886, %s902
      %p904 = scmp.eq.s32.totalorder %s112, 0
      %p905 = por %p903, %p904
      %s906 = ssub.s32 %s106, %s113
      %p907 = scmp.eq.s32.totalorder %s906, 0
      %s909 = sadd.s32 %s908, 1
      %s910 = scalar_select %p907, %s908, %s909
      %p913 = pneg %p907
      %p914 = scmp.eq.s32.totalorder %s106, 1
      %p915 = por %p913, %p914
      %p916 = scmp.ne.s32.totalorder %s908, %s911
      %p917 = scmp.eq.s32.totalorder %s106, 0
      %p918 = por %p916, %p917
      %p919 = scmp.ne.s32.totalorder %s908, %s911
      %p920 = scmp.eq.s32.totalorder %s111, 1
      %p921 = por %p919, %p920
      %p922 = scmp.ne.s32.totalorder %s911, %s912
      %p923 = scmp.eq.s32.totalorder %s111, 0
      %p924 = por %p922, %p923
      %p925 = scmp.ne.s32.totalorder %s911, %s912
      %p926 = scmp.eq.s32.totalorder %s112, 1
      %p927 = por %p925, %p926
      %p929 = scmp.ne.s32.totalorder %s912, %s928
      %p930 = scmp.eq.s32.totalorder %s112, 0
      %p931 = por %p929, %p930
      %p932 = scmp.le.s32.totalorder 1, %s106
      %p933 = scmp.lt.s32.totalorder %s106, 3
      %p934 = pnand %p932, %p933
      %p935 = pneg %p934
      // Predicated region
      $region9: #{tpu_custom_call.1} parent=5 // pred_check
        _
      $region10: #{tpu_custom_call.1} parent=5 // pred_check_branch
        %937 = sbr.rel (%p934) target = $region12
      $region11: #{tpu_custom_call.1} parent=5 // pred_region
        %s938 = ssub.s32 %s106, 1
        // Predicated region
        $region13: #{tpu_custom_call.1} parent=11 // pred_check
          %p939 = pneg %p153
        $region14: #{tpu_custom_call.1} parent=11 // pred_check_branch
          %941 = sbr.rel (%p939) target = $region16
        $region15: #{tpu_custom_call.1} parent=11 // pred_region
          %s943 = ssub.s32 512, 512
          %944 = vsyncadd [#allocation12], %s943
          %s945 = sshll.u32 [#allocation11], 4
          %s946 = int_to_ptr.vmem [resolvable:$true] %s945
          %951 = dma.hbm_to_vmem [thread:$0]  %s3, 512, %s946, [#allocation12], 64, 64, 4
        $region16: #{tpu_custom_call.1} parent=11 // pred_fallthru
          _
        // Predicated region
        $region17: #{tpu_custom_call.1} parent=11 // pred_check
          %p952 = pneg %p174
        $region18: #{tpu_custom_call.1} parent=11 // pred_check_branch
          %954 = sbr.rel (%p952) target = $region20
        $region19: #{tpu_custom_call.1} parent=11 // pred_region
          %s956 = ssub.s32 512, 512
          %957 = vsyncadd [#allocation12], %s956
          %s958 = sshll.u32 [#allocation13], 4
          %s959 = int_to_ptr.vmem [resolvable:$true] %s958
          %964 = dma.hbm_to_vmem [thread:$0]  %s5, 512, %s959, [#allocation12], 64, 64, 4
        $region20: #{tpu_custom_call.1} parent=11 // pred_fallthru
          _
        // Predicated region
        $region21: #{tpu_custom_call.1} parent=11 // pred_check
          %p965 = pneg %p195
        $region22: #{tpu_custom_call.1} parent=11 // pred_check_branch
          %967 = sbr.rel (%p965) target = $region24
        $region23: #{tpu_custom_call.1} parent=11 // pred_region
          %s969 = ssub.s32 512, 512
          %970 = vsyncadd [#allocation15], %s969
          %s971 = sshll.u32 [#allocation14], 4
          %s972 = int_to_ptr.vmem [resolvable:$true] %s971
          %977 = dma.hbm_to_vmem [thread:$0]  %s7, 512, %s972, [#allocation15], 64, 64, 4
        $region24: #{tpu_custom_call.1} parent=11 // pred_fallthru
          _
        // Predicated region
        $region25: #{tpu_custom_call.1} parent=11 // pred_check
          %p978 = pneg %p216
        $region26: #{tpu_custom_call.1} parent=11 // pred_check_branch
          %980 = sbr.rel (%p978) target = $region28
        $region27: #{tpu_custom_call.1} parent=11 // pred_region
          _
        $region28: #{tpu_custom_call.1} parent=11 // pred_fallthru
          _
        // Predicated region
        $region29: #{tpu_custom_call.1} parent=11 // pred_check
          %p981 = pneg %p237
        $region30: #{tpu_custom_call.1} parent=11 // pred_check_branch
          %983 = sbr.rel (%p981) target = $region32
        $region31: #{tpu_custom_call.1} parent=11 // pred_region
          %s985 = ssub.s32 512, 512
          %986 = vsyncadd [#allocation15], %s985
          %s987 = sshll.u32 [#allocation16], 4
          %s988 = int_to_ptr.vmem [resolvable:$true] %s987
          %993 = dma.hbm_to_vmem [thread:$0]  %s11, 512, %s988, [#allocation15], 64, 64, 4
        $region32: #{tpu_custom_call.1} parent=11 // pred_fallthru
          _
        // Predicated region
        $region33: #{tpu_custom_call.1} parent=11 // pred_check
          %p994 = pneg %p258
        $region34: #{tpu_custom_call.1} parent=11 // pred_check_branch
          %996 = sbr.rel (%p994) target = $region36
        $region35: #{tpu_custom_call.1} parent=11 // pred_region
          %s998 = ssub.s32 512, 512
          %999 = vsyncadd [#allocation18], %s998
          %s1000 = sshll.u32 [#allocation17], 4
          %s1001 = int_to_ptr.vmem [resolvable:$true] %s1000
          %1006 = dma.hbm_to_vmem [thread:$0]  %s13, 512, %s1001, [#allocation18], 64, 64, 4
        $region36: #{tpu_custom_call.1} parent=11 // pred_fallthru
          _
        // Predicated region
        $region37: #{tpu_custom_call.1} parent=11 // pred_check
          %p1007 = pneg %p279
        $region38: #{tpu_custom_call.1} parent=11 // pred_check_branch
          %1009 = sbr.rel (%p1007) target = $region40
        $region39: #{tpu_custom_call.1} parent=11 // pred_region
          %s1011 = ssub.s32 512, 512
          %1012 = vsyncadd [#allocation18], %s1011
          %s1013 = sshll.u32 [#allocation19], 4
          %s1014 = int_to_ptr.vmem [resolvable:$true] %s1013
          %1019 = dma.hbm_to_vmem [thread:$0]  %s15, 512, %s1014, [#allocation18], 64, 64, 4
        $region40: #{tpu_custom_call.1} parent=11 // pred_fallthru
          _
        // Predicated region
        $region41: #{tpu_custom_call.1} parent=11 // pred_check
          %p1020 = pneg %p300
        $region42: #{tpu_custom_call.1} parent=11 // pred_check_branch
          %1022 = sbr.rel (%p1020) target = $region44
        $region43: #{tpu_custom_call.1} parent=11 // pred_region
          %s1024 = ssub.s32 16, 16
          %1025 = vsyncadd [#allocation21], %s1024
          %s1027 = sshll.u32 [#allocation20], 4
          %s1028 = int_to_ptr.vmem [resolvable:$true] %s1027
          %1030 = dma.hbm_to_vmem [thread:$0]  %s17, 16, %s1028, [#allocation21]
        $region44: #{tpu_custom_call.1} parent=11 // pred_fallthru
          _
        // Predicated region
        $region45: #{tpu_custom_call.1} parent=11 // pred_check
          %p1031 = pneg %p321
        $region46: #{tpu_custom_call.1} parent=11 // pred_check_branch
          %1033 = sbr.rel (%p1031) target = $region48
        $region47: #{tpu_custom_call.1} parent=11 // pred_region
          %s1035 = ssub.s32 512, 512
          %1036 = vsyncadd [#allocation21], %s1035
          %s1037 = sshll.u32 [#allocation22], 4
          %s1038 = int_to_ptr.vmem [resolvable:$true] %s1037
          %1043 = dma.hbm_to_vmem [thread:$0]  %s19, 512, %s1038, [#allocation21], 64, 64, 4
        $region48: #{tpu_custom_call.1} parent=11 // pred_fallthru
          _
        // Predicated region
        $region49: #{tpu_custom_call.1} parent=11 // pred_check
          %p1044 = pneg %p342
        $region50: #{tpu_custom_call.1} parent=11 // pred_check_branch
          %1046 = sbr.rel (%p1044) target = $region52
        $region51: #{tpu_custom_call.1} parent=11 // pred_region
          %s1048 = ssub.s32 512, 512
          %1049 = vsyncadd [#allocation24], %s1048
          %s1050 = sshll.u32 [#allocation23], 4
          %s1051 = int_to_ptr.vmem [resolvable:$true] %s1050
          %1056 = dma.hbm_to_vmem [thread:$0]  %s21, 512, %s1051, [#allocation24], 64, 64, 4
        $region52: #{tpu_custom_call.1} parent=11 // pred_fallthru
          _
        // Predicated region
        $region53: #{tpu_custom_call.1} parent=11 // pred_check
          %p1057 = pneg %p363
        $region54: #{tpu_custom_call.1} parent=11 // pred_check_branch
          %1059 = sbr.rel (%p1057) target = $region56
        $region55: #{tpu_custom_call.1} parent=11 // pred_region
          %s1061 = ssub.s32 512, 512
          %1062 = vsyncadd [#allocation24], %s1061
          %s1063 = sshll.u32 [#allocation25], 4
          %s1064 = int_to_ptr.vmem [resolvable:$true] %s1063
          %1069 = dma.hbm_to_vmem [thread:$0]  %s23, 512, %s1064, [#allocation24], 64, 64, 4
        $region56: #{tpu_custom_call.1} parent=11 // pred_fallthru
          _
        // Predicated region
        $region57: #{tpu_custom_call.1} parent=11 // pred_check
          %p1070 = pneg %p384
        $region58: #{tpu_custom_call.1} parent=11 // pred_check_branch
          %1072 = sbr.rel (%p1070) target = $region60
        $region59: #{tpu_custom_call.1} parent=11 // pred_region
          %s1074 = ssub.s32 16, 16
          %1075 = vsyncadd [#allocation27], %s1074
          %s1077 = sshll.u32 [#allocation26], 4
          %s1078 = int_to_ptr.vmem [resolvable:$true] %s1077
          %1080 = dma.hbm_to_vmem [thread:$0]  %s25, 16, %s1078, [#allocation27]
        $region60: #{tpu_custom_call.1} parent=11 // pred_fallthru
          _
        // Predicated region
        $region61: #{tpu_custom_call.1} parent=11 // pred_check
          %p1081 = pneg %p405
        $region62: #{tpu_custom_call.1} parent=11 // pred_check_branch
          %1083 = sbr.rel (%p1081) target = $region64
        $region63: #{tpu_custom_call.1} parent=11 // pred_region
          %s1085 = ssub.s32 1024, 1024
          %1086 = vsyncadd [#allocation27], %s1085
          %s1087 = sshll.u32 [#allocation28], 4
          %s1088 = int_to_ptr.vmem [resolvable:$true] %s1087
          %1093 = dma.hbm_to_vmem [thread:$0]  %s27, 1024, %s1088, [#allocation27], 128, 128, 8
        $region64: #{tpu_custom_call.1} parent=11 // pred_fallthru
          _
        // Predicated region
        $region65: #{tpu_custom_call.1} parent=11 // pred_check
          %p1094 = pneg %p426
        $region66: #{tpu_custom_call.1} parent=11 // pred_check_branch
          %1096 = sbr.rel (%p1094) target = $region68
        $region67: #{tpu_custom_call.1} parent=11 // pred_region
          %s1098 = ssub.s32 32, 32
          %1099 = vsyncadd [#allocation30], %s1098
          %s1101 = sshll.u32 [#allocation29], 4
          %s1102 = int_to_ptr.vmem [resolvable:$true] %s1101
          %1104 = dma.hbm_to_vmem [thread:$0]  %s29, 32, %s1102, [#allocation30]
        $region68: #{tpu_custom_call.1} parent=11 // pred_fallthru
          _
        // Predicated region
        $region69: #{tpu_custom_call.1} parent=11 // pred_check
          %p1105 = pneg %p447
        $region70: #{tpu_custom_call.1} parent=11 // pred_check_branch
          %1107 = sbr.rel (%p1105) target = $region72
        $region71: #{tpu_custom_call.1} parent=11 // pred_region
          _
        $region72: #{tpu_custom_call.1} parent=11 // pred_fallthru
          _
        // Predicated region
        $region73: #{tpu_custom_call.1} parent=11 // pred_check
          %p1108 = pneg %p468
        $region74: #{tpu_custom_call.1} parent=11 // pred_check_branch
          %1110 = sbr.rel (%p1108) target = $region76
        $region75: #{tpu_custom_call.1} parent=11 // pred_region
          %s1112 = ssub.s32 16, 16
          %1113 = vsyncadd [#allocation30], %s1112
          %s1115 = sshll.u32 [#allocation31], 4
          %s1116 = int_to_ptr.vmem [resolvable:$true] %s1115
          %1118 = dma.hbm_to_vmem [thread:$0]  %s33, 16, %s1116, [#allocation30]
        $region76: #{tpu_custom_call.1} parent=11 // pred_fallthru
          _
        // Predicated region
        $region77: #{tpu_custom_call.1} parent=11 // pred_check
          %p1119 = pneg %p489
        $region78: #{tpu_custom_call.1} parent=11 // pred_check_branch
          %1121 = sbr.rel (%p1119) target = $region80
        $region79: #{tpu_custom_call.1} parent=11 // pred_region
          %s1123 = ssub.s32 512, 512
          %1124 = vsyncadd [#allocation33], %s1123
          %s1125 = sshll.u32 [#allocation32], 4
          %s1126 = int_to_ptr.vmem [resolvable:$true] %s1125
          %1131 = dma.hbm_to_vmem [thread:$0]  %s35, 512, %s1126, [#allocation33], 64, 64, 4
        $region80: #{tpu_custom_call.1} parent=11 // pred_fallthru
          _
        // Predicated region
        $region81: #{tpu_custom_call.1} parent=11 // pred_check
          %p1132 = pneg %p510
        $region82: #{tpu_custom_call.1} parent=11 // pred_check_branch
          %1134 = sbr.rel (%p1132) target = $region84
        $region83: #{tpu_custom_call.1} parent=11 // pred_region
          %s1136 = ssub.s32 16, 16
          %1137 = vsyncadd [#allocation33], %s1136
          %s1139 = sshll.u32 [#allocation34], 4
          %s1140 = int_to_ptr.vmem [resolvable:$true] %s1139
          %1142 = dma.hbm_to_vmem [thread:$0]  %s37, 16, %s1140, [#allocation33]
        $region84: #{tpu_custom_call.1} parent=11 // pred_fallthru
          _
        // Predicated region
        $region85: #{tpu_custom_call.1} parent=11 // pred_check
          %p1143 = pneg %p531
        $region86: #{tpu_custom_call.1} parent=11 // pred_check_branch
          %1145 = sbr.rel (%p1143) target = $region88
        $region87: #{tpu_custom_call.1} parent=11 // pred_region
          %s1147 = ssub.s32 4096, 4096
          %1148 = vsyncadd [#allocation36], %s1147
          %s1149 = sshll.u32 [#allocation35], 4
          %s1150 = int_to_ptr.vmem [resolvable:$true] %s1149
          %1155 = dma.hbm_to_vmem [thread:$0]  %s39, 4096, %s1150, [#allocation36], 128, 128, 8
        $region88: #{tpu_custom_call.1} parent=11 // pred_fallthru
          _
        // Predicated region
        $region89: #{tpu_custom_call.1} parent=11 // pred_check
          %p1156 = pneg %p552
        $region90: #{tpu_custom_call.1} parent=11 // pred_check_branch
          %1158 = sbr.rel (%p1156) target = $region92
        $region91: #{tpu_custom_call.1} parent=11 // pred_region
          %s1160 = ssub.s32 4096, 4096
          %1161 = vsyncadd [#allocation36], %s1160
          %s1162 = sshll.u32 [#allocation37], 4
          %s1163 = int_to_ptr.vmem [resolvable:$true] %s1162
          %1168 = dma.hbm_to_vmem [thread:$0]  %s41, 4096, %s1163, [#allocation36], 128, 128, 8
        $region92: #{tpu_custom_call.1} parent=11 // pred_fallthru
          _
        // Predicated region
        $region93: #{tpu_custom_call.1} parent=11 // pred_check
          %p1169 = pneg %p573
        $region94: #{tpu_custom_call.1} parent=11 // pred_check_branch
          %1171 = sbr.rel (%p1169) target = $region96
        $region95: #{tpu_custom_call.1} parent=11 // pred_region
          %s1173 = ssub.s32 4096, 4096
          %1174 = vsyncadd [#allocation39], %s1173
          %s1175 = sshll.u32 [#allocation38], 4
          %s1176 = int_to_ptr.vmem [resolvable:$true] %s1175
          %1181 = dma.hbm_to_vmem [thread:$0]  %s43, 4096, %s1176, [#allocation39], 128, 128, 8
        $region96: #{tpu_custom_call.1} parent=11 // pred_fallthru
          _
        // Predicated region
        $region97: #{tpu_custom_call.1} parent=11 // pred_check
          %p1182 = pneg %p594
        $region98: #{tpu_custom_call.1} parent=11 // pred_check_branch
          %1184 = sbr.rel (%p1182) target = $region100
        $region99: #{tpu_custom_call.1} parent=11 // pred_region
          %s1186 = ssub.s32 32, 32
          %1187 = vsyncadd [#allocation39], %s1186
          %s1189 = sshll.u32 [#allocation40], 4
          %s1190 = int_to_ptr.vmem [resolvable:$true] %s1189
          %1192 = dma.hbm_to_vmem [thread:$0]  %s45, 32, %s1190, [#allocation39]
        $region100: #{tpu_custom_call.1} parent=11 // pred_fallthru
          _
        // Predicated region
        $region101: #{tpu_custom_call.1} parent=11 // pred_check
          %p1193 = pneg %p615
        $region102: #{tpu_custom_call.1} parent=11 // pred_check_branch
          %1195 = sbr.rel (%p1193) target = $region104
        $region103: #{tpu_custom_call.1} parent=11 // pred_region
          %s1197 = ssub.s32 1024, 1024
          %1198 = vsyncadd [#allocation42], %s1197
          %s1199 = sshll.u32 [#allocation41], 4
          %s1200 = int_to_ptr.vmem [resolvable:$true] %s1199
          %1205 = dma.hbm_to_vmem [thread:$0]  %s47, 1024, %s1200, [#allocation42], 64, 64, 4
        $region104: #{tpu_custom_call.1} parent=11 // pred_fallthru
          _
        // Predicated region
        $region105: #{tpu_custom_call.1} parent=11 // pred_check
          %p1206 = pneg %p636
        $region106: #{tpu_custom_call.1} parent=11 // pred_check_branch
          %1208 = sbr.rel (%p1206) target = $region108
        $region107: #{tpu_custom_call.1} parent=11 // pred_region
          %s1210 = ssub.s32 1024, 1024
          %1211 = vsyncadd [#allocation42], %s1210
          %s1212 = sshll.u32 [#allocation43], 4
          %s1213 = int_to_ptr.vmem [resolvable:$true] %s1212
          %1218 = dma.hbm_to_vmem [thread:$0]  %s49, 1024, %s1213, [#allocation42], 64, 64, 4
        $region108: #{tpu_custom_call.1} parent=11 // pred_fallthru
          _
        // Predicated region
        $region109: #{tpu_custom_call.1} parent=11 // pred_check
          %p1219 = pneg %p657
        $region110: #{tpu_custom_call.1} parent=11 // pred_check_branch
          %1221 = sbr.rel (%p1219) target = $region112
        $region111: #{tpu_custom_call.1} parent=11 // pred_region
          %s1223 = ssub.s32 1024, 1024
          %1224 = vsyncadd [#allocation45], %s1223
          %s1225 = sshll.u32 [#allocation44], 4
          %s1226 = int_to_ptr.vmem [resolvable:$true] %s1225
          %1231 = dma.hbm_to_vmem [thread:$0]  %s51, 1024, %s1226, [#allocation45], 64, 64, 4
        $region112: #{tpu_custom_call.1} parent=11 // pred_fallthru
          _
        // Predicated region
        $region113: #{tpu_custom_call.1} parent=11 // pred_check
          %p1232 = pneg %p678
        $region114: #{tpu_custom_call.1} parent=11 // pred_check_branch
          %1234 = sbr.rel (%p1232) target = $region116
        $region115: #{tpu_custom_call.1} parent=11 // pred_region
          %s1236 = ssub.s32 16, 16
          %1237 = vsyncadd [#allocation45], %s1236
          %s1239 = sshll.u32 [#allocation46], 4
          %s1240 = int_to_ptr.vmem [resolvable:$true] %s1239
          %1242 = dma.hbm_to_vmem [thread:$0]  %s53, 16, %s1240, [#allocation45]
        $region116: #{tpu_custom_call.1} parent=11 // pred_fallthru
          _
        // Predicated region
        $region117: #{tpu_custom_call.1} parent=11 // pred_check
          %p1243 = pneg %p699
        $region118: #{tpu_custom_call.1} parent=11 // pred_check_branch
          %1245 = sbr.rel (%p1243) target = $region120
        $region119: #{tpu_custom_call.1} parent=11 // pred_region
          %s1247 = ssub.s32 512, 512
          %1248 = vsyncadd [#allocation48], %s1247
          %s1249 = sshll.u32 [#allocation47], 4
          %s1250 = int_to_ptr.vmem [resolvable:$true] %s1249
          %1255 = dma.hbm_to_vmem [thread:$0]  %s55, 512, %s1250, [#allocation48], 64, 64, 4
        $region120: #{tpu_custom_call.1} parent=11 // pred_fallthru
          _
        // Predicated region
        $region121: #{tpu_custom_call.1} parent=11 // pred_check
          %p1256 = pneg %p720
        $region122: #{tpu_custom_call.1} parent=11 // pred_check_branch
          %1258 = sbr.rel (%p1256) target = $region124
        $region123: #{tpu_custom_call.1} parent=11 // pred_region
          %s1260 = ssub.s32 512, 512
          %1261 = vsyncadd [#allocation48], %s1260
          %s1262 = sshll.u32 [#allocation49], 4
          %s1263 = int_to_ptr.vmem [resolvable:$true] %s1262
          %1268 = dma.hbm_to_vmem [thread:$0]  %s57, 512, %s1263, [#allocation48], 64, 64, 4
        $region124: #{tpu_custom_call.1} parent=11 // pred_fallthru
          _
        // Predicated region
        $region125: #{tpu_custom_call.1} parent=11 // pred_check
          %p1269 = pneg %p741
        $region126: #{tpu_custom_call.1} parent=11 // pred_check_branch
          %1271 = sbr.rel (%p1269) target = $region128
        $region127: #{tpu_custom_call.1} parent=11 // pred_region
          %s1273 = ssub.s32 512, 512
          %1274 = vsyncadd [#allocation51], %s1273
          %s1275 = sshll.u32 [#allocation50], 4
          %s1276 = int_to_ptr.vmem [resolvable:$true] %s1275
          %1281 = dma.hbm_to_vmem [thread:$0]  %s59, 512, %s1276, [#allocation51], 64, 64, 4
        $region128: #{tpu_custom_call.1} parent=11 // pred_fallthru
          _
        // Predicated region
        $region129: #{tpu_custom_call.1} parent=11 // pred_check
          %p1282 = pneg %p762
        $region130: #{tpu_custom_call.1} parent=11 // pred_check_branch
          %1284 = sbr.rel (%p1282) target = $region132
        $region131: #{tpu_custom_call.1} parent=11 // pred_region
          %s1286 = ssub.s32 16, 16
          %1287 = vsyncadd [#allocation51], %s1286
          %s1289 = sshll.u32 [#allocation52], 4
          %s1290 = int_to_ptr.vmem [resolvable:$true] %s1289
          %1292 = dma.hbm_to_vmem [thread:$0]  %s61, 16, %s1290, [#allocation51]
        $region132: #{tpu_custom_call.1} parent=11 // pred_fallthru
          _
        // Predicated region
        $region133: #{tpu_custom_call.1} parent=11 // pred_check
          %p1293 = pneg %p783
        $region134: #{tpu_custom_call.1} parent=11 // pred_check_branch
          %1295 = sbr.rel (%p1293) target = $region136
        $region135: #{tpu_custom_call.1} parent=11 // pred_region
          _
        $region136: #{tpu_custom_call.1} parent=11 // pred_fallthru
          _
        // Predicated region
        $region137: #{tpu_custom_call.1} parent=11 // pred_check
          %p1296 = pneg %p804
        $region138: #{tpu_custom_call.1} parent=11 // pred_check_branch
          %1298 = sbr.rel (%p1296) target = $region140
        $region139: #{tpu_custom_call.1} parent=11 // pred_region
          %s1300 = ssub.s32 2048, 2048
          %1301 = vsyncadd [#allocation54], %s1300
          %s1302 = sshll.u32 [#allocation53], 4
          %s1303 = int_to_ptr.vmem [resolvable:$true] %s1302
          %1308 = dma.hbm_to_vmem [thread:$0]  %s65, 2048, %s1303, [#allocation54], 128, 128, 8
        $region140: #{tpu_custom_call.1} parent=11 // pred_fallthru
          _
        // Predicated region
        $region141: #{tpu_custom_call.1} parent=11 // pred_check
          %p1309 = pneg %p825
        $region142: #{tpu_custom_call.1} parent=11 // pred_check_branch
          %1311 = sbr.rel (%p1309) target = $region144
        $region143: #{tpu_custom_call.1} parent=11 // pred_region
          _
        $region144: #{tpu_custom_call.1} parent=11 // pred_fallthru
          _
        // Predicated region
        $region145: #{tpu_custom_call.1} parent=11 // pred_check
          %p1312 = pneg %p846
        $region146: #{tpu_custom_call.1} parent=11 // pred_check_branch
          %1314 = sbr.rel (%p1312) target = $region148
        $region147: #{tpu_custom_call.1} parent=11 // pred_region
          _
        $region148: #{tpu_custom_call.1} parent=11 // pred_fallthru
          _
      $region12: #{tpu_custom_call.1} parent=5 // pred_fallthru
        _
      %p1315 = scmp.lt.s32.totalorder %s106, 2
      // Predicated region
      $region149: #{tpu_custom_call.1} parent=5 // pred_check
        %p1316 = pneg %p1315
      $region150: #{tpu_custom_call.1} parent=5 // pred_check_branch
        %1318 = sbr.rel (%p1316) target = $region152
      $region151: #{tpu_custom_call.1} parent=5 // pred_region
        // Predicated region
        $region153: #{tpu_custom_call.1} parent=151 // pred_check
          %p1319 = pneg %p126
        $region154: #{tpu_custom_call.1} parent=151 // pred_check_branch
          %1321 = sbr.rel (%p1319) target = $region156
        $region155: #{tpu_custom_call.1} parent=151 // pred_region
          %s1322 = sand.u32 %s116, 1
          %s1323 = scalar_lea.sflag [#allocation9], %s1322
          %s1324 = sand.u32 %s116, 1
          %s1325 = smul.addr %s1324, 16
          %s1326 = scalar_lea.vmem [#allocation8], %s1325
          %s1328 = ssub.s32 256, 256
          %1329 = vsyncadd %s1323, %s1328
          %s1330 = smul.addr %s106, 2
          %s1331 = smul.addr %s1330, 128
          %s1332 = scalar_lea.hbm %s1, %s1331
          %s1333 = sshll.u32 %s1326, 4
          %s1334 = int_to_ptr.vmem [resolvable:$true] %s1333
          %1339 = dma.hbm_to_vmem [thread:$0]  %s1332, 256, %s1334, %s1323, 128, 128, 8
        $region156: #{tpu_custom_call.1} parent=151 // pred_fallthru
          _
      $region152: #{tpu_custom_call.1} parent=5 // pred_fallthru
        _
      %p1340 = scmp.le.s32.totalorder 1, %s106
      %p1341 = scmp.lt.s32.totalorder %s106, 3
      %p1342 = pnand %p1340, %p1341
      %p1343 = pneg %p1342
      // Predicated region
      $region157: #{tpu_custom_call.1} parent=5 // pred_check
        _
      $region158: #{tpu_custom_call.1} parent=5 // pred_check_branch
        %1345 = sbr.rel (%p1342) target = $region160
      $region159: #{tpu_custom_call.1} parent=5 // pred_region
        %s1346 = ssub.s32 %s106, 1
        %s1347 = sand.u32 %s119, 1
        %s1348 = scalar_lea.sflag [#allocation9], %s1347
        %s1349 = sand.u32 %s119, 1
        %s1350 = smul.addr %s1349, 16
        %s1351 = scalar_lea.vmem [#allocation8], %s1350
        // Predicated region
        $region161: #{tpu_custom_call.1} parent=159 // pred_check
          %p1352 = pneg %p132
        $region162: #{tpu_custom_call.1} parent=159 // pred_check_branch
          %1354 = sbr.rel (%p1352) target = $region164
        $region163: #{tpu_custom_call.1} parent=159 // pred_region
          %1355 = dma.done %s1348, 256
        $region164: #{tpu_custom_call.1} parent=159 // pred_fallthru
          _
        // Predicated region
        $region165: #{tpu_custom_call.1} parent=159 // pred_check
          %p1356 = pneg %p153
        $region166: #{tpu_custom_call.1} parent=159 // pred_check_branch
          %1358 = sbr.rel (%p1356) target = $region168
        $region167: #{tpu_custom_call.1} parent=159 // pred_region
          %1359 = dma.done [#allocation12], 512
        $region168: #{tpu_custom_call.1} parent=159 // pred_fallthru
          _
        // Predicated region
        $region169: #{tpu_custom_call.1} parent=159 // pred_check
          %p1360 = pneg %p174
        $region170: #{tpu_custom_call.1} parent=159 // pred_check_branch
          %1362 = sbr.rel (%p1360) target = $region172
        $region171: #{tpu_custom_call.1} parent=159 // pred_region
          %1363 = dma.done [#allocation12], 512
        $region172: #{tpu_custom_call.1} parent=159 // pred_fallthru
          _
        // Predicated region
        $region173: #{tpu_custom_call.1} parent=159 // pred_check
          %p1364 = pneg %p195
        $region174: #{tpu_custom_call.1} parent=159 // pred_check_branch
          %1366 = sbr.rel (%p1364) target = $region176
        $region175: #{tpu_custom_call.1} parent=159 // pred_region
          %1367 = dma.done [#allocation15], 512
        $region176: #{tpu_custom_call.1} parent=159 // pred_fallthru
          _
        // Predicated region
        $region177: #{tpu_custom_call.1} parent=159 // pred_check
          %p1368 = pneg %p237
        $region178: #{tpu_custom_call.1} parent=159 // pred_check_branch
          %1370 = sbr.rel (%p1368) target = $region180
        $region179: #{tpu_custom_call.1} parent=159 // pred_region
          %1371 = dma.done [#allocation15], 512
        $region180: #{tpu_custom_call.1} parent=159 // pred_fallthru
          _
        // Predicated region
        $region181: #{tpu_custom_call.1} parent=159 // pred_check
          %p1372 = pneg %p258
        $region182: #{tpu_custom_call.1} parent=159 // pred_check_branch
          %1374 = sbr.rel (%p1372) target = $region184
        $region183: #{tpu_custom_call.1} parent=159 // pred_region
          %1375 = dma.done [#allocation18], 512
        $region184: #{tpu_custom_call.1} parent=159 // pred_fallthru
          _
        // Predicated region
        $region185: #{tpu_custom_call.1} parent=159 // pred_check
          %p1376 = pneg %p279
        $region186: #{tpu_custom_call.1} parent=159 // pred_check_branch
          %1378 = sbr.rel (%p1376) target = $region188
        $region187: #{tpu_custom_call.1} parent=159 // pred_region
          %1379 = dma.done [#allocation18], 512
        $region188: #{tpu_custom_call.1} parent=159 // pred_fallthru
          _
        // Predicated region
        $region189: #{tpu_custom_call.1} parent=159 // pred_check
          %p1380 = pneg %p300
        $region190: #{tpu_custom_call.1} parent=159 // pred_check_branch
          %1382 = sbr.rel (%p1380) target = $region192
        $region191: #{tpu_custom_call.1} parent=159 // pred_region
          %1383 = dma.done [#allocation21], 16
        $region192: #{tpu_custom_call.1} parent=159 // pred_fallthru
          _
        // Predicated region
        $region193: #{tpu_custom_call.1} parent=159 // pred_check
          %p1384 = pneg %p321
        $region194: #{tpu_custom_call.1} parent=159 // pred_check_branch
          %1386 = sbr.rel (%p1384) target = $region196
        $region195: #{tpu_custom_call.1} parent=159 // pred_region
          %1387 = dma.done [#allocation21], 512
        $region196: #{tpu_custom_call.1} parent=159 // pred_fallthru
          _
        // Predicated region
        $region197: #{tpu_custom_call.1} parent=159 // pred_check
          %p1388 = pneg %p342
        $region198: #{tpu_custom_call.1} parent=159 // pred_check_branch
          %1390 = sbr.rel (%p1388) target = $region200
        $region199: #{tpu_custom_call.1} parent=159 // pred_region
          %1391 = dma.done [#allocation24], 512
        $region200: #{tpu_custom_call.1} parent=159 // pred_fallthru
          _
        // Predicated region
        $region201: #{tpu_custom_call.1} parent=159 // pred_check
          %p1392 = pneg %p363
        $region202: #{tpu_custom_call.1} parent=159 // pred_check_branch
          %1394 = sbr.rel (%p1392) target = $region204
        $region203: #{tpu_custom_call.1} parent=159 // pred_region
          %1395 = dma.done [#allocation24], 512
        $region204: #{tpu_custom_call.1} parent=159 // pred_fallthru
          _
        // Predicated region
        $region205: #{tpu_custom_call.1} parent=159 // pred_check
          %p1396 = pneg %p384
        $region206: #{tpu_custom_call.1} parent=159 // pred_check_branch
          %1398 = sbr.rel (%p1396) target = $region208
        $region207: #{tpu_custom_call.1} parent=159 // pred_region
          %1399 = dma.done [#allocation27], 16
        $region208: #{tpu_custom_call.1} parent=159 // pred_fallthru
          _
        // Predicated region
        $region209: #{tpu_custom_call.1} parent=159 // pred_check
          %p1400 = pneg %p405
        $region210: #{tpu_custom_call.1} parent=159 // pred_check_branch
          %1402 = sbr.rel (%p1400) target = $region212
        $region211: #{tpu_custom_call.1} parent=159 // pred_region
          %1403 = dma.done [#allocation27], 1024
        $region212: #{tpu_custom_call.1} parent=159 // pred_fallthru
          _
        // Predicated region
        $region213: #{tpu_custom_call.1} parent=159 // pred_check
          %p1404 = pneg %p426
        $region214: #{tpu_custom_call.1} parent=159 // pred_check_branch
          %1406 = sbr.rel (%p1404) target = $region216
        $region215: #{tpu_custom_call.1} parent=159 // pred_region
          %1407 = dma.done [#allocation30], 32
        $region216: #{tpu_custom_call.1} parent=159 // pred_fallthru
          _
        // Predicated region
        $region217: #{tpu_custom_call.1} parent=159 // pred_check
          %p1408 = pneg %p468
        $region218: #{tpu_custom_call.1} parent=159 // pred_check_branch
          %1410 = sbr.rel (%p1408) target = $region220
        $region219: #{tpu_custom_call.1} parent=159 // pred_region
          %1411 = dma.done [#allocation30], 16
        $region220: #{tpu_custom_call.1} parent=159 // pred_fallthru
          _
        // Predicated region
        $region221: #{tpu_custom_call.1} parent=159 // pred_check
          %p1412 = pneg %p489
        $region222: #{tpu_custom_call.1} parent=159 // pred_check_branch
          %1414 = sbr.rel (%p1412) target = $region224
        $region223: #{tpu_custom_call.1} parent=159 // pred_region
          %1415 = dma.done [#allocation33], 512
        $region224: #{tpu_custom_call.1} parent=159 // pred_fallthru
          _
        // Predicated region
        $region225: #{tpu_custom_call.1} parent=159 // pred_check
          %p1416 = pneg %p510
        $region226: #{tpu_custom_call.1} parent=159 // pred_check_branch
          %1418 = sbr.rel (%p1416) target = $region228
        $region227: #{tpu_custom_call.1} parent=159 // pred_region
          %1419 = dma.done [#allocation33], 16
        $region228: #{tpu_custom_call.1} parent=159 // pred_fallthru
          _
        // Predicated region
        $region229: #{tpu_custom_call.1} parent=159 // pred_check
          %p1420 = pneg %p531
        $region230: #{tpu_custom_call.1} parent=159 // pred_check_branch
          %1422 = sbr.rel (%p1420) target = $region232
        $region231: #{tpu_custom_call.1} parent=159 // pred_region
          %1423 = dma.done [#allocation36], 4096
        $region232: #{tpu_custom_call.1} parent=159 // pred_fallthru
          _
        // Predicated region
        $region233: #{tpu_custom_call.1} parent=159 // pred_check
          %p1424 = pneg %p552
        $region234: #{tpu_custom_call.1} parent=159 // pred_check_branch
          %1426 = sbr.rel (%p1424) target = $region236
        $region235: #{tpu_custom_call.1} parent=159 // pred_region
          %1427 = dma.done [#allocation36], 4096
        $region236: #{tpu_custom_call.1} parent=159 // pred_fallthru
          _
        // Predicated region
        $region237: #{tpu_custom_call.1} parent=159 // pred_check
          %p1428 = pneg %p573
        $region238: #{tpu_custom_call.1} parent=159 // pred_check_branch
          %1430 = sbr.rel (%p1428) target = $region240
        $region239: #{tpu_custom_call.1} parent=159 // pred_region
          %1431 = dma.done [#allocation39], 4096
        $region240: #{tpu_custom_call.1} parent=159 // pred_fallthru
          _
        // Predicated region
        $region241: #{tpu_custom_call.1} parent=159 // pred_check
          %p1432 = pneg %p594
        $region242: #{tpu_custom_call.1} parent=159 // pred_check_branch
          %1434 = sbr.rel (%p1432) target = $region244
        $region243: #{tpu_custom_call.1} parent=159 // pred_region
          %1435 = dma.done [#allocation39], 32
        $region244: #{tpu_custom_call.1} parent=159 // pred_fallthru
          _
        // Predicated region
        $region245: #{tpu_custom_call.1} parent=159 // pred_check
          %p1436 = pneg %p615
        $region246: #{tpu_custom_call.1} parent=159 // pred_check_branch
          %1438 = sbr.rel (%p1436) target = $region248
        $region247: #{tpu_custom_call.1} parent=159 // pred_region
          %1439 = dma.done [#allocation42], 1024
        $region248: #{tpu_custom_call.1} parent=159 // pred_fallthru
          _
        // Predicated region
        $region249: #{tpu_custom_call.1} parent=159 // pred_check
          %p1440 = pneg %p636
        $region250: #{tpu_custom_call.1} parent=159 // pred_check_branch
          %1442 = sbr.rel (%p1440) target = $region252
        $region251: #{tpu_custom_call.1} parent=159 // pred_region
          %1443 = dma.done [#allocation42], 1024
        $region252: #{tpu_custom_call.1} parent=159 // pred_fallthru
          _
        // Predicated region
        $region253: #{tpu_custom_call.1} parent=159 // pred_check
          %p1444 = pneg %p657
        $region254: #{tpu_custom_call.1} parent=159 // pred_check_branch
          %1446 = sbr.rel (%p1444) target = $region256
        $region255: #{tpu_custom_call.1} parent=159 // pred_region
          %1447 = dma.done [#allocation45], 1024
        $region256: #{tpu_custom_call.1} parent=159 // pred_fallthru
          _
        // Predicated region
        $region257: #{tpu_custom_call.1} parent=159 // pred_check
          %p1448 = pneg %p678
        $region258: #{tpu_custom_call.1} parent=159 // pred_check_branch
          %1450 = sbr.rel (%p1448) target = $region260
        $region259: #{tpu_custom_call.1} parent=159 // pred_region
          %1451 = dma.done [#allocation45], 16
        $region260: #{tpu_custom_call.1} parent=159 // pred_fallthru
          _
        // Predicated region
        $region261: #{tpu_custom_call.1} parent=159 // pred_check
          %p1452 = pneg %p699
        $region262: #{tpu_custom_call.1} parent=159 // pred_check_branch
          %1454 = sbr.rel (%p1452) target = $region264
        $region263: #{tpu_custom_call.1} parent=159 // pred_region
          %1455 = dma.done [#allocation48], 512
        $region264: #{tpu_custom_call.1} parent=159 // pred_fallthru
          _
        // Predicated region
        $region265: #{tpu_custom_call.1} parent=159 // pred_check
          %p1456 = pneg %p720
        $region266: #{tpu_custom_call.1} parent=159 // pred_check_branch
          %1458 = sbr.rel (%p1456) target = $region268
        $region267: #{tpu_custom_call.1} parent=159 // pred_region
          %1459 = dma.done [#allocation48], 512
        $region268: #{tpu_custom_call.1} parent=159 // pred_fallthru
          _
        // Predicated region
        $region269: #{tpu_custom_call.1} parent=159 // pred_check
          %p1460 = pneg %p741
        $region270: #{tpu_custom_call.1} parent=159 // pred_check_branch
          %1462 = sbr.rel (%p1460) target = $region272
        $region271: #{tpu_custom_call.1} parent=159 // pred_region
          %1463 = dma.done [#allocation51], 512
        $region272: #{tpu_custom_call.1} parent=159 // pred_fallthru
          _
        // Predicated region
        $region273: #{tpu_custom_call.1} parent=159 // pred_check
          %p1464 = pneg %p762
        $region274: #{tpu_custom_call.1} parent=159 // pred_check_branch
          %1466 = sbr.rel (%p1464) target = $region276
        $region275: #{tpu_custom_call.1} parent=159 // pred_region
          %1467 = dma.done [#allocation51], 16
        $region276: #{tpu_custom_call.1} parent=159 // pred_fallthru
          _
        // Predicated region
        $region277: #{tpu_custom_call.1} parent=159 // pred_check
          %p1468 = pneg %p804
        $region278: #{tpu_custom_call.1} parent=159 // pred_check_branch
          %1470 = sbr.rel (%p1468) target = $region280
        $region279: #{tpu_custom_call.1} parent=159 // pred_region
          %1471 = dma.done [#allocation54], 2048
        $region280: #{tpu_custom_call.1} parent=159 // pred_fallthru
          _
        %s1472 = sand.u32 %s119, 1
        %s1473 = scalar_lea.sflag [#allocation9], %s1472
        %s1474 = sand.u32 %s119, 1
        %s1475 = smul.addr %s1474, 16
        %s1476 = scalar_lea.vmem [#allocation8], %s1475
        %p1477 = pneg %p132
        %p1478 = pneg %p129
        %p1479 = pneg %p153
        %p1480 = pneg %p150
        %p1481 = pneg %p174
        %p1482 = pneg %p171
        %p1483 = pneg %p195
        %p1484 = pneg %p192
        %p1485 = pneg %p216
        %p1486 = pneg %p213
        %p1487 = pneg %p237
        %p1488 = pneg %p234
        %p1489 = pneg %p258
        %p1490 = pneg %p255
        %p1491 = pneg %p279
        %p1492 = pneg %p276
        %p1493 = pneg %p300
        %p1494 = pneg %p297
        %p1495 = pneg %p321
        %p1496 = pneg %p318
        %p1497 = pneg %p342
        %p1498 = pneg %p339
        %p1499 = pneg %p363
        %p1500 = pneg %p360
        %p1501 = pneg %p384
        %p1502 = pneg %p381
        %p1503 = pneg %p405
        %p1504 = pneg %p402
        %p1505 = pneg %p426
        %p1506 = pneg %p423
        %p1507 = pneg %p447
        %p1508 = pneg %p444
        %p1509 = pneg %p468
        %p1510 = pneg %p465
        %p1511 = pneg %p489
        %p1512 = pneg %p486
        %p1513 = pneg %p510
        %p1514 = pneg %p507
        %p1515 = pneg %p531
        %p1516 = pneg %p528
        %p1517 = pneg %p552
        %p1518 = pneg %p549
        %p1519 = pneg %p573
        %p1520 = pneg %p570
        %p1521 = pneg %p594
        %p1522 = pneg %p591
        %p1523 = pneg %p615
        %p1524 = pneg %p612
        %p1525 = pneg %p636
        %p1526 = pneg %p633
        %p1527 = pneg %p657
        %p1528 = pneg %p654
        %p1529 = pneg %p678
        %p1530 = pneg %p675
        %p1531 = pneg %p699
        %p1532 = pneg %p696
        %p1533 = pneg %p720
        %p1534 = pneg %p717
        %p1535 = pneg %p741
        %p1536 = pneg %p738
        %p1537 = pneg %p762
        %p1538 = pneg %p759
        %p1539 = pneg %p783
        %p1540 = pneg %p780
        %p1541 = pneg %p804
        %p1542 = pneg %p801
        %p1543 = pneg %p825
        %p1544 = pneg %p822
        %p1545 = pneg %p846
        %p1546 = pneg %p843
        %p1547 = pneg %p872
        %p1548 = pneg %p869
        %s1549 = sand.u32 %s859, 1
        %s1550 = scalar_lea.sflag [#allocation10], %s1549
        %s1551 = sand.u32 %s859, 1
        %s1552 = smul.addr %s1551, 16
        %s1553 = scalar_lea.vmem [#allocation55], %s1552
        %p1554 = pneg %p898
        %p1555 = pneg %p895
        %s1556 = sand.u32 %s111, 1
        %s1557 = scalar_lea.sflag [#allocation57], %s1556
        %s1558 = sand.u32 %s885, 1
        %s1559 = smul.addr %s1558, 4
        %s1560 = scalar_lea.vmem [#allocation56], %s1559
        %p1561 = pneg %p924
        %p1562 = pneg %p921
        %s1563 = sand.u32 %s111, 1
        %s1564 = scalar_lea.sflag [#allocation57], %s1563
        %s1565 = sand.u32 %s911, 1
        %s1566 = smul.addr %s1565, 2
        %s1567 = scalar_lea.vmem [#allocation58], %s1566
        %v1569 = vld [vmem:[%s1351] sm:$0xff]
        %v1570 = vld [vmem:[%s1351 + $0x8] sm:$0xff]
        %vm1571 = vcmask 516096
        %1572 = vst.msk [vmem:[#allocation2 + $0x7] sm:$0x1] %vm1571, 0.0
        %vm1573 = vcmask 523264
        %1574 = vst.msk [vmem:[#allocation2 + $0x8] sm:$0xff] %vm1573, %v1569
        %1575 = vst.msk [vmem:[#allocation2 + $0x10] sm:$0xff] %vm1573, %v1570
        %s1576 = scalar_lea.vmem [#allocation2], 7
        %v1577 = vld [vmem:[%s1576] ss:$2 sm:$0xff]
        %v1578 = vpack.c.bf16 %v1577, %v1577
        %v1579 = vld [vmem:[#allocation11] sm:$0xf]
        %v1580 = vld [vmem:[#allocation11 + $0x4] sm:$0xf]
        %v1581 = vld [vmem:[#allocation11 + $0x8] sm:$0xf]
        %v1582 = vld [vmem:[#allocation11 + $0xc] sm:$0xf]
        %v1583 = vld [vmem:[#allocation11 + $0x10] sm:$0xf]
        %v1584 = vld [vmem:[#allocation11 + $0x14] sm:$0xf]
        %v1585 = vld [vmem:[#allocation11 + $0x18] sm:$0xf]
        %v1586 = vld [vmem:[#allocation11 + $0x1c] sm:$0xf]
        %s1587 = scalar_lea.vmem [#allocation2], 8
        %v1588 = vld [vmem:[%s1587] ss:$2 sm:$0xff]
        %v1589 = vpack.c.bf16 %v1588, %v1588
        %v1590 = vld [vmem:[#allocation13] sm:$0xf]
        %v1591 = vld [vmem:[#allocation13 + $0x4] sm:$0xf]
        %v1592 = vld [vmem:[#allocation13 + $0x8] sm:$0xf]
        %v1593 = vld [vmem:[#allocation13 + $0xc] sm:$0xf]
        %v1594 = vld [vmem:[#allocation13 + $0x10] sm:$0xf]
        %v1595 = vld [vmem:[#allocation13 + $0x14] sm:$0xf]
        %v1596 = vld [vmem:[#allocation13 + $0x18] sm:$0xf]
        %v1597 = vld [vmem:[#allocation13 + $0x1c] sm:$0xf]
        %v1606 = vunpack.c.l.b16 %v1590
        %v1607 = vunpack.c.l.b16 %v1591
        %v1608 = vunpack.c.l.b16 %v1592
        %v1609 = vunpack.c.l.b16 %v1593
        %v1610 = vunpack.c.l.b16 %v1594
        %v1611 = vunpack.c.l.b16 %v1595
        %v1612 = vunpack.c.l.b16 %v1596
        %v1613 = vunpack.c.l.b16 %v1597
        %v1614 = vpack.c.b16 %v1607, %v1606
        %v1615 = vpack.c.b16 %v1609, %v1608
        %v1616 = vpack.c.b16 %v1611, %v1610
        %v1617 = vpack.c.b16 %v1613, %v1612
        %v1623 = vsel %vm1573, %v1589, 0
        %1625 = vmatprep.subr.bf16.mxu0 0
        %1626 = vmatpush1.bf16.msra.mxu0 0
        %1627 = vmatprep.subr.bf16.mxu0 0
        %1628 = vmatpush1.bf16.msra.mxu0 0
        %1629 = vmatprep.subr.bf16.mxu0 0
        %1630 = vmatpush1.bf16.msra.mxu0 0
        %1631 = vmatprep.subr.bf16.mxu0 0
        %1632 = vmatpush1.bf16.msra.mxu0 0
        %1633 = vmatprep.subr.bf16.mxu0 0
        %1634 = vmatpush1.bf16.msra.mxu0 %v1617
        %1635 = vmatprep.subr.bf16.mxu0 0
        %1636 = vmatpush1.bf16.msra.mxu0 %v1616
        %1637 = vmatprep.subr.bf16.mxu0 0
        %1638 = vmatpush1.bf16.msra.mxu0 %v1615
        %1639 = vmatprep.subr.bf16.mxu0 0
        %1640 = vmatpush1.bf16.msra.mxu0 %v1614
        %1641 = vmatprep.subr.bf16.mxu0 0
        %1642 = vmatpush2.bf16.msra.mxu0 0
        %1643 = vmatprep.subr.bf16.mxu0 0
        %1644 = vmatpush2.bf16.msra.mxu0 0
        %1645 = vmatprep.subr.bf16.mxu0 0
        %1646 = vmatpush2.bf16.msra.mxu0 0
        %1647 = vmatprep.subr.bf16.mxu0 0
        %1648 = vmatpush2.bf16.msra.mxu0 0
        %1649 = vmatprep.subr.bf16.mxu0 0
        %1650 = vmatpush2.bf16.msra.mxu0 0
        %1651 = vmatprep.subr.bf16.mxu0 0
        %1652 = vmatpush2.bf16.msra.mxu0 0
        %1653 = vmatprep.subr.bf16.mxu0 0
        %1654 = vmatpush2.bf16.msra.mxu0 0
        %1655 = vmatprep.subr.bf16.mxu0 0
        %1656 = vmatpush2.bf16.msra.mxu0 0
        %1657 = vmatprep.mubr.bf16.mxu0 0
        %1658 = vmatmul.mubr.bf16.gmra.mxu0 %v1623
        %v1659 = vpop.f32.mrf.mxu0
        %v1660 = vadd.f32 0.0, %v1659
        %v1661 = vpop.f32.mrf.mxu0
        %v1662 = vpop.f32.mrf.mxu0
        %v1663 = vpop.f32.mrf.mxu0
        %1664 = vdwg.mxu0
        %v1673 = vunpack.c.l.b16 %v1579
        %v1674 = vunpack.c.l.b16 %v1580
        %v1675 = vunpack.c.l.b16 %v1581
        %v1676 = vunpack.c.l.b16 %v1582
        %v1677 = vunpack.c.l.b16 %v1583
        %v1678 = vunpack.c.l.b16 %v1584
        %v1679 = vunpack.c.l.b16 %v1585
        %v1680 = vunpack.c.l.b16 %v1586
        %v1681 = vpack.c.b16 %v1674, %v1673
        %v1682 = vpack.c.b16 %v1676, %v1675
        %v1683 = vpack.c.b16 %v1678, %v1677
        %v1684 = vpack.c.b16 %v1680, %v1679
        %v1690 = vsel %vm1573, %v1578, 0
        %1692 = vmatprep.subr.bf16.mxu0 0
        %1693 = vmatpush1.bf16.msra.mxu0 0
        %1694 = vmatprep.subr.bf16.mxu0 0
        %1695 = vmatpush1.bf16.msra.mxu0 0
        %1696 = vmatprep.subr.bf16.mxu0 0
        %1697 = vmatpush1.bf16.msra.mxu0 0
        %1698 = vmatprep.subr.bf16.mxu0 0
        %1699 = vmatpush1.bf16.msra.mxu0 0
        %1700 = vmatprep.subr.bf16.mxu0 0
        %1701 = vmatpush1.bf16.msra.mxu0 %v1684
        %1702 = vmatprep.subr.bf16.mxu0 0
        %1703 = vmatpush1.bf16.msra.mxu0 %v1683
        %1704 = vmatprep.subr.bf16.mxu0 0
        %1705 = vmatpush1.bf16.msra.mxu0 %v1682
        %1706 = vmatprep.subr.bf16.mxu0 0
        %1707 = vmatpush1.bf16.msra.mxu0 %v1681
        %1708 = vmatprep.subr.bf16.mxu0 0
        %1709 = vmatpush2.bf16.msra.mxu0 0
        %1710 = vmatprep.subr.bf16.mxu0 0
        %1711 = vmatpush2.bf16.msra.mxu0 0
        %1712 = vmatprep.subr.bf16.mxu0 0
        %1713 = vmatpush2.bf16.msra.mxu0 0
        %1714 = vmatprep.subr.bf16.mxu0 0
        %1715 = vmatpush2.bf16.msra.mxu0 0
        %1716 = vmatprep.subr.bf16.mxu0 0
        %1717 = vmatpush2.bf16.msra.mxu0 0
        %1718 = vmatprep.subr.bf16.mxu0 0
        %1719 = vmatpush2.bf16.msra.mxu0 0
        %1720 = vmatprep.subr.bf16.mxu0 0
        %1721 = vmatpush2.bf16.msra.mxu0 0
        %1722 = vmatprep.subr.bf16.mxu0 0
        %1723 = vmatpush2.bf16.msra.mxu0 0
        %1724 = vmatprep.mubr.bf16.mxu0 0
        %1725 = vmatmul.mubr.bf16.gmra.mxu0 %v1690
        %v1726 = vpop.f32.mrf.mxu0
        %v1727 = vadd.f32 %v1660, %v1726
        %v1728 = vpop.f32.mrf.mxu0
        %v1729 = vpop.f32.mrf.mxu0
        %v1730 = vpop.f32.mrf.mxu0
        %1731 = vdwg.mxu0
        %s1732 = scalar_lea.vmem [#allocation2], 9
        %v1733 = vld [vmem:[%s1732] ss:$2 sm:$0xff]
        %v1734 = vpack.c.bf16 %v1733, %v1733
        %v1735 = vld [vmem:[#allocation14] sm:$0xf]
        %v1736 = vld [vmem:[#allocation14 + $0x4] sm:$0xf]
        %v1737 = vld [vmem:[#allocation14 + $0x8] sm:$0xf]
        %v1738 = vld [vmem:[#allocation14 + $0xc] sm:$0xf]
        %v1739 = vld [vmem:[#allocation14 + $0x10] sm:$0xf]
        %v1740 = vld [vmem:[#allocation14 + $0x14] sm:$0xf]
        %v1741 = vld [vmem:[#allocation14 + $0x18] sm:$0xf]
        %v1742 = vld [vmem:[#allocation14 + $0x1c] sm:$0xf]
        %v1751 = vunpack.c.l.b16 %v1735
        %v1752 = vunpack.c.l.b16 %v1736
        %v1753 = vunpack.c.l.b16 %v1737
        %v1754 = vunpack.c.l.b16 %v1738
        %v1755 = vunpack.c.l.b16 %v1739
        %v1756 = vunpack.c.l.b16 %v1740
        %v1757 = vunpack.c.l.b16 %v1741
        %v1758 = vunpack.c.l.b16 %v1742
        %v1759 = vpack.c.b16 %v1752, %v1751
        %v1760 = vpack.c.b16 %v1754, %v1753
        %v1761 = vpack.c.b16 %v1756, %v1755
        %v1762 = vpack.c.b16 %v1758, %v1757
        %v1768 = vsel %vm1573, %v1734, 0
        %1770 = vmatprep.subr.bf16.mxu0 0
        %1771 = vmatpush1.bf16.msra.mxu0 0
        %1772 = vmatprep.subr.bf16.mxu0 0
        %1773 = vmatpush1.bf16.msra.mxu0 0
        %1774 = vmatprep.subr.bf16.mxu0 0
        %1775 = vmatpush1.bf16.msra.mxu0 0
        %1776 = vmatprep.subr.bf16.mxu0 0
        %1777 = vmatpush1.bf16.msra.mxu0 0
        %1778 = vmatprep.subr.bf16.mxu0 0
        %1779 = vmatpush1.bf16.msra.mxu0 %v1762
        %1780 = vmatprep.subr.bf16.mxu0 0
        %1781 = vmatpush1.bf16.msra.mxu0 %v1761
        %1782 = vmatprep.subr.bf16.mxu0 0
        %1783 = vmatpush1.bf16.msra.mxu0 %v1760
        %1784 = vmatprep.subr.bf16.mxu0 0
        %1785 = vmatpush1.bf16.msra.mxu0 %v1759
        %1786 = vmatprep.subr.bf16.mxu0 0
        %1787 = vmatpush2.bf16.msra.mxu0 0
        %1788 = vmatprep.subr.bf16.mxu0 0
        %1789 = vmatpush2.bf16.msra.mxu0 0
        %1790 = vmatprep.subr.bf16.mxu0 0
        %1791 = vmatpush2.bf16.msra.mxu0 0
        %1792 = vmatprep.subr.bf16.mxu0 0
        %1793 = vmatpush2.bf16.msra.mxu0 0
        %1794 = vmatprep.subr.bf16.mxu0 0
        %1795 = vmatpush2.bf16.msra.mxu0 0
        %1796 = vmatprep.subr.bf16.mxu0 0
        %1797 = vmatpush2.bf16.msra.mxu0 0
        %1798 = vmatprep.subr.bf16.mxu0 0
        %1799 = vmatpush2.bf16.msra.mxu0 0
        %1800 = vmatprep.subr.bf16.mxu0 0
        %1801 = vmatpush2.bf16.msra.mxu0 0
        %1802 = vmatprep.mubr.bf16.mxu0 0
        %1803 = vmatmul.mubr.bf16.gmra.mxu0 %v1768
        %v1804 = vpop.f32.mrf.mxu0
        %v1805 = vadd.f32 0.0, %v1804
        %v1806 = vpop.f32.mrf.mxu0
        %v1807 = vpop.f32.mrf.mxu0
        %v1808 = vpop.f32.mrf.mxu0
        %1809 = vdwg.mxu0
        %v1810 = vadd.f32 %v1727, %v1805
        %v1811 = vld [vmem:[%s9] sm:$0x1]
        %v1813 = vlaneseq
        %v1814 = vshrl.u32 %v1813, 7
        %v1815 = vsub.s32 0, %v1814
        %v1816 = vrot.slane %v1811, %v1815
        %v1818 = vadd.f32 %v1810, %v1816
        %v1819 = vmax.f32 %v1818, 0.0
        %1820 = vst.msk [vmem:[#allocation3 + $0x7] sm:$0x1] %vm1571, 0.0
        %1821 = vst.msk [vmem:[#allocation3 + $0x8] sm:$0xff] %vm1573, %v1819
        %s1822 = scalar_lea.vmem [#allocation3], 7
        %v1823 = vld [vmem:[%s1822] ss:$2 sm:$0xf]
        %v1824 = vpack.c.bf16 %v1823, %v1823
        %v1825 = vld [vmem:[#allocation16] sm:$0xf]
        %v1826 = vld [vmem:[#allocation16 + $0x4] sm:$0xf]
        %v1827 = vld [vmem:[#allocation16 + $0x8] sm:$0xf]
        %v1828 = vld [vmem:[#allocation16 + $0xc] sm:$0xf]
        %v1829 = vld [vmem:[#allocation16 + $0x10] sm:$0xf]
        %v1830 = vld [vmem:[#allocation16 + $0x14] sm:$0xf]
        %v1831 = vld [vmem:[#allocation16 + $0x18] sm:$0xf]
        %v1832 = vld [vmem:[#allocation16 + $0x1c] sm:$0xf]
        %s1833 = scalar_lea.vmem [#allocation3], 8
        %v1834 = vld [vmem:[%s1833] ss:$2 sm:$0xf]
        %v1835 = vpack.c.bf16 %v1834, %v1834
        %v1836 = vld [vmem:[#allocation17] sm:$0xf]
        %v1837 = vld [vmem:[#allocation17 + $0x4] sm:$0xf]
        %v1838 = vld [vmem:[#allocation17 + $0x8] sm:$0xf]
        %v1839 = vld [vmem:[#allocation17 + $0xc] sm:$0xf]
        %v1840 = vld [vmem:[#allocation17 + $0x10] sm:$0xf]
        %v1841 = vld [vmem:[#allocation17 + $0x14] sm:$0xf]
        %v1842 = vld [vmem:[#allocation17 + $0x18] sm:$0xf]
        %v1843 = vld [vmem:[#allocation17 + $0x1c] sm:$0xf]
        %v1852 = vunpack.c.l.b16 %v1836
        %v1853 = vunpack.c.l.b16 %v1837
        %v1854 = vunpack.c.l.b16 %v1838
        %v1855 = vunpack.c.l.b16 %v1839
        %v1856 = vunpack.c.l.b16 %v1840
        %v1857 = vunpack.c.l.b16 %v1841
        %v1858 = vunpack.c.l.b16 %v1842
        %v1859 = vunpack.c.l.b16 %v1843
        %v1860 = vpack.c.b16 %v1853, %v1852
        %v1861 = vpack.c.b16 %v1855, %v1854
        %v1862 = vpack.c.b16 %v1857, %v1856
        %v1863 = vpack.c.b16 %v1859, %v1858
        %v1869 = vsel %vm1573, %v1835, 0
        %1871 = vmatprep.subr.bf16.mxu0 0
        %1872 = vmatpush1.bf16.msra.mxu0 0
        %1873 = vmatprep.subr.bf16.mxu0 0
        %1874 = vmatpush1.bf16.msra.mxu0 0
        %1875 = vmatprep.subr.bf16.mxu0 0
        %1876 = vmatpush1.bf16.msra.mxu0 0
        %1877 = vmatprep.subr.bf16.mxu0 0
        %1878 = vmatpush1.bf16.msra.mxu0 0
        %1879 = vmatprep.subr.bf16.mxu0 0
        %1880 = vmatpush1.bf16.msra.mxu0 %v1863
        %1881 = vmatprep.subr.bf16.mxu0 0
        %1882 = vmatpush1.bf16.msra.mxu0 %v1862
        %1883 = vmatprep.subr.bf16.mxu0 0
        %1884 = vmatpush1.bf16.msra.mxu0 %v1861
        %1885 = vmatprep.subr.bf16.mxu0 0
        %1886 = vmatpush1.bf16.msra.mxu0 %v1860
        %1887 = vmatprep.subr.bf16.mxu0 0
        %1888 = vmatpush2.bf16.msra.mxu0 0
        %1889 = vmatprep.subr.bf16.mxu0 0
        %1890 = vmatpush2.bf16.msra.mxu0 0
        %1891 = vmatprep.subr.bf16.mxu0 0
        %1892 = vmatpush2.bf16.msra.mxu0 0
        %1893 = vmatprep.subr.bf16.mxu0 0
        %1894 = vmatpush2.bf16.msra.mxu0 0
        %1895 = vmatprep.subr.bf16.mxu0 0
        %1896 = vmatpush2.bf16.msra.mxu0 0
        %1897 = vmatprep.subr.bf16.mxu0 0
        %1898 = vmatpush2.bf16.msra.mxu0 0
        %1899 = vmatprep.subr.bf16.mxu0 0
        %1900 = vmatpush2.bf16.msra.mxu0 0
        %1901 = vmatprep.subr.bf16.mxu0 0
        %1902 = vmatpush2.bf16.msra.mxu0 0
        %1903 = vmatprep.mubr.bf16.mxu0 0
        %1904 = vmatmul.mubr.bf16.gmra.mxu0 %v1869
        %v1905 = vpop.f32.mrf.mxu0
        %v1906 = vadd.f32 0.0, %v1905
        %v1907 = vpop.f32.mrf.mxu0
        %v1908 = vpop.f32.mrf.mxu0
        %v1909 = vpop.f32.mrf.mxu0
        %1910 = vdwg.mxu0
        %v1919 = vunpack.c.l.b16 %v1825
        %v1920 = vunpack.c.l.b16 %v1826
        %v1921 = vunpack.c.l.b16 %v1827
        %v1922 = vunpack.c.l.b16 %v1828
        %v1923 = vunpack.c.l.b16 %v1829
        %v1924 = vunpack.c.l.b16 %v1830
        %v1925 = vunpack.c.l.b16 %v1831
        %v1926 = vunpack.c.l.b16 %v1832
        %v1927 = vpack.c.b16 %v1920, %v1919
        %v1928 = vpack.c.b16 %v1922, %v1921
        %v1929 = vpack.c.b16 %v1924, %v1923
        %v1930 = vpack.c.b16 %v1926, %v1925
        %v1936 = vsel %vm1573, %v1824, 0
        %1938 = vmatprep.subr.bf16.mxu0 0
        %1939 = vmatpush1.bf16.msra.mxu0 0
        %1940 = vmatprep.subr.bf16.mxu0 0
        %1941 = vmatpush1.bf16.msra.mxu0 0
        %1942 = vmatprep.subr.bf16.mxu0 0
        %1943 = vmatpush1.bf16.msra.mxu0 0
        %1944 = vmatprep.subr.bf16.mxu0 0
        %1945 = vmatpush1.bf16.msra.mxu0 0
        %1946 = vmatprep.subr.bf16.mxu0 0
        %1947 = vmatpush1.bf16.msra.mxu0 %v1930
        %1948 = vmatprep.subr.bf16.mxu0 0
        %1949 = vmatpush1.bf16.msra.mxu0 %v1929
        %1950 = vmatprep.subr.bf16.mxu0 0
        %1951 = vmatpush1.bf16.msra.mxu0 %v1928
        %1952 = vmatprep.subr.bf16.mxu0 0
        %1953 = vmatpush1.bf16.msra.mxu0 %v1927
        %1954 = vmatprep.subr.bf16.mxu0 0
        %1955 = vmatpush2.bf16.msra.mxu0 0
        %1956 = vmatprep.subr.bf16.mxu0 0
        %1957 = vmatpush2.bf16.msra.mxu0 0
        %1958 = vmatprep.subr.bf16.mxu0 0
        %1959 = vmatpush2.bf16.msra.mxu0 0
        %1960 = vmatprep.subr.bf16.mxu0 0
        %1961 = vmatpush2.bf16.msra.mxu0 0
        %1962 = vmatprep.subr.bf16.mxu0 0
        %1963 = vmatpush2.bf16.msra.mxu0 0
        %1964 = vmatprep.subr.bf16.mxu0 0
        %1965 = vmatpush2.bf16.msra.mxu0 0
        %1966 = vmatprep.subr.bf16.mxu0 0
        %1967 = vmatpush2.bf16.msra.mxu0 0
        %1968 = vmatprep.subr.bf16.mxu0 0
        %1969 = vmatpush2.bf16.msra.mxu0 0
        %1970 = vmatprep.mubr.bf16.mxu0 0
        %1971 = vmatmul.mubr.bf16.gmra.mxu0 %v1936
        %v1972 = vpop.f32.mrf.mxu0
        %v1973 = vadd.f32 %v1906, %v1972
        %v1974 = vpop.f32.mrf.mxu0
        %v1975 = vpop.f32.mrf.mxu0
        %v1976 = vpop.f32.mrf.mxu0
        %1977 = vdwg.mxu0
        %s1978 = scalar_lea.vmem [#allocation3], 9
        %v1979 = vld [vmem:[%s1978] ss:$2 sm:$0xf]
        %v1980 = vpack.c.bf16 %v1979, %v1979
        %v1981 = vld [vmem:[#allocation19] sm:$0xf]
        %v1982 = vld [vmem:[#allocation19 + $0x4] sm:$0xf]
        %v1983 = vld [vmem:[#allocation19 + $0x8] sm:$0xf]
        %v1984 = vld [vmem:[#allocation19 + $0xc] sm:$0xf]
        %v1985 = vld [vmem:[#allocation19 + $0x10] sm:$0xf]
        %v1986 = vld [vmem:[#allocation19 + $0x14] sm:$0xf]
        %v1987 = vld [vmem:[#allocation19 + $0x18] sm:$0xf]
        %v1988 = vld [vmem:[#allocation19 + $0x1c] sm:$0xf]
        %v1997 = vunpack.c.l.b16 %v1981
        %v1998 = vunpack.c.l.b16 %v1982
        %v1999 = vunpack.c.l.b16 %v1983
        %v2000 = vunpack.c.l.b16 %v1984
        %v2001 = vunpack.c.l.b16 %v1985
        %v2002 = vunpack.c.l.b16 %v1986
        %v2003 = vunpack.c.l.b16 %v1987
        %v2004 = vunpack.c.l.b16 %v1988
        %v2005 = vpack.c.b16 %v1998, %v1997
        %v2006 = vpack.c.b16 %v2000, %v1999
        %v2007 = vpack.c.b16 %v2002, %v2001
        %v2008 = vpack.c.b16 %v2004, %v2003
        %v2014 = vsel %vm1573, %v1980, 0
        %2016 = vmatprep.subr.bf16.mxu0 0
        %2017 = vmatpush1.bf16.msra.mxu0 0
        %2018 = vmatprep.subr.bf16.mxu0 0
        %2019 = vmatpush1.bf16.msra.mxu0 0
        %2020 = vmatprep.subr.bf16.mxu0 0
        %2021 = vmatpush1.bf16.msra.mxu0 0
        %2022 = vmatprep.subr.bf16.mxu0 0
        %2023 = vmatpush1.bf16.msra.mxu0 0
        %2024 = vmatprep.subr.bf16.mxu0 0
        %2025 = vmatpush1.bf16.msra.mxu0 %v2008
        %2026 = vmatprep.subr.bf16.mxu0 0
        %2027 = vmatpush1.bf16.msra.mxu0 %v2007
        %2028 = vmatprep.subr.bf16.mxu0 0
        %2029 = vmatpush1.bf16.msra.mxu0 %v2006
        %2030 = vmatprep.subr.bf16.mxu0 0
        %2031 = vmatpush1.bf16.msra.mxu0 %v2005
        %2032 = vmatprep.subr.bf16.mxu0 0
        %2033 = vmatpush2.bf16.msra.mxu0 0
        %2034 = vmatprep.subr.bf16.mxu0 0
        %2035 = vmatpush2.bf16.msra.mxu0 0
        %2036 = vmatprep.subr.bf16.mxu0 0
        %2037 = vmatpush2.bf16.msra.mxu0 0
        %2038 = vmatprep.subr.bf16.mxu0 0
        %2039 = vmatpush2.bf16.msra.mxu0 0
        %2040 = vmatprep.subr.bf16.mxu0 0
        %2041 = vmatpush2.bf16.msra.mxu0 0
        %2042 = vmatprep.subr.bf16.mxu0 0
        %2043 = vmatpush2.bf16.msra.mxu0 0
        %2044 = vmatprep.subr.bf16.mxu0 0
        %2045 = vmatpush2.bf16.msra.mxu0 0
        %2046 = vmatprep.subr.bf16.mxu0 0
        %2047 = vmatpush2.bf16.msra.mxu0 0
        %2048 = vmatprep.mubr.bf16.mxu0 0
        %2049 = vmatmul.mubr.bf16.gmra.mxu0 %v2014
        %v2050 = vpop.f32.mrf.mxu0
        %v2051 = vadd.f32 0.0, %v2050
        %v2052 = vpop.f32.mrf.mxu0
        %v2053 = vpop.f32.mrf.mxu0
        %v2054 = vpop.f32.mrf.mxu0
        %2055 = vdwg.mxu0
        %v2056 = vadd.f32 %v1973, %v2051
        %v2057 = vld [vmem:[#allocation20] sm:$0x1]
        %v2059 = vlaneseq
        %v2060 = vshrl.u32 %v2059, 7
        %v2061 = vsub.s32 0, %v2060
        %v2062 = vrot.slane %v2057, %v2061
        %v2064 = vadd.f32 %v2056, %v2062
        %v2065 = vmax.f32 %v2064, 0.0
        %2066 = vst.msk [vmem:[#allocation4 + $0x7] sm:$0x1] %vm1571, 0.0
        %vm2067 = vcmask 519168
        %2068 = vst.msk [vmem:[#allocation4 + $0x8] sm:$0xf] %vm2067, %v2065
        %s2069 = scalar_lea.vmem [#allocation4], 7
        %v2070 = vld [vmem:[%s2069] ss:$2 sm:$0x3]
        %v2071 = vpack.c.bf16 %v2070, %v2070
        %v2072 = vld [vmem:[#allocation22] sm:$0xf]
        %v2073 = vld [vmem:[#allocation22 + $0x4] sm:$0xf]
        %v2074 = vld [vmem:[#allocation22 + $0x8] sm:$0xf]
        %v2075 = vld [vmem:[#allocation22 + $0xc] sm:$0xf]
        %v2076 = vld [vmem:[#allocation22 + $0x10] sm:$0xf]
        %v2077 = vld [vmem:[#allocation22 + $0x14] sm:$0xf]
        %v2078 = vld [vmem:[#allocation22 + $0x18] sm:$0xf]
        %v2079 = vld [vmem:[#allocation22 + $0x1c] sm:$0xf]
        %s2080 = scalar_lea.vmem [#allocation4], 8
        %v2081 = vld [vmem:[%s2080] ss:$2 sm:$0x3]
        %v2082 = vpack.c.bf16 %v2081, %v2081
        %v2083 = vld [vmem:[#allocation23] sm:$0xf]
        %v2084 = vld [vmem:[#allocation23 + $0x4] sm:$0xf]
        %v2085 = vld [vmem:[#allocation23 + $0x8] sm:$0xf]
        %v2086 = vld [vmem:[#allocation23 + $0xc] sm:$0xf]
        %v2087 = vld [vmem:[#allocation23 + $0x10] sm:$0xf]
        %v2088 = vld [vmem:[#allocation23 + $0x14] sm:$0xf]
        %v2089 = vld [vmem:[#allocation23 + $0x18] sm:$0xf]
        %v2090 = vld [vmem:[#allocation23 + $0x1c] sm:$0xf]
        %v2099 = vunpack.c.l.b16 %v2083
        %v2100 = vunpack.c.l.b16 %v2084
        %v2101 = vunpack.c.l.b16 %v2085
        %v2102 = vunpack.c.l.b16 %v2086
        %v2103 = vunpack.c.l.b16 %v2087
        %v2104 = vunpack.c.l.b16 %v2088
        %v2105 = vunpack.c.l.b16 %v2089
        %v2106 = vunpack.c.l.b16 %v2090
        %v2107 = vpack.c.b16 %v2100, %v2099
        %v2108 = vpack.c.b16 %v2102, %v2101
        %v2109 = vpack.c.b16 %v2104, %v2103
        %v2110 = vpack.c.b16 %v2106, %v2105
        %v2116 = vsel %vm1573, %v2082, 0
        %2118 = vmatprep.subr.bf16.mxu0 0
        %2119 = vmatpush1.bf16.msra.mxu0 0
        %2120 = vmatprep.subr.bf16.mxu0 0
        %2121 = vmatpush1.bf16.msra.mxu0 0
        %2122 = vmatprep.subr.bf16.mxu0 0
        %2123 = vmatpush1.bf16.msra.mxu0 0
        %2124 = vmatprep.subr.bf16.mxu0 0
        %2125 = vmatpush1.bf16.msra.mxu0 0
        %2126 = vmatprep.subr.bf16.mxu0 0
        %2127 = vmatpush1.bf16.msra.mxu0 %v2110
        %2128 = vmatprep.subr.bf16.mxu0 0
        %2129 = vmatpush1.bf16.msra.mxu0 %v2109
        %2130 = vmatprep.subr.bf16.mxu0 0
        %2131 = vmatpush1.bf16.msra.mxu0 %v2108
        %2132 = vmatprep.subr.bf16.mxu0 0
        %2133 = vmatpush1.bf16.msra.mxu0 %v2107
        %2134 = vmatprep.subr.bf16.mxu0 0
        %2135 = vmatpush2.bf16.msra.mxu0 0
        %2136 = vmatprep.subr.bf16.mxu0 0
        %2137 = vmatpush2.bf16.msra.mxu0 0
        %2138 = vmatprep.subr.bf16.mxu0 0
        %2139 = vmatpush2.bf16.msra.mxu0 0
        %2140 = vmatprep.subr.bf16.mxu0 0
        %2141 = vmatpush2.bf16.msra.mxu0 0
        %2142 = vmatprep.subr.bf16.mxu0 0
        %2143 = vmatpush2.bf16.msra.mxu0 0
        %2144 = vmatprep.subr.bf16.mxu0 0
        %2145 = vmatpush2.bf16.msra.mxu0 0
        %2146 = vmatprep.subr.bf16.mxu0 0
        %2147 = vmatpush2.bf16.msra.mxu0 0
        %2148 = vmatprep.subr.bf16.mxu0 0
        %2149 = vmatpush2.bf16.msra.mxu0 0
        %2150 = vmatprep.mubr.bf16.mxu0 0
        %2151 = vmatmul.mubr.bf16.gmra.mxu0 %v2116
        %v2152 = vpop.f32.mrf.mxu0
        %v2153 = vadd.f32 0.0, %v2152
        %v2154 = vpop.f32.mrf.mxu0
        %v2155 = vpop.f32.mrf.mxu0
        %v2156 = vpop.f32.mrf.mxu0
        %2157 = vdwg.mxu0
        %v2166 = vunpack.c.l.b16 %v2072
        %v2167 = vunpack.c.l.b16 %v2073
        %v2168 = vunpack.c.l.b16 %v2074
        %v2169 = vunpack.c.l.b16 %v2075
        %v2170 = vunpack.c.l.b16 %v2076
        %v2171 = vunpack.c.l.b16 %v2077
        %v2172 = vunpack.c.l.b16 %v2078
        %v2173 = vunpack.c.l.b16 %v2079
        %v2174 = vpack.c.b16 %v2167, %v2166
        %v2175 = vpack.c.b16 %v2169, %v2168
        %v2176 = vpack.c.b16 %v2171, %v2170
        %v2177 = vpack.c.b16 %v2173, %v2172
        %v2183 = vsel %vm1573, %v2071, 0
        %2185 = vmatprep.subr.bf16.mxu0 0
        %2186 = vmatpush1.bf16.msra.mxu0 0
        %2187 = vmatprep.subr.bf16.mxu0 0
        %2188 = vmatpush1.bf16.msra.mxu0 0
        %2189 = vmatprep.subr.bf16.mxu0 0
        %2190 = vmatpush1.bf16.msra.mxu0 0
        %2191 = vmatprep.subr.bf16.mxu0 0
        %2192 = vmatpush1.bf16.msra.mxu0 0
        %2193 = vmatprep.subr.bf16.mxu0 0
        %2194 = vmatpush1.bf16.msra.mxu0 %v2177
        %2195 = vmatprep.subr.bf16.mxu0 0
        %2196 = vmatpush1.bf16.msra.mxu0 %v2176
        %2197 = vmatprep.subr.bf16.mxu0 0
        %2198 = vmatpush1.bf16.msra.mxu0 %v2175
        %2199 = vmatprep.subr.bf16.mxu0 0
        %2200 = vmatpush1.bf16.msra.mxu0 %v2174
        %2201 = vmatprep.subr.bf16.mxu0 0
        %2202 = vmatpush2.bf16.msra.mxu0 0
        %2203 = vmatprep.subr.bf16.mxu0 0
        %2204 = vmatpush2.bf16.msra.mxu0 0
        %2205 = vmatprep.subr.bf16.mxu0 0
        %2206 = vmatpush2.bf16.msra.mxu0 0
        %2207 = vmatprep.subr.bf16.mxu0 0
        %2208 = vmatpush2.bf16.msra.mxu0 0
        %2209 = vmatprep.subr.bf16.mxu0 0
        %2210 = vmatpush2.bf16.msra.mxu0 0
        %2211 = vmatprep.subr.bf16.mxu0 0
        %2212 = vmatpush2.bf16.msra.mxu0 0
        %2213 = vmatprep.subr.bf16.mxu0 0
        %2214 = vmatpush2.bf16.msra.mxu0 0
        %2215 = vmatprep.subr.bf16.mxu0 0
        %2216 = vmatpush2.bf16.msra.mxu0 0
        %2217 = vmatprep.mubr.bf16.mxu0 0
        %2218 = vmatmul.mubr.bf16.gmra.mxu0 %v2183
        %v2219 = vpop.f32.mrf.mxu0
        %v2220 = vadd.f32 %v2153, %v2219
        %v2221 = vpop.f32.mrf.mxu0
        %v2222 = vpop.f32.mrf.mxu0
        %v2223 = vpop.f32.mrf.mxu0
        %2224 = vdwg.mxu0
        %s2225 = scalar_lea.vmem [#allocation4], 9
        %v2226 = vld [vmem:[%s2225] ss:$2 sm:$0x3]
        %v2227 = vpack.c.bf16 %v2226, %v2226
        %v2228 = vld [vmem:[#allocation25] sm:$0xf]
        %v2229 = vld [vmem:[#allocation25 + $0x4] sm:$0xf]
        %v2230 = vld [vmem:[#allocation25 + $0x8] sm:$0xf]
        %v2231 = vld [vmem:[#allocation25 + $0xc] sm:$0xf]
        %v2232 = vld [vmem:[#allocation25 + $0x10] sm:$0xf]
        %v2233 = vld [vmem:[#allocation25 + $0x14] sm:$0xf]
        %v2234 = vld [vmem:[#allocation25 + $0x18] sm:$0xf]
        %v2235 = vld [vmem:[#allocation25 + $0x1c] sm:$0xf]
        %v2244 = vunpack.c.l.b16 %v2228
        %v2245 = vunpack.c.l.b16 %v2229
        %v2246 = vunpack.c.l.b16 %v2230
        %v2247 = vunpack.c.l.b16 %v2231
        %v2248 = vunpack.c.l.b16 %v2232
        %v2249 = vunpack.c.l.b16 %v2233
        %v2250 = vunpack.c.l.b16 %v2234
        %v2251 = vunpack.c.l.b16 %v2235
        %v2252 = vpack.c.b16 %v2245, %v2244
        %v2253 = vpack.c.b16 %v2247, %v2246
        %v2254 = vpack.c.b16 %v2249, %v2248
        %v2255 = vpack.c.b16 %v2251, %v2250
        %v2261 = vsel %vm1573, %v2227, 0
        %2263 = vmatprep.subr.bf16.mxu0 0
        %2264 = vmatpush1.bf16.msra.mxu0 0
        %2265 = vmatprep.subr.bf16.mxu0 0
        %2266 = vmatpush1.bf16.msra.mxu0 0
        %2267 = vmatprep.subr.bf16.mxu0 0
        %2268 = vmatpush1.bf16.msra.mxu0 0
        %2269 = vmatprep.subr.bf16.mxu0 0
        %2270 = vmatpush1.bf16.msra.mxu0 0
        %2271 = vmatprep.subr.bf16.mxu0 0
        %2272 = vmatpush1.bf16.msra.mxu0 %v2255
        %2273 = vmatprep.subr.bf16.mxu0 0
        %2274 = vmatpush1.bf16.msra.mxu0 %v2254
        %2275 = vmatprep.subr.bf16.mxu0 0
        %2276 = vmatpush1.bf16.msra.mxu0 %v2253
        %2277 = vmatprep.subr.bf16.mxu0 0
        %2278 = vmatpush1.bf16.msra.mxu0 %v2252
        %2279 = vmatprep.subr.bf16.mxu0 0
        %2280 = vmatpush2.bf16.msra.mxu0 0
        %2281 = vmatprep.subr.bf16.mxu0 0
        %2282 = vmatpush2.bf16.msra.mxu0 0
        %2283 = vmatprep.subr.bf16.mxu0 0
        %2284 = vmatpush2.bf16.msra.mxu0 0
        %2285 = vmatprep.subr.bf16.mxu0 0
        %2286 = vmatpush2.bf16.msra.mxu0 0
        %2287 = vmatprep.subr.bf16.mxu0 0
        %2288 = vmatpush2.bf16.msra.mxu0 0
        %2289 = vmatprep.subr.bf16.mxu0 0
        %2290 = vmatpush2.bf16.msra.mxu0 0
        %2291 = vmatprep.subr.bf16.mxu0 0
        %2292 = vmatpush2.bf16.msra.mxu0 0
        %2293 = vmatprep.subr.bf16.mxu0 0
        %2294 = vmatpush2.bf16.msra.mxu0 0
        %2295 = vmatprep.mubr.bf16.mxu0 0
        %2296 = vmatmul.mubr.bf16.gmra.mxu0 %v2261
        %v2297 = vpop.f32.mrf.mxu0
        %v2298 = vadd.f32 0.0, %v2297
        %v2299 = vpop.f32.mrf.mxu0
        %v2300 = vpop.f32.mrf.mxu0
        %v2301 = vpop.f32.mrf.mxu0
        %2302 = vdwg.mxu0
        %v2303 = vadd.f32 %v2220, %v2298
        %v2304 = vld [vmem:[#allocation26] sm:$0x1]
        %v2306 = vlaneseq
        %v2307 = vshrl.u32 %v2306, 7
        %v2308 = vsub.s32 0, %v2307
        %v2309 = vrot.slane %v2304, %v2308
        %v2311 = vadd.f32 %v2303, %v2309
        %v2312 = vmax.f32 %v2311, 0.0
        %v2313 = vpack.c.bf16 %v2312, %v2312
        %v2314 = vld [vmem:[#allocation32] sm:$0xf]
        %v2315 = vld [vmem:[#allocation32 + $0x4] sm:$0xf]
        %v2316 = vld [vmem:[#allocation32 + $0x8] sm:$0xf]
        %v2317 = vld [vmem:[#allocation32 + $0xc] sm:$0xf]
        %v2318 = vld [vmem:[#allocation32 + $0x10] sm:$0xf]
        %v2319 = vld [vmem:[#allocation32 + $0x14] sm:$0xf]
        %v2320 = vld [vmem:[#allocation32 + $0x18] sm:$0xf]
        %v2321 = vld [vmem:[#allocation32 + $0x1c] sm:$0xf]
        %v2322 = vld [vmem:[#allocation34] sm:$0x1]
        %v2324 = vlaneseq
        %v2325 = vshrl.u32 %v2324, 7
        %v2326 = vsub.s32 0, %v2325
        %v2327 = vrot.slane %v2322, %v2326
        %v2337 = vunpack.c.l.b16 %v2314
        %v2338 = vunpack.c.l.b16 %v2315
        %v2339 = vunpack.c.l.b16 %v2316
        %v2340 = vunpack.c.l.b16 %v2317
        %v2341 = vunpack.c.l.b16 %v2318
        %v2342 = vunpack.c.l.b16 %v2319
        %v2343 = vunpack.c.l.b16 %v2320
        %v2344 = vunpack.c.l.b16 %v2321
        %v2345 = vpack.c.b16 %v2338, %v2337
        %v2346 = vpack.c.b16 %v2340, %v2339
        %v2347 = vpack.c.b16 %v2342, %v2341
        %v2348 = vpack.c.b16 %v2344, %v2343
        %v2354 = vsel %vm1573, %v2313, 0
        %2356 = vmatprep.subr.bf16.mxu0 0
        %2357 = vmatpush1.bf16.msra.mxu0 0
        %2358 = vmatprep.subr.bf16.mxu0 0
        %2359 = vmatpush1.bf16.msra.mxu0 0
        %2360 = vmatprep.subr.bf16.mxu0 0
        %2361 = vmatpush1.bf16.msra.mxu0 0
        %2362 = vmatprep.subr.bf16.mxu0 0
        %2363 = vmatpush1.bf16.msra.mxu0 0
        %2364 = vmatprep.subr.bf16.mxu0 0
        %2365 = vmatpush1.bf16.msra.mxu0 %v2348
        %2366 = vmatprep.subr.bf16.mxu0 0
        %2367 = vmatpush1.bf16.msra.mxu0 %v2347
        %2368 = vmatprep.subr.bf16.mxu0 0
        %2369 = vmatpush1.bf16.msra.mxu0 %v2346
        %2370 = vmatprep.subr.bf16.mxu0 0
        %2371 = vmatpush1.bf16.msra.mxu0 %v2345
        %2372 = vmatprep.subr.bf16.mxu0 0
        %2373 = vmatpush2.bf16.msra.mxu0 0
        %2374 = vmatprep.subr.bf16.mxu0 0
        %2375 = vmatpush2.bf16.msra.mxu0 0
        %2376 = vmatprep.subr.bf16.mxu0 0
        %2377 = vmatpush2.bf16.msra.mxu0 0
        %2378 = vmatprep.subr.bf16.mxu0 0
        %2379 = vmatpush2.bf16.msra.mxu0 0
        %2380 = vmatprep.subr.bf16.mxu0 0
        %2381 = vmatpush2.bf16.msra.mxu0 0
        %2382 = vmatprep.subr.bf16.mxu0 0
        %2383 = vmatpush2.bf16.msra.mxu0 0
        %2384 = vmatprep.subr.bf16.mxu0 0
        %2385 = vmatpush2.bf16.msra.mxu0 0
        %2386 = vmatprep.subr.bf16.mxu0 0
        %2387 = vmatpush2.bf16.msra.mxu0 0
        %2388 = vmatprep.mubr.bf16.mxu0 0
        %2389 = vmatmul.mubr.bf16.gmra.mxu0 %v2354
        %v2390 = vpop.f32.mrf.mxu0
        %v2391 = vadd.f32 %v2327, %v2390
        %v2392 = vpop.f32.mrf.mxu0
        %v2393 = vpop.f32.mrf.mxu0
        %v2394 = vpop.f32.mrf.mxu0
        %2395 = vdwg.mxu0
        %2396 = vst.msk [vmem:[#allocation7 + $0x7] sm:$0x1] %vm1571, 0.0
        %2397 = vst.msk [vmem:[#allocation7 + $0xa] sm:$0x1] %vm1571, 0.0
        %vm2398 = vcmask 517120
        %2399 = vst.msk [vmem:[#allocation7 + $0x8] sm:$0x3] %vm2398, %v2391
        %v2400 = vld [vmem:[#allocation7 + $0x7] sm:$0x3]
        %v2401 = vpack.c.bf16 %v2400, %v2400
        %v2402 = vld [vmem:[#allocation47] sm:$0xf]
        %v2403 = vld [vmem:[#allocation47 + $0x4] sm:$0xf]
        %v2404 = vld [vmem:[#allocation47 + $0x8] sm:$0xf]
        %v2405 = vld [vmem:[#allocation47 + $0xc] sm:$0xf]
        %v2406 = vld [vmem:[#allocation47 + $0x10] sm:$0xf]
        %v2407 = vld [vmem:[#allocation47 + $0x14] sm:$0xf]
        %v2408 = vld [vmem:[#allocation47 + $0x18] sm:$0xf]
        %v2409 = vld [vmem:[#allocation47 + $0x1c] sm:$0xf]
        %v2410 = vld [vmem:[#allocation7 + $0x8] sm:$0x3]
        %v2411 = vpack.c.bf16 %v2410, %v2410
        %v2412 = vld [vmem:[#allocation49] sm:$0xf]
        %v2413 = vld [vmem:[#allocation49 + $0x4] sm:$0xf]
        %v2414 = vld [vmem:[#allocation49 + $0x8] sm:$0xf]
        %v2415 = vld [vmem:[#allocation49 + $0xc] sm:$0xf]
        %v2416 = vld [vmem:[#allocation49 + $0x10] sm:$0xf]
        %v2417 = vld [vmem:[#allocation49 + $0x14] sm:$0xf]
        %v2418 = vld [vmem:[#allocation49 + $0x18] sm:$0xf]
        %v2419 = vld [vmem:[#allocation49 + $0x1c] sm:$0xf]
        %v2428 = vunpack.c.l.b16 %v2412
        %v2429 = vunpack.c.l.b16 %v2413
        %v2430 = vunpack.c.l.b16 %v2414
        %v2431 = vunpack.c.l.b16 %v2415
        %v2432 = vunpack.c.l.b16 %v2416
        %v2433 = vunpack.c.l.b16 %v2417
        %v2434 = vunpack.c.l.b16 %v2418
        %v2435 = vunpack.c.l.b16 %v2419
        %v2436 = vpack.c.b16 %v2429, %v2428
        %v2437 = vpack.c.b16 %v2431, %v2430
        %v2438 = vpack.c.b16 %v2433, %v2432
        %v2439 = vpack.c.b16 %v2435, %v2434
        %v2445 = vsel %vm1573, %v2411, 0
        %2447 = vmatprep.subr.bf16.mxu0 0
        %2448 = vmatpush1.bf16.msra.mxu0 0
        %2449 = vmatprep.subr.bf16.mxu0 0
        %2450 = vmatpush1.bf16.msra.mxu0 0
        %2451 = vmatprep.subr.bf16.mxu0 0
        %2452 = vmatpush1.bf16.msra.mxu0 0
        %2453 = vmatprep.subr.bf16.mxu0 0
        %2454 = vmatpush1.bf16.msra.mxu0 0
        %2455 = vmatprep.subr.bf16.mxu0 0
        %2456 = vmatpush1.bf16.msra.mxu0 %v2439
        %2457 = vmatprep.subr.bf16.mxu0 0
        %2458 = vmatpush1.bf16.msra.mxu0 %v2438
        %2459 = vmatprep.subr.bf16.mxu0 0
        %2460 = vmatpush1.bf16.msra.mxu0 %v2437
        %2461 = vmatprep.subr.bf16.mxu0 0
        %2462 = vmatpush1.bf16.msra.mxu0 %v2436
        %2463 = vmatprep.subr.bf16.mxu0 0
        %2464 = vmatpush2.bf16.msra.mxu0 0
        %2465 = vmatprep.subr.bf16.mxu0 0
        %2466 = vmatpush2.bf16.msra.mxu0 0
        %2467 = vmatprep.subr.bf16.mxu0 0
        %2468 = vmatpush2.bf16.msra.mxu0 0
        %2469 = vmatprep.subr.bf16.mxu0 0
        %2470 = vmatpush2.bf16.msra.mxu0 0
        %2471 = vmatprep.subr.bf16.mxu0 0
        %2472 = vmatpush2.bf16.msra.mxu0 0
        %2473 = vmatprep.subr.bf16.mxu0 0
        %2474 = vmatpush2.bf16.msra.mxu0 0
        %2475 = vmatprep.subr.bf16.mxu0 0
        %2476 = vmatpush2.bf16.msra.mxu0 0
        %2477 = vmatprep.subr.bf16.mxu0 0
        %2478 = vmatpush2.bf16.msra.mxu0 0
        %2479 = vmatprep.mubr.bf16.mxu0 0
        %2480 = vmatmul.mubr.bf16.gmra.mxu0 %v2445
        %v2481 = vpop.f32.mrf.mxu0
        %v2482 = vadd.f32 0.0, %v2481
        %v2483 = vpop.f32.mrf.mxu0
        %v2484 = vpop.f32.mrf.mxu0
        %v2485 = vpop.f32.mrf.mxu0
        %2486 = vdwg.mxu0
        %v2495 = vunpack.c.l.b16 %v2402
        %v2496 = vunpack.c.l.b16 %v2403
        %v2497 = vunpack.c.l.b16 %v2404
        %v2498 = vunpack.c.l.b16 %v2405
        %v2499 = vunpack.c.l.b16 %v2406
        %v2500 = vunpack.c.l.b16 %v2407
        %v2501 = vunpack.c.l.b16 %v2408
        %v2502 = vunpack.c.l.b16 %v2409
        %v2503 = vpack.c.b16 %v2496, %v2495
        %v2504 = vpack.c.b16 %v2498, %v2497
        %v2505 = vpack.c.b16 %v2500, %v2499
        %v2506 = vpack.c.b16 %v2502, %v2501
        %v2512 = vsel %vm1573, %v2401, 0
        %2514 = vmatprep.subr.bf16.mxu0 0
        %2515 = vmatpush1.bf16.msra.mxu0 0
        %2516 = vmatprep.subr.bf16.mxu0 0
        %2517 = vmatpush1.bf16.msra.mxu0 0
        %2518 = vmatprep.subr.bf16.mxu0 0
        %2519 = vmatpush1.bf16.msra.mxu0 0
        %2520 = vmatprep.subr.bf16.mxu0 0
        %2521 = vmatpush1.bf16.msra.mxu0 0
        %2522 = vmatprep.subr.bf16.mxu0 0
        %2523 = vmatpush1.bf16.msra.mxu0 %v2506
        %2524 = vmatprep.subr.bf16.mxu0 0
        %2525 = vmatpush1.bf16.msra.mxu0 %v2505
        %2526 = vmatprep.subr.bf16.mxu0 0
        %2527 = vmatpush1.bf16.msra.mxu0 %v2504
        %2528 = vmatprep.subr.bf16.mxu0 0
        %2529 = vmatpush1.bf16.msra.mxu0 %v2503
        %2530 = vmatprep.subr.bf16.mxu0 0
        %2531 = vmatpush2.bf16.msra.mxu0 0
        %2532 = vmatprep.subr.bf16.mxu0 0
        %2533 = vmatpush2.bf16.msra.mxu0 0
        %2534 = vmatprep.subr.bf16.mxu0 0
        %2535 = vmatpush2.bf16.msra.mxu0 0
        %2536 = vmatprep.subr.bf16.mxu0 0
        %2537 = vmatpush2.bf16.msra.mxu0 0
        %2538 = vmatprep.subr.bf16.mxu0 0
        %2539 = vmatpush2.bf16.msra.mxu0 0
        %2540 = vmatprep.subr.bf16.mxu0 0
        %2541 = vmatpush2.bf16.msra.mxu0 0
        %2542 = vmatprep.subr.bf16.mxu0 0
        %2543 = vmatpush2.bf16.msra.mxu0 0
        %2544 = vmatprep.subr.bf16.mxu0 0
        %2545 = vmatpush2.bf16.msra.mxu0 0
        %2546 = vmatprep.mubr.bf16.mxu0 0
        %2547 = vmatmul.mubr.bf16.gmra.mxu0 %v2512
        %v2548 = vpop.f32.mrf.mxu0
        %v2549 = vadd.f32 %v2482, %v2548
        %v2550 = vpop.f32.mrf.mxu0
        %v2551 = vpop.f32.mrf.mxu0
        %v2552 = vpop.f32.mrf.mxu0
        %2553 = vdwg.mxu0
        %v2554 = vld [vmem:[#allocation7 + $0x9] sm:$0x3]
        %v2555 = vpack.c.bf16 %v2554, %v2554
        %v2556 = vld [vmem:[#allocation50] sm:$0xf]
        %v2557 = vld [vmem:[#allocation50 + $0x4] sm:$0xf]
        %v2558 = vld [vmem:[#allocation50 + $0x8] sm:$0xf]
        %v2559 = vld [vmem:[#allocation50 + $0xc] sm:$0xf]
        %v2560 = vld [vmem:[#allocation50 + $0x10] sm:$0xf]
        %v2561 = vld [vmem:[#allocation50 + $0x14] sm:$0xf]
        %v2562 = vld [vmem:[#allocation50 + $0x18] sm:$0xf]
        %v2563 = vld [vmem:[#allocation50 + $0x1c] sm:$0xf]
        %v2572 = vunpack.c.l.b16 %v2556
        %v2573 = vunpack.c.l.b16 %v2557
        %v2574 = vunpack.c.l.b16 %v2558
        %v2575 = vunpack.c.l.b16 %v2559
        %v2576 = vunpack.c.l.b16 %v2560
        %v2577 = vunpack.c.l.b16 %v2561
        %v2578 = vunpack.c.l.b16 %v2562
        %v2579 = vunpack.c.l.b16 %v2563
        %v2580 = vpack.c.b16 %v2573, %v2572
        %v2581 = vpack.c.b16 %v2575, %v2574
        %v2582 = vpack.c.b16 %v2577, %v2576
        %v2583 = vpack.c.b16 %v2579, %v2578
        %v2589 = vsel %vm1573, %v2555, 0
        %2591 = vmatprep.subr.bf16.mxu0 0
        %2592 = vmatpush1.bf16.msra.mxu0 0
        %2593 = vmatprep.subr.bf16.mxu0 0
        %2594 = vmatpush1.bf16.msra.mxu0 0
        %2595 = vmatprep.subr.bf16.mxu0 0
        %2596 = vmatpush1.bf16.msra.mxu0 0
        %2597 = vmatprep.subr.bf16.mxu0 0
        %2598 = vmatpush1.bf16.msra.mxu0 0
        %2599 = vmatprep.subr.bf16.mxu0 0
        %2600 = vmatpush1.bf16.msra.mxu0 %v2583
        %2601 = vmatprep.subr.bf16.mxu0 0
        %2602 = vmatpush1.bf16.msra.mxu0 %v2582
        %2603 = vmatprep.subr.bf16.mxu0 0
        %2604 = vmatpush1.bf16.msra.mxu0 %v2581
        %2605 = vmatprep.subr.bf16.mxu0 0
        %2606 = vmatpush1.bf16.msra.mxu0 %v2580
        %2607 = vmatprep.subr.bf16.mxu0 0
        %2608 = vmatpush2.bf16.msra.mxu0 0
        %2609 = vmatprep.subr.bf16.mxu0 0
        %2610 = vmatpush2.bf16.msra.mxu0 0
        %2611 = vmatprep.subr.bf16.mxu0 0
        %2612 = vmatpush2.bf16.msra.mxu0 0
        %2613 = vmatprep.subr.bf16.mxu0 0
        %2614 = vmatpush2.bf16.msra.mxu0 0
        %2615 = vmatprep.subr.bf16.mxu0 0
        %2616 = vmatpush2.bf16.msra.mxu0 0
        %2617 = vmatprep.subr.bf16.mxu0 0
        %2618 = vmatpush2.bf16.msra.mxu0 0
        %2619 = vmatprep.subr.bf16.mxu0 0
        %2620 = vmatpush2.bf16.msra.mxu0 0
        %2621 = vmatprep.subr.bf16.mxu0 0
        %2622 = vmatpush2.bf16.msra.mxu0 0
        %2623 = vmatprep.mubr.bf16.mxu0 0
        %2624 = vmatmul.mubr.bf16.gmra.mxu0 %v2589
        %v2625 = vpop.f32.mrf.mxu0
        %v2626 = vadd.f32 0.0, %v2625
        %v2627 = vpop.f32.mrf.mxu0
        %v2628 = vpop.f32.mrf.mxu0
        %v2629 = vpop.f32.mrf.mxu0
        %2630 = vdwg.mxu0
        %v2631 = vadd.f32 %v2549, %v2626
        %v2632 = vld [vmem:[#allocation52] sm:$0x1]
        %v2634 = vlaneseq
        %v2635 = vshrl.u32 %v2634, 7
        %v2636 = vsub.s32 0, %v2635
        %v2637 = vrot.slane %v2632, %v2636
        %v2639 = vadd.f32 %v2631, %v2637
        %v2640 = vpack.c.bf16 %v2065, %v2065
        %v2641 = vld [vmem:[%s31] sm:$0xf]
        %v2642 = vld [vmem:[%s31 + $0x4] sm:$0xf]
        %v2643 = vld [vmem:[%s31 + $0x8] sm:$0xf]
        %v2644 = vld [vmem:[%s31 + $0xc] sm:$0xf]
        %v2645 = vld [vmem:[%s31 + $0x10] sm:$0xf]
        %v2646 = vld [vmem:[%s31 + $0x14] sm:$0xf]
        %v2647 = vld [vmem:[%s31 + $0x18] sm:$0xf]
        %v2648 = vld [vmem:[%s31 + $0x1c] sm:$0xf]
        %v2649 = vld [vmem:[#allocation31] sm:$0x1]
        %v2651 = vlaneseq
        %v2652 = vshrl.u32 %v2651, 7
        %v2653 = vsub.s32 0, %v2652
        %v2654 = vrot.slane %v2649, %v2653
        %v2664 = vunpack.c.l.b16 %v2641
        %v2665 = vunpack.c.l.b16 %v2642
        %v2666 = vunpack.c.l.b16 %v2643
        %v2667 = vunpack.c.l.b16 %v2644
        %v2668 = vunpack.c.l.b16 %v2645
        %v2669 = vunpack.c.l.b16 %v2646
        %v2670 = vunpack.c.l.b16 %v2647
        %v2671 = vunpack.c.l.b16 %v2648
        %v2672 = vpack.c.b16 %v2665, %v2664
        %v2673 = vpack.c.b16 %v2667, %v2666
        %v2674 = vpack.c.b16 %v2669, %v2668
        %v2675 = vpack.c.b16 %v2671, %v2670
        %v2681 = vsel %vm1573, %v2640, 0
        %2683 = vmatprep.subr.bf16.mxu0 0
        %2684 = vmatpush1.bf16.msra.mxu0 0
        %2685 = vmatprep.subr.bf16.mxu0 0
        %2686 = vmatpush1.bf16.msra.mxu0 0
        %2687 = vmatprep.subr.bf16.mxu0 0
        %2688 = vmatpush1.bf16.msra.mxu0 0
        %2689 = vmatprep.subr.bf16.mxu0 0
        %2690 = vmatpush1.bf16.msra.mxu0 0
        %2691 = vmatprep.subr.bf16.mxu0 0
        %2692 = vmatpush1.bf16.msra.mxu0 %v2675
        %2693 = vmatprep.subr.bf16.mxu0 0
        %2694 = vmatpush1.bf16.msra.mxu0 %v2674
        %2695 = vmatprep.subr.bf16.mxu0 0
        %2696 = vmatpush1.bf16.msra.mxu0 %v2673
        %2697 = vmatprep.subr.bf16.mxu0 0
        %2698 = vmatpush1.bf16.msra.mxu0 %v2672
        %2699 = vmatprep.subr.bf16.mxu0 0
        %2700 = vmatpush2.bf16.msra.mxu0 0
        %2701 = vmatprep.subr.bf16.mxu0 0
        %2702 = vmatpush2.bf16.msra.mxu0 0
        %2703 = vmatprep.subr.bf16.mxu0 0
        %2704 = vmatpush2.bf16.msra.mxu0 0
        %2705 = vmatprep.subr.bf16.mxu0 0
        %2706 = vmatpush2.bf16.msra.mxu0 0
        %2707 = vmatprep.subr.bf16.mxu0 0
        %2708 = vmatpush2.bf16.msra.mxu0 0
        %2709 = vmatprep.subr.bf16.mxu0 0
        %2710 = vmatpush2.bf16.msra.mxu0 0
        %2711 = vmatprep.subr.bf16.mxu0 0
        %2712 = vmatpush2.bf16.msra.mxu0 0
        %2713 = vmatprep.subr.bf16.mxu0 0
        %2714 = vmatpush2.bf16.msra.mxu0 0
        %2715 = vmatprep.mubr.bf16.mxu0 0
        %2716 = vmatmul.mubr.bf16.gmra.mxu0 %v2681
        %v2717 = vpop.f32.mrf.mxu0
        %v2718 = vadd.f32 %v2654, %v2717
        %v2719 = vpop.f32.mrf.mxu0
        %v2720 = vpop.f32.mrf.mxu0
        %v2721 = vpop.f32.mrf.mxu0
        %2722 = vdwg.mxu0
        %v2723 = vpack.c.bf16 %v2391, %v2391
        %v2724 = vld [vmem:[%s69] sm:$0xf]
        %v2725 = vld [vmem:[%s69 + $0x4] sm:$0xf]
        %v2726 = vld [vmem:[%s69 + $0x8] sm:$0xf]
        %v2727 = vld [vmem:[%s69 + $0xc] sm:$0xf]
        %v2728 = vld [vmem:[%s69 + $0x10] sm:$0xf]
        %v2729 = vld [vmem:[%s69 + $0x14] sm:$0xf]
        %v2730 = vld [vmem:[%s69 + $0x18] sm:$0xf]
        %v2731 = vld [vmem:[%s69 + $0x1c] sm:$0xf]
        %v2740 = vunpack.c.l.b16 %v2724
        %v2741 = vunpack.c.l.b16 %v2725
        %v2742 = vunpack.c.l.b16 %v2726
        %v2743 = vunpack.c.l.b16 %v2727
        %v2744 = vunpack.c.l.b16 %v2728
        %v2745 = vunpack.c.l.b16 %v2729
        %v2746 = vunpack.c.l.b16 %v2730
        %v2747 = vunpack.c.l.b16 %v2731
        %v2748 = vpack.c.b16 %v2741, %v2740
        %v2749 = vpack.c.b16 %v2743, %v2742
        %v2750 = vpack.c.b16 %v2745, %v2744
        %v2751 = vpack.c.b16 %v2747, %v2746
        %v2757 = vsel %vm1573, %v2723, 0
        %2759 = vmatprep.subr.bf16.mxu0 0
        %2760 = vmatpush1.bf16.msra.mxu0 0
        %2761 = vmatprep.subr.bf16.mxu0 0
        %2762 = vmatpush1.bf16.msra.mxu0 0
        %2763 = vmatprep.subr.bf16.mxu0 0
        %2764 = vmatpush1.bf16.msra.mxu0 0
        %2765 = vmatprep.subr.bf16.mxu0 0
        %2766 = vmatpush1.bf16.msra.mxu0 0
        %2767 = vmatprep.subr.bf16.mxu0 0
        %2768 = vmatpush1.bf16.msra.mxu0 %v2751
        %2769 = vmatprep.subr.bf16.mxu0 0
        %2770 = vmatpush1.bf16.msra.mxu0 %v2750
        %2771 = vmatprep.subr.bf16.mxu0 0
        %2772 = vmatpush1.bf16.msra.mxu0 %v2749
        %2773 = vmatprep.subr.bf16.mxu0 0
        %2774 = vmatpush1.bf16.msra.mxu0 %v2748
        %2775 = vmatprep.subr.bf16.mxu0 0
        %2776 = vmatpush2.bf16.msra.mxu0 0
        %2777 = vmatprep.subr.bf16.mxu0 0
        %2778 = vmatpush2.bf16.msra.mxu0 0
        %2779 = vmatprep.subr.bf16.mxu0 0
        %2780 = vmatpush2.bf16.msra.mxu0 0
        %2781 = vmatprep.subr.bf16.mxu0 0
        %2782 = vmatpush2.bf16.msra.mxu0 0
        %2783 = vmatprep.subr.bf16.mxu0 0
        %2784 = vmatpush2.bf16.msra.mxu0 0
        %2785 = vmatprep.subr.bf16.mxu0 0
        %2786 = vmatpush2.bf16.msra.mxu0 0
        %2787 = vmatprep.subr.bf16.mxu0 0
        %2788 = vmatpush2.bf16.msra.mxu0 0
        %2789 = vmatprep.subr.bf16.mxu0 0
        %2790 = vmatpush2.bf16.msra.mxu0 0
        %2791 = vmatprep.mubr.bf16.mxu0 0
        %2792 = vmatmul.mubr.bf16.gmra.mxu0 %v2757
        %v2793 = vpop.f32.mrf.mxu0
        %v2794 = vadd.f32 0.0, %v2793
        %v2795 = vpop.f32.mrf.mxu0
        %v2796 = vpop.f32.mrf.mxu0
        %v2797 = vpop.f32.mrf.mxu0
        %2798 = vdwg.mxu0
        %v2799 = vld [vmem:[%s67] sm:$0x3]
        %v2800 = vpack.c.bf16 %v2794, %v2794
        %vm2801 = vcmask 15360
        %v2803 = vsel %vm2801, %v2799, 0
        %vm2805 = vcmask 1040384
        %v2807 = vsel %vm2805, %v2800, 0
        %2809 = vmatprep.subr.bf16.mxu0 0
        %2810 = vmatpush1.bf16.msra.mxu0 0
        %2811 = vmatprep.subr.bf16.mxu0 0
        %2812 = vmatpush1.bf16.msra.mxu0 0
        %2813 = vmatprep.subr.bf16.mxu0 0
        %2814 = vmatpush1.bf16.msra.mxu0 0
        %2815 = vmatprep.subr.bf16.mxu0 0
        %2816 = vmatpush1.bf16.msra.mxu0 0
        %2817 = vmatprep.subr.bf16.mxu0 0
        %2818 = vmatpush1.bf16.msra.mxu0 0
        %2819 = vmatprep.subr.bf16.mxu0 0
        %2820 = vmatpush1.bf16.msra.mxu0 0
        %2821 = vmatprep.subr.bf16.mxu0 0
        %2822 = vmatpush1.bf16.msra.mxu0 0
        %2823 = vmatprep.subr.bf16.mxu0 0
        %2824 = vmatpush1.bf16.msra.mxu0 %v2807
        %2825 = vmatprep.subr.bf16.mxu0 0
        %2826 = vmatpush2.bf16.msra.mxu0 0
        %2827 = vmatprep.subr.bf16.mxu0 0
        %2828 = vmatpush2.bf16.msra.mxu0 0
        %2829 = vmatprep.subr.bf16.mxu0 0
        %2830 = vmatpush2.bf16.msra.mxu0 0
        %2831 = vmatprep.subr.bf16.mxu0 0
        %2832 = vmatpush2.bf16.msra.mxu0 0
        %2833 = vmatprep.subr.bf16.mxu0 0
        %2834 = vmatpush2.bf16.msra.mxu0 0
        %2835 = vmatprep.subr.bf16.mxu0 0
        %2836 = vmatpush2.bf16.msra.mxu0 0
        %2837 = vmatprep.subr.bf16.mxu0 0
        %2838 = vmatpush2.bf16.msra.mxu0 0
        %2839 = vmatprep.subr.bf16.mxu0 0
        %2840 = vmatpush2.bf16.msra.mxu0 0
        %2841 = vmatprep.mubr.bf16.mxu0 0
        %2842 = vmatmul.mubr.bf16.gmra.mxu0 %v2803
        %v2843 = vpop.f32.mrf.mxu0
        %v2844 = vadd.f32 0.0, %v2843
        %v2845 = vpop.f32.mrf.mxu0
        %v2846 = vpop.f32.mrf.mxu0
        %v2847 = vpop.f32.mrf.mxu0
        %2848 = vdwg.mxu0
        %v2849 = vadd.f32 %v2718, %v2844
        %2850 = vst [vmem:[#allocation6 + $0x7] sm:$0x1] 0.0
        %2851 = vst [vmem:[#allocation6 + $0xc] sm:$0x1] 0.0
        %2852 = vst [vmem:[#allocation6 + $0x8] sm:$0xf] %v2849
        %v2853 = vld [vmem:[#allocation6 + $0x7] sm:$0xf]
        %v2854 = vpack.c.bf16 %v2853, %v2853
        %v2855 = vld [vmem:[#allocation41] sm:$0xf]
        %v2856 = vld [vmem:[#allocation41 + $0x4] sm:$0xf]
        %v2857 = vld [vmem:[#allocation41 + $0x8] sm:$0xf]
        %v2858 = vld [vmem:[#allocation41 + $0xc] sm:$0xf]
        %v2859 = vld [vmem:[#allocation41 + $0x10] sm:$0xf]
        %v2860 = vld [vmem:[#allocation41 + $0x14] sm:$0xf]
        %v2861 = vld [vmem:[#allocation41 + $0x18] sm:$0xf]
        %v2862 = vld [vmem:[#allocation41 + $0x1c] sm:$0xf]
        %v2863 = vld [vmem:[#allocation41 + $0x20] sm:$0xf]
        %v2864 = vld [vmem:[#allocation41 + $0x24] sm:$0xf]
        %v2865 = vld [vmem:[#allocation41 + $0x28] sm:$0xf]
        %v2866 = vld [vmem:[#allocation41 + $0x2c] sm:$0xf]
        %v2867 = vld [vmem:[#allocation41 + $0x30] sm:$0xf]
        %v2868 = vld [vmem:[#allocation41 + $0x34] sm:$0xf]
        %v2869 = vld [vmem:[#allocation41 + $0x38] sm:$0xf]
        %v2870 = vld [vmem:[#allocation41 + $0x3c] sm:$0xf]
        %v2871 = vld [vmem:[#allocation6 + $0x8] sm:$0xf]
        %v2872 = vpack.c.bf16 %v2871, %v2871
        %v2873 = vld [vmem:[#allocation43] sm:$0xf]
        %v2874 = vld [vmem:[#allocation43 + $0x4] sm:$0xf]
        %v2875 = vld [vmem:[#allocation43 + $0x8] sm:$0xf]
        %v2876 = vld [vmem:[#allocation43 + $0xc] sm:$0xf]
        %v2877 = vld [vmem:[#allocation43 + $0x10] sm:$0xf]
        %v2878 = vld [vmem:[#allocation43 + $0x14] sm:$0xf]
        %v2879 = vld [vmem:[#allocation43 + $0x18] sm:$0xf]
        %v2880 = vld [vmem:[#allocation43 + $0x1c] sm:$0xf]
        %v2881 = vld [vmem:[#allocation43 + $0x20] sm:$0xf]
        %v2882 = vld [vmem:[#allocation43 + $0x24] sm:$0xf]
        %v2883 = vld [vmem:[#allocation43 + $0x28] sm:$0xf]
        %v2884 = vld [vmem:[#allocation43 + $0x2c] sm:$0xf]
        %v2885 = vld [vmem:[#allocation43 + $0x30] sm:$0xf]
        %v2886 = vld [vmem:[#allocation43 + $0x34] sm:$0xf]
        %v2887 = vld [vmem:[#allocation43 + $0x38] sm:$0xf]
        %v2888 = vld [vmem:[#allocation43 + $0x3c] sm:$0xf]
        %v2905 = vunpack.c.l.b16 %v2873
        %v2906 = vunpack.c.l.b16 %v2874
        %v2907 = vunpack.c.l.b16 %v2875
        %v2908 = vunpack.c.l.b16 %v2876
        %v2909 = vunpack.c.l.b16 %v2877
        %v2910 = vunpack.c.l.b16 %v2878
        %v2911 = vunpack.c.l.b16 %v2879
        %v2912 = vunpack.c.l.b16 %v2880
        %v2913 = vunpack.c.l.b16 %v2881
        %v2914 = vunpack.c.l.b16 %v2882
        %v2915 = vunpack.c.l.b16 %v2883
        %v2916 = vunpack.c.l.b16 %v2884
        %v2917 = vunpack.c.l.b16 %v2885
        %v2918 = vunpack.c.l.b16 %v2886
        %v2919 = vunpack.c.l.b16 %v2887
        %v2920 = vunpack.c.l.b16 %v2888
        %v2921 = vpack.c.b16 %v2906, %v2905
        %v2922 = vpack.c.b16 %v2908, %v2907
        %v2923 = vpack.c.b16 %v2910, %v2909
        %v2924 = vpack.c.b16 %v2912, %v2911
        %v2925 = vpack.c.b16 %v2914, %v2913
        %v2926 = vpack.c.b16 %v2916, %v2915
        %v2927 = vpack.c.b16 %v2918, %v2917
        %v2928 = vpack.c.b16 %v2920, %v2919
        %2937 = vmatprep.subr.bf16.mxu0 0
        %2938 = vmatpush1.bf16.msra.mxu0 %v2928
        %2939 = vmatprep.subr.bf16.mxu0 0
        %2940 = vmatpush1.bf16.msra.mxu0 %v2927
        %2941 = vmatprep.subr.bf16.mxu0 0
        %2942 = vmatpush1.bf16.msra.mxu0 %v2926
        %2943 = vmatprep.subr.bf16.mxu0 0
        %2944 = vmatpush1.bf16.msra.mxu0 %v2925
        %2945 = vmatprep.subr.bf16.mxu0 0
        %2946 = vmatpush1.bf16.msra.mxu0 %v2924
        %2947 = vmatprep.subr.bf16.mxu0 0
        %2948 = vmatpush1.bf16.msra.mxu0 %v2923
        %2949 = vmatprep.subr.bf16.mxu0 0
        %2950 = vmatpush1.bf16.msra.mxu0 %v2922
        %2951 = vmatprep.subr.bf16.mxu0 0
        %2952 = vmatpush1.bf16.msra.mxu0 %v2921
        %2953 = vmatprep.subr.bf16.mxu0 0
        %2954 = vmatpush2.bf16.msra.mxu0 0
        %2955 = vmatprep.subr.bf16.mxu0 0
        %2956 = vmatpush2.bf16.msra.mxu0 0
        %2957 = vmatprep.subr.bf16.mxu0 0
        %2958 = vmatpush2.bf16.msra.mxu0 0
        %2959 = vmatprep.subr.bf16.mxu0 0
        %2960 = vmatpush2.bf16.msra.mxu0 0
        %2961 = vmatprep.subr.bf16.mxu0 0
        %2962 = vmatpush2.bf16.msra.mxu0 0
        %2963 = vmatprep.subr.bf16.mxu0 0
        %2964 = vmatpush2.bf16.msra.mxu0 0
        %2965 = vmatprep.subr.bf16.mxu0 0
        %2966 = vmatpush2.bf16.msra.mxu0 0
        %2967 = vmatprep.subr.bf16.mxu0 0
        %2968 = vmatpush2.bf16.msra.mxu0 0
        %2969 = vmatprep.mubr.bf16.mxu0 0
        %2970 = vmatmul.mubr.bf16.gmra.mxu0 %v2872
        %v2971 = vpop.f32.mrf.mxu0
        %v2972 = vadd.f32 0.0, %v2971
        %v2973 = vpop.f32.mrf.mxu0
        %v2974 = vpop.f32.mrf.mxu0
        %v2975 = vpop.f32.mrf.mxu0
        %2976 = vdwg.mxu0
        %v2993 = vunpack.c.l.b16 %v2855
        %v2994 = vunpack.c.l.b16 %v2856
        %v2995 = vunpack.c.l.b16 %v2857
        %v2996 = vunpack.c.l.b16 %v2858
        %v2997 = vunpack.c.l.b16 %v2859
        %v2998 = vunpack.c.l.b16 %v2860
        %v2999 = vunpack.c.l.b16 %v2861
        %v3000 = vunpack.c.l.b16 %v2862
        %v3001 = vunpack.c.l.b16 %v2863
        %v3002 = vunpack.c.l.b16 %v2864
        %v3003 = vunpack.c.l.b16 %v2865
        %v3004 = vunpack.c.l.b16 %v2866
        %v3005 = vunpack.c.l.b16 %v2867
        %v3006 = vunpack.c.l.b16 %v2868
        %v3007 = vunpack.c.l.b16 %v2869
        %v3008 = vunpack.c.l.b16 %v2870
        %v3009 = vpack.c.b16 %v2994, %v2993
        %v3010 = vpack.c.b16 %v2996, %v2995
        %v3011 = vpack.c.b16 %v2998, %v2997
        %v3012 = vpack.c.b16 %v3000, %v2999
        %v3013 = vpack.c.b16 %v3002, %v3001
        %v3014 = vpack.c.b16 %v3004, %v3003
        %v3015 = vpack.c.b16 %v3006, %v3005
        %v3016 = vpack.c.b16 %v3008, %v3007
        %3025 = vmatprep.subr.bf16.mxu0 0
        %3026 = vmatpush1.bf16.msra.mxu0 %v3016
        %3027 = vmatprep.subr.bf16.mxu0 0
        %3028 = vmatpush1.bf16.msra.mxu0 %v3015
        %3029 = vmatprep.subr.bf16.mxu0 0
        %3030 = vmatpush1.bf16.msra.mxu0 %v3014
        %3031 = vmatprep.subr.bf16.mxu0 0
        %3032 = vmatpush1.bf16.msra.mxu0 %v3013
        %3033 = vmatprep.subr.bf16.mxu0 0
        %3034 = vmatpush1.bf16.msra.mxu0 %v3012
        %3035 = vmatprep.subr.bf16.mxu0 0
        %3036 = vmatpush1.bf16.msra.mxu0 %v3011
        %3037 = vmatprep.subr.bf16.mxu0 0
        %3038 = vmatpush1.bf16.msra.mxu0 %v3010
        %3039 = vmatprep.subr.bf16.mxu0 0
        %3040 = vmatpush1.bf16.msra.mxu0 %v3009
        %3041 = vmatprep.subr.bf16.mxu0 0
        %3042 = vmatpush2.bf16.msra.mxu0 0
        %3043 = vmatprep.subr.bf16.mxu0 0
        %3044 = vmatpush2.bf16.msra.mxu0 0
        %3045 = vmatprep.subr.bf16.mxu0 0
        %3046 = vmatpush2.bf16.msra.mxu0 0
        %3047 = vmatprep.subr.bf16.mxu0 0
        %3048 = vmatpush2.bf16.msra.mxu0 0
        %3049 = vmatprep.subr.bf16.mxu0 0
        %3050 = vmatpush2.bf16.msra.mxu0 0
        %3051 = vmatprep.subr.bf16.mxu0 0
        %3052 = vmatpush2.bf16.msra.mxu0 0
        %3053 = vmatprep.subr.bf16.mxu0 0
        %3054 = vmatpush2.bf16.msra.mxu0 0
        %3055 = vmatprep.subr.bf16.mxu0 0
        %3056 = vmatpush2.bf16.msra.mxu0 0
        %3057 = vmatprep.mubr.bf16.mxu0 0
        %3058 = vmatmul.mubr.bf16.gmra.mxu0 %v2854
        %v3059 = vpop.f32.mrf.mxu0
        %v3060 = vadd.f32 %v2972, %v3059
        %v3061 = vpop.f32.mrf.mxu0
        %v3062 = vpop.f32.mrf.mxu0
        %v3063 = vpop.f32.mrf.mxu0
        %3064 = vdwg.mxu0
        %v3065 = vld [vmem:[#allocation6 + $0x9] sm:$0xf]
        %v3066 = vpack.c.bf16 %v3065, %v3065
        %v3067 = vld [vmem:[#allocation44] sm:$0xf]
        %v3068 = vld [vmem:[#allocation44 + $0x4] sm:$0xf]
        %v3069 = vld [vmem:[#allocation44 + $0x8] sm:$0xf]
        %v3070 = vld [vmem:[#allocation44 + $0xc] sm:$0xf]
        %v3071 = vld [vmem:[#allocation44 + $0x10] sm:$0xf]
        %v3072 = vld [vmem:[#allocation44 + $0x14] sm:$0xf]
        %v3073 = vld [vmem:[#allocation44 + $0x18] sm:$0xf]
        %v3074 = vld [vmem:[#allocation44 + $0x1c] sm:$0xf]
        %v3075 = vld [vmem:[#allocation44 + $0x20] sm:$0xf]
        %v3076 = vld [vmem:[#allocation44 + $0x24] sm:$0xf]
        %v3077 = vld [vmem:[#allocation44 + $0x28] sm:$0xf]
        %v3078 = vld [vmem:[#allocation44 + $0x2c] sm:$0xf]
        %v3079 = vld [vmem:[#allocation44 + $0x30] sm:$0xf]
        %v3080 = vld [vmem:[#allocation44 + $0x34] sm:$0xf]
        %v3081 = vld [vmem:[#allocation44 + $0x38] sm:$0xf]
        %v3082 = vld [vmem:[#allocation44 + $0x3c] sm:$0xf]
        %v3099 = vunpack.c.l.b16 %v3067
        %v3100 = vunpack.c.l.b16 %v3068
        %v3101 = vunpack.c.l.b16 %v3069
        %v3102 = vunpack.c.l.b16 %v3070
        %v3103 = vunpack.c.l.b16 %v3071
        %v3104 = vunpack.c.l.b16 %v3072
        %v3105 = vunpack.c.l.b16 %v3073
        %v3106 = vunpack.c.l.b16 %v3074
        %v3107 = vunpack.c.l.b16 %v3075
        %v3108 = vunpack.c.l.b16 %v3076
        %v3109 = vunpack.c.l.b16 %v3077
        %v3110 = vunpack.c.l.b16 %v3078
        %v3111 = vunpack.c.l.b16 %v3079
        %v3112 = vunpack.c.l.b16 %v3080
        %v3113 = vunpack.c.l.b16 %v3081
        %v3114 = vunpack.c.l.b16 %v3082
        %v3115 = vpack.c.b16 %v3100, %v3099
        %v3116 = vpack.c.b16 %v3102, %v3101
        %v3117 = vpack.c.b16 %v3104, %v3103
        %v3118 = vpack.c.b16 %v3106, %v3105
        %v3119 = vpack.c.b16 %v3108, %v3107
        %v3120 = vpack.c.b16 %v3110, %v3109
        %v3121 = vpack.c.b16 %v3112, %v3111
        %v3122 = vpack.c.b16 %v3114, %v3113
        %3131 = vmatprep.subr.bf16.mxu0 0
        %3132 = vmatpush1.bf16.msra.mxu0 %v3122
        %3133 = vmatprep.subr.bf16.mxu0 0
        %3134 = vmatpush1.bf16.msra.mxu0 %v3121
        %3135 = vmatprep.subr.bf16.mxu0 0
        %3136 = vmatpush1.bf16.msra.mxu0 %v3120
        %3137 = vmatprep.subr.bf16.mxu0 0
        %3138 = vmatpush1.bf16.msra.mxu0 %v3119
        %3139 = vmatprep.subr.bf16.mxu0 0
        %3140 = vmatpush1.bf16.msra.mxu0 %v3118
        %3141 = vmatprep.subr.bf16.mxu0 0
        %3142 = vmatpush1.bf16.msra.mxu0 %v3117
        %3143 = vmatprep.subr.bf16.mxu0 0
        %3144 = vmatpush1.bf16.msra.mxu0 %v3116
        %3145 = vmatprep.subr.bf16.mxu0 0
        %3146 = vmatpush1.bf16.msra.mxu0 %v3115
        %3147 = vmatprep.subr.bf16.mxu0 0
        %3148 = vmatpush2.bf16.msra.mxu0 0
        %3149 = vmatprep.subr.bf16.mxu0 0
        %3150 = vmatpush2.bf16.msra.mxu0 0
        %3151 = vmatprep.subr.bf16.mxu0 0
        %3152 = vmatpush2.bf16.msra.mxu0 0
        %3153 = vmatprep.subr.bf16.mxu0 0
        %3154 = vmatpush2.bf16.msra.mxu0 0
        %3155 = vmatprep.subr.bf16.mxu0 0
        %3156 = vmatpush2.bf16.msra.mxu0 0
        %3157 = vmatprep.subr.bf16.mxu0 0
        %3158 = vmatpush2.bf16.msra.mxu0 0
        %3159 = vmatprep.subr.bf16.mxu0 0
        %3160 = vmatpush2.bf16.msra.mxu0 0
        %3161 = vmatprep.subr.bf16.mxu0 0
        %3162 = vmatpush2.bf16.msra.mxu0 0
        %3163 = vmatprep.mubr.bf16.mxu0 0
        %3164 = vmatmul.mubr.bf16.gmra.mxu0 %v3066
        %v3165 = vpop.f32.mrf.mxu0
        %v3166 = vadd.f32 0.0, %v3165
        %v3167 = vpop.f32.mrf.mxu0
        %v3168 = vpop.f32.mrf.mxu0
        %v3169 = vpop.f32.mrf.mxu0
        %3170 = vdwg.mxu0
        %v3171 = vadd.f32 %v3060, %v3166
        %v3172 = vld [vmem:[#allocation46] sm:$0x1]
        %v3174 = vlaneseq
        %v3175 = vshrl.u32 %v3174, 7
        %v3176 = vsub.s32 0, %v3175
        %v3177 = vrot.slane %v3172, %v3176
        %v3179 = vadd.f32 %v3171, %v3177
        %v3180 = vpack.c.bf16 %v1819, %v1819
        %v3181 = vld [vmem:[#allocation28] sm:$0xff]
        %v3182 = vld [vmem:[#allocation28 + $0x8] sm:$0xff]
        %v3183 = vld [vmem:[#allocation28 + $0x10] sm:$0xff]
        %v3184 = vld [vmem:[#allocation28 + $0x18] sm:$0xff]
        %v3185 = vld [vmem:[#allocation28 + $0x20] sm:$0xff]
        %v3186 = vld [vmem:[#allocation28 + $0x28] sm:$0xff]
        %v3187 = vld [vmem:[#allocation28 + $0x30] sm:$0xff]
        %v3188 = vld [vmem:[#allocation28 + $0x38] sm:$0xff]
        %v3189 = vld [vmem:[#allocation29] sm:$0x3]
        %v3191 = vlaneseq
        %v3192 = vshrl.u32 %v3191, 7
        %v3193 = vsub.s32 0, %v3192
        %v3194 = vrot.slane %v3189, %v3193
        %v3195 = vlaneseq
        %v3196 = vshrl.u32 %v3195, 7
        %v3197 = vsub.s32 1, %v3196
        %v3198 = vrot.slane %v3189, %v3197
        %v3209 = vunpack.c.l.b16 %v3181
        %v3210 = vunpack.c.h.b16 %v3181
        %v3211 = vunpack.c.l.b16 %v3182
        %v3212 = vunpack.c.h.b16 %v3182
        %v3213 = vunpack.c.l.b16 %v3183
        %v3214 = vunpack.c.h.b16 %v3183
        %v3215 = vunpack.c.l.b16 %v3184
        %v3216 = vunpack.c.h.b16 %v3184
        %v3217 = vunpack.c.l.b16 %v3185
        %v3218 = vunpack.c.h.b16 %v3185
        %v3219 = vunpack.c.l.b16 %v3186
        %v3220 = vunpack.c.h.b16 %v3186
        %v3221 = vunpack.c.l.b16 %v3187
        %v3222 = vunpack.c.h.b16 %v3187
        %v3223 = vunpack.c.l.b16 %v3188
        %v3224 = vunpack.c.h.b16 %v3188
        %v3225 = vpack.c.b16 %v3211, %v3209
        %v3226 = vpack.c.b16 %v3212, %v3210
        %v3227 = vpack.c.b16 %v3215, %v3213
        %v3228 = vpack.c.b16 %v3216, %v3214
        %v3229 = vpack.c.b16 %v3219, %v3217
        %v3230 = vpack.c.b16 %v3220, %v3218
        %v3231 = vpack.c.b16 %v3223, %v3221
        %v3232 = vpack.c.b16 %v3224, %v3222
        %v3242 = vsel %vm1573, %v3180, 0
        %3244 = vmatprep.subr.bf16.mxu0 0
        %3245 = vmatpush1.bf16.msra.mxu0 0
        %3246 = vmatprep.subr.bf16.mxu0 0
        %3247 = vmatpush1.bf16.msra.mxu0 0
        %3248 = vmatprep.subr.bf16.mxu0 0
        %3249 = vmatpush1.bf16.msra.mxu0 0
        %3250 = vmatprep.subr.bf16.mxu0 0
        %3251 = vmatpush1.bf16.msra.mxu0 0
        %3252 = vmatprep.subr.bf16.mxu0 %v3232
        %3253 = vmatpush1.bf16.msra.mxu0 %v3231
        %3254 = vmatprep.subr.bf16.mxu0 %v3230
        %3255 = vmatpush1.bf16.msra.mxu0 %v3229
        %3256 = vmatprep.subr.bf16.mxu0 %v3228
        %3257 = vmatpush1.bf16.msra.mxu0 %v3227
        %3258 = vmatprep.subr.bf16.mxu0 %v3226
        %3259 = vmatpush1.bf16.msra.mxu0 %v3225
        %3260 = vmatprep.subr.bf16.mxu0 0
        %3261 = vmatpush2.bf16.msra.mxu0 0
        %3262 = vmatprep.subr.bf16.mxu0 0
        %3263 = vmatpush2.bf16.msra.mxu0 0
        %3264 = vmatprep.subr.bf16.mxu0 0
        %3265 = vmatpush2.bf16.msra.mxu0 0
        %3266 = vmatprep.subr.bf16.mxu0 0
        %3267 = vmatpush2.bf16.msra.mxu0 0
        %3268 = vmatprep.subr.bf16.mxu0 0
        %3269 = vmatpush2.bf16.msra.mxu0 0
        %3270 = vmatprep.subr.bf16.mxu0 0
        %3271 = vmatpush2.bf16.msra.mxu0 0
        %3272 = vmatprep.subr.bf16.mxu0 0
        %3273 = vmatpush2.bf16.msra.mxu0 0
        %3274 = vmatprep.subr.bf16.mxu0 0
        %3275 = vmatpush2.bf16.msra.mxu0 0
        %3276 = vmatprep.mubr.bf16.mxu0 0
        %3277 = vmatmul.mubr.bf16.gmra.mxu0 %v3242
        %v3278 = vpop.f32.mrf.mxu0
        %v3279 = vadd.f32 %v3194, %v3278
        %v3280 = vpop.f32.mrf.mxu0
        %v3281 = vadd.f32 %v3198, %v3280
        %v3282 = vpop.f32.mrf.mxu0
        %v3283 = vpop.f32.mrf.mxu0
        %3284 = vdwg.mxu0
        %v3285 = vpack.c.bf16 %v2849, %v2849
        %v3286 = vld [vmem:[#allocation53] sm:$0xff]
        %v3287 = vld [vmem:[#allocation53 + $0x8] sm:$0xff]
        %v3288 = vld [vmem:[#allocation53 + $0x10] sm:$0xff]
        %v3289 = vld [vmem:[#allocation53 + $0x18] sm:$0xff]
        %v3290 = vld [vmem:[#allocation53 + $0x20] sm:$0xff]
        %v3291 = vld [vmem:[#allocation53 + $0x28] sm:$0xff]
        %v3292 = vld [vmem:[#allocation53 + $0x30] sm:$0xff]
        %v3293 = vld [vmem:[#allocation53 + $0x38] sm:$0xff]
        %v3294 = vld [vmem:[#allocation53 + $0x40] sm:$0xff]
        %v3295 = vld [vmem:[#allocation53 + $0x48] sm:$0xff]
        %v3296 = vld [vmem:[#allocation53 + $0x50] sm:$0xff]
        %v3297 = vld [vmem:[#allocation53 + $0x58] sm:$0xff]
        %v3298 = vld [vmem:[#allocation53 + $0x60] sm:$0xff]
        %v3299 = vld [vmem:[#allocation53 + $0x68] sm:$0xff]
        %v3300 = vld [vmem:[#allocation53 + $0x70] sm:$0xff]
        %v3301 = vld [vmem:[#allocation53 + $0x78] sm:$0xff]
        %v3318 = vunpack.c.l.b16 %v3286
        %v3319 = vunpack.c.h.b16 %v3286
        %v3320 = vunpack.c.l.b16 %v3287
        %v3321 = vunpack.c.h.b16 %v3287
        %v3322 = vunpack.c.l.b16 %v3288
        %v3323 = vunpack.c.h.b16 %v3288
        %v3324 = vunpack.c.l.b16 %v3289
        %v3325 = vunpack.c.h.b16 %v3289
        %v3326 = vunpack.c.l.b16 %v3290
        %v3327 = vunpack.c.h.b16 %v3290
        %v3328 = vunpack.c.l.b16 %v3291
        %v3329 = vunpack.c.h.b16 %v3291
        %v3330 = vunpack.c.l.b16 %v3292
        %v3331 = vunpack.c.h.b16 %v3292
        %v3332 = vunpack.c.l.b16 %v3293
        %v3333 = vunpack.c.h.b16 %v3293
        %v3334 = vunpack.c.l.b16 %v3294
        %v3335 = vunpack.c.h.b16 %v3294
        %v3336 = vunpack.c.l.b16 %v3295
        %v3337 = vunpack.c.h.b16 %v3295
        %v3338 = vunpack.c.l.b16 %v3296
        %v3339 = vunpack.c.h.b16 %v3296
        %v3340 = vunpack.c.l.b16 %v3297
        %v3341 = vunpack.c.h.b16 %v3297
        %v3342 = vunpack.c.l.b16 %v3298
        %v3343 = vunpack.c.h.b16 %v3298
        %v3344 = vunpack.c.l.b16 %v3299
        %v3345 = vunpack.c.h.b16 %v3299
        %v3346 = vunpack.c.l.b16 %v3300
        %v3347 = vunpack.c.h.b16 %v3300
        %v3348 = vunpack.c.l.b16 %v3301
        %v3349 = vunpack.c.h.b16 %v3301
        %v3350 = vpack.c.b16 %v3320, %v3318
        %v3351 = vpack.c.b16 %v3321, %v3319
        %v3352 = vpack.c.b16 %v3324, %v3322
        %v3353 = vpack.c.b16 %v3325, %v3323
        %v3354 = vpack.c.b16 %v3328, %v3326
        %v3355 = vpack.c.b16 %v3329, %v3327
        %v3356 = vpack.c.b16 %v3332, %v3330
        %v3357 = vpack.c.b16 %v3333, %v3331
        %v3358 = vpack.c.b16 %v3336, %v3334
        %v3359 = vpack.c.b16 %v3337, %v3335
        %v3360 = vpack.c.b16 %v3340, %v3338
        %v3361 = vpack.c.b16 %v3341, %v3339
        %v3362 = vpack.c.b16 %v3344, %v3342
        %v3363 = vpack.c.b16 %v3345, %v3343
        %v3364 = vpack.c.b16 %v3348, %v3346
        %v3365 = vpack.c.b16 %v3349, %v3347
        %3382 = vmatprep.subr.bf16.mxu0 %v3365
        %3383 = vmatpush1.bf16.msra.mxu0 %v3364
        %3384 = vmatprep.subr.bf16.mxu0 %v3363
        %3385 = vmatpush1.bf16.msra.mxu0 %v3362
        %3386 = vmatprep.subr.bf16.mxu0 %v3361
        %3387 = vmatpush1.bf16.msra.mxu0 %v3360
        %3388 = vmatprep.subr.bf16.mxu0 %v3359
        %3389 = vmatpush1.bf16.msra.mxu0 %v3358
        %3390 = vmatprep.subr.bf16.mxu0 %v3357
        %3391 = vmatpush1.bf16.msra.mxu0 %v3356
        %3392 = vmatprep.subr.bf16.mxu0 %v3355
        %3393 = vmatpush1.bf16.msra.mxu0 %v3354
        %3394 = vmatprep.subr.bf16.mxu0 %v3353
        %3395 = vmatpush1.bf16.msra.mxu0 %v3352
        %3396 = vmatprep.subr.bf16.mxu0 %v3351
        %3397 = vmatpush1.bf16.msra.mxu0 %v3350
        %3398 = vmatprep.subr.bf16.mxu0 0
        %3399 = vmatpush2.bf16.msra.mxu0 0
        %3400 = vmatprep.subr.bf16.mxu0 0
        %3401 = vmatpush2.bf16.msra.mxu0 0
        %3402 = vmatprep.subr.bf16.mxu0 0
        %3403 = vmatpush2.bf16.msra.mxu0 0
        %3404 = vmatprep.subr.bf16.mxu0 0
        %3405 = vmatpush2.bf16.msra.mxu0 0
        %3406 = vmatprep.subr.bf16.mxu0 0
        %3407 = vmatpush2.bf16.msra.mxu0 0
        %3408 = vmatprep.subr.bf16.mxu0 0
        %3409 = vmatpush2.bf16.msra.mxu0 0
        %3410 = vmatprep.subr.bf16.mxu0 0
        %3411 = vmatpush2.bf16.msra.mxu0 0
        %3412 = vmatprep.subr.bf16.mxu0 0
        %3413 = vmatpush2.bf16.msra.mxu0 0
        %3414 = vmatprep.mubr.bf16.mxu0 0
        %3415 = vmatmul.mubr.bf16.gmra.mxu0 %v3285
        %v3416 = vpop.f32.mrf.mxu0
        %v3417 = vadd.f32 0.0, %v3416
        %v3418 = vpop.f32.mrf.mxu0
        %v3419 = vadd.f32 0.0, %v3418
        %v3420 = vpop.f32.mrf.mxu0
        %v3421 = vpop.f32.mrf.mxu0
        %3422 = vdwg.mxu0
        %v3423 = vld [vmem:[%s63] sm:$0xf]
        %v3424 = vpack.c.bf16 %v3417, %v3417
        %v3425 = vpack.c.bf16 %v3419, %v3419
        %vm3426 = vcmask 31744
        %v3428 = vsel %vm3426, %v3423, 0
        %vm3430 = vcmask 1041408
        %v3432 = vsel %vm3430, %v3424, 0
        %v3435 = vsel %vm3430, %v3425, 0
        %3437 = vmatprep.subr.bf16.mxu0 0
        %3438 = vmatpush1.bf16.msra.mxu0 0
        %3439 = vmatprep.subr.bf16.mxu0 0
        %3440 = vmatpush1.bf16.msra.mxu0 0
        %3441 = vmatprep.subr.bf16.mxu0 0
        %3442 = vmatpush1.bf16.msra.mxu0 0
        %3443 = vmatprep.subr.bf16.mxu0 0
        %3444 = vmatpush1.bf16.msra.mxu0 0
        %3445 = vmatprep.subr.bf16.mxu0 0
        %3446 = vmatpush1.bf16.msra.mxu0 0
        %3447 = vmatprep.subr.bf16.mxu0 0
        %3448 = vmatpush1.bf16.msra.mxu0 0
        %3449 = vmatprep.subr.bf16.mxu0 0
        %3450 = vmatpush1.bf16.msra.mxu0 0
        %3451 = vmatprep.subr.bf16.mxu0 %v3435
        %3452 = vmatpush1.bf16.msra.mxu0 %v3432
        %3453 = vmatprep.subr.bf16.mxu0 0
        %3454 = vmatpush2.bf16.msra.mxu0 0
        %3455 = vmatprep.subr.bf16.mxu0 0
        %3456 = vmatpush2.bf16.msra.mxu0 0
        %3457 = vmatprep.subr.bf16.mxu0 0
        %3458 = vmatpush2.bf16.msra.mxu0 0
        %3459 = vmatprep.subr.bf16.mxu0 0
        %3460 = vmatpush2.bf16.msra.mxu0 0
        %3461 = vmatprep.subr.bf16.mxu0 0
        %3462 = vmatpush2.bf16.msra.mxu0 0
        %3463 = vmatprep.subr.bf16.mxu0 0
        %3464 = vmatpush2.bf16.msra.mxu0 0
        %3465 = vmatprep.subr.bf16.mxu0 0
        %3466 = vmatpush2.bf16.msra.mxu0 0
        %3467 = vmatprep.subr.bf16.mxu0 0
        %3468 = vmatpush2.bf16.msra.mxu0 0
        %3469 = vmatprep.mubr.bf16.mxu0 0
        %3470 = vmatmul.mubr.bf16.gmra.mxu0 %v3428
        %v3471 = vpop.f32.mrf.mxu0
        %v3472 = vadd.f32 0.0, %v3471
        %v3473 = vpop.f32.mrf.mxu0
        %v3474 = vadd.f32 0.0, %v3473
        %v3475 = vpop.f32.mrf.mxu0
        %v3476 = vpop.f32.mrf.mxu0
        %3477 = vdwg.mxu0
        %v3478 = vadd.f32 %v3279, %v3472
        %v3479 = vadd.f32 %v3281, %v3474
        %v3480 = vlaneseq
        %vm3481 = vcmp.ge.s32.totalorder %v3480, 0
        %vm3482 = vcmp.lt.s32.totalorder %v3480, 256
        %vm3483 = vmand %vm3481, %vm3482
        %s3484 = scalar_lea.vmem [#allocation5], 7
        %3485 = vst.msk [vmem:[%s3484] ss:$8 sm:$0x3] %vm3483, 0.0
        %3486 = vst.msk [vmem:[%s3484] ss:$8 sm:$0x0] %vm3483, 0.0
        %s3487 = scalar_lea.vmem [#allocation5], 32
        %3488 = vst.msk [vmem:[%s3487] ss:$8 sm:$0x3] %vm3483, 0.0
        %3489 = vst.msk [vmem:[%s3487] ss:$8 sm:$0x0] %vm3483, 0.0
        %3490 = vst [vmem:[#allocation5 + $0x10] sm:$0xff] %v3478
        %3491 = vst [vmem:[#allocation5 + $0x18] sm:$0xff] %v3479
        %v3492 = vld [vmem:[#allocation5] sm:$0x80]
        %v3493 = vld [vmem:[#allocation5 + $0x8] sm:$0x80]
        %v3494 = vld [vmem:[#allocation5 + $0x10] sm:$0x7f]
        %v3495 = vld [vmem:[#allocation5 + $0x18] sm:$0x7f]
        %v3496 = vpack.c.bf16 %v3494, %v3492
        %v3497 = vpack.c.bf16 %v3495, %v3493
        %v3498 = vld [vmem:[#allocation35] sm:$0xff]
        %v3499 = vld [vmem:[#allocation35 + $0x8] sm:$0xff]
        %v3500 = vld [vmem:[#allocation35 + $0x10] sm:$0xff]
        %v3501 = vld [vmem:[#allocation35 + $0x18] sm:$0xff]
        %v3502 = vld [vmem:[#allocation35 + $0x20] sm:$0xff]
        %v3503 = vld [vmem:[#allocation35 + $0x28] sm:$0xff]
        %v3504 = vld [vmem:[#allocation35 + $0x30] sm:$0xff]
        %v3505 = vld [vmem:[#allocation35 + $0x38] sm:$0xff]
        %v3506 = vld [vmem:[#allocation35 + $0x40] sm:$0xff]
        %v3507 = vld [vmem:[#allocation35 + $0x48] sm:$0xff]
        %v3508 = vld [vmem:[#allocation35 + $0x50] sm:$0xff]
        %v3509 = vld [vmem:[#allocation35 + $0x58] sm:$0xff]
        %v3510 = vld [vmem:[#allocation35 + $0x60] sm:$0xff]
        %v3511 = vld [vmem:[#allocation35 + $0x68] sm:$0xff]
        %v3512 = vld [vmem:[#allocation35 + $0x70] sm:$0xff]
        %v3513 = vld [vmem:[#allocation35 + $0x78] sm:$0xff]
        %v3514 = vld [vmem:[#allocation35 + $0x80] sm:$0xff]
        %v3515 = vld [vmem:[#allocation35 + $0x88] sm:$0xff]
        %v3516 = vld [vmem:[#allocation35 + $0x90] sm:$0xff]
        %v3517 = vld [vmem:[#allocation35 + $0x98] sm:$0xff]
        %v3518 = vld [vmem:[#allocation35 + $0xa0] sm:$0xff]
        %v3519 = vld [vmem:[#allocation35 + $0xa8] sm:$0xff]
        %v3520 = vld [vmem:[#allocation35 + $0xb0] sm:$0xff]
        %v3521 = vld [vmem:[#allocation35 + $0xb8] sm:$0xff]
        %v3522 = vld [vmem:[#allocation35 + $0xc0] sm:$0xff]
        %v3523 = vld [vmem:[#allocation35 + $0xc8] sm:$0xff]
        %v3524 = vld [vmem:[#allocation35 + $0xd0] sm:$0xff]
        %v3525 = vld [vmem:[#allocation35 + $0xd8] sm:$0xff]
        %v3526 = vld [vmem:[#allocation35 + $0xe0] sm:$0xff]
        %v3527 = vld [vmem:[#allocation35 + $0xe8] sm:$0xff]
        %v3528 = vld [vmem:[#allocation35 + $0xf0] sm:$0xff]
        %v3529 = vld [vmem:[#allocation35 + $0xf8] sm:$0xff]
        %v3530 = vld [vmem:[#allocation5 + $0x10] sm:$0xff]
        %v3531 = vld [vmem:[#allocation5 + $0x18] sm:$0xff]
        %v3532 = vpack.c.bf16 %v3530, %v3530
        %v3533 = vpack.c.bf16 %v3531, %v3531
        %v3534 = vld [vmem:[#allocation37] sm:$0xff]
        %v3535 = vld [vmem:[#allocation37 + $0x8] sm:$0xff]
        %v3536 = vld [vmem:[#allocation37 + $0x10] sm:$0xff]
        %v3537 = vld [vmem:[#allocation37 + $0x18] sm:$0xff]
        %v3538 = vld [vmem:[#allocation37 + $0x20] sm:$0xff]
        %v3539 = vld [vmem:[#allocation37 + $0x28] sm:$0xff]
        %v3540 = vld [vmem:[#allocation37 + $0x30] sm:$0xff]
        %v3541 = vld [vmem:[#allocation37 + $0x38] sm:$0xff]
        %v3542 = vld [vmem:[#allocation37 + $0x40] sm:$0xff]
        %v3543 = vld [vmem:[#allocation37 + $0x48] sm:$0xff]
        %v3544 = vld [vmem:[#allocation37 + $0x50] sm:$0xff]
        %v3545 = vld [vmem:[#allocation37 + $0x58] sm:$0xff]
        %v3546 = vld [vmem:[#allocation37 + $0x60] sm:$0xff]
        %v3547 = vld [vmem:[#allocation37 + $0x68] sm:$0xff]
        %v3548 = vld [vmem:[#allocation37 + $0x70] sm:$0xff]
        %v3549 = vld [vmem:[#allocation37 + $0x78] sm:$0xff]
        %v3550 = vld [vmem:[#allocation37 + $0x80] sm:$0xff]
        %v3551 = vld [vmem:[#allocation37 + $0x88] sm:$0xff]
        %v3552 = vld [vmem:[#allocation37 + $0x90] sm:$0xff]
        %v3553 = vld [vmem:[#allocation37 + $0x98] sm:$0xff]
        %v3554 = vld [vmem:[#allocation37 + $0xa0] sm:$0xff]
        %v3555 = vld [vmem:[#allocation37 + $0xa8] sm:$0xff]
        %v3556 = vld [vmem:[#allocation37 + $0xb0] sm:$0xff]
        %v3557 = vld [vmem:[#allocation37 + $0xb8] sm:$0xff]
        %v3558 = vld [vmem:[#allocation37 + $0xc0] sm:$0xff]
        %v3559 = vld [vmem:[#allocation37 + $0xc8] sm:$0xff]
        %v3560 = vld [vmem:[#allocation37 + $0xd0] sm:$0xff]
        %v3561 = vld [vmem:[#allocation37 + $0xd8] sm:$0xff]
        %v3562 = vld [vmem:[#allocation37 + $0xe0] sm:$0xff]
        %v3563 = vld [vmem:[#allocation37 + $0xe8] sm:$0xff]
        %v3564 = vld [vmem:[#allocation37 + $0xf0] sm:$0xff]
        %v3565 = vld [vmem:[#allocation37 + $0xf8] sm:$0xff]
        %v3598 = vunpack.c.l.b16 %v3534
        %v3599 = vunpack.c.h.b16 %v3534
        %v3600 = vunpack.c.l.b16 %v3535
        %v3601 = vunpack.c.h.b16 %v3535
        %v3602 = vunpack.c.l.b16 %v3536
        %v3603 = vunpack.c.h.b16 %v3536
        %v3604 = vunpack.c.l.b16 %v3537
        %v3605 = vunpack.c.h.b16 %v3537
        %v3606 = vunpack.c.l.b16 %v3538
        %v3607 = vunpack.c.h.b16 %v3538
        %v3608 = vunpack.c.l.b16 %v3539
        %v3609 = vunpack.c.h.b16 %v3539
        %v3610 = vunpack.c.l.b16 %v3540
        %v3611 = vunpack.c.h.b16 %v3540
        %v3612 = vunpack.c.l.b16 %v3541
        %v3613 = vunpack.c.h.b16 %v3541
        %v3614 = vunpack.c.l.b16 %v3542
        %v3615 = vunpack.c.h.b16 %v3542
        %v3616 = vunpack.c.l.b16 %v3543
        %v3617 = vunpack.c.h.b16 %v3543
        %v3618 = vunpack.c.l.b16 %v3544
        %v3619 = vunpack.c.h.b16 %v3544
        %v3620 = vunpack.c.l.b16 %v3545
        %v3621 = vunpack.c.h.b16 %v3545
        %v3622 = vunpack.c.l.b16 %v3546
        %v3623 = vunpack.c.h.b16 %v3546
        %v3624 = vunpack.c.l.b16 %v3547
        %v3625 = vunpack.c.h.b16 %v3547
        %v3626 = vunpack.c.l.b16 %v3548
        %v3627 = vunpack.c.h.b16 %v3548
        %v3628 = vunpack.c.l.b16 %v3549
        %v3629 = vunpack.c.h.b16 %v3549
        %v3630 = vunpack.c.l.b16 %v3550
        %v3631 = vunpack.c.h.b16 %v3550
        %v3632 = vunpack.c.l.b16 %v3551
        %v3633 = vunpack.c.h.b16 %v3551
        %v3634 = vunpack.c.l.b16 %v3552
        %v3635 = vunpack.c.h.b16 %v3552
        %v3636 = vunpack.c.l.b16 %v3553
        %v3637 = vunpack.c.h.b16 %v3553
        %v3638 = vunpack.c.l.b16 %v3554
        %v3639 = vunpack.c.h.b16 %v3554
        %v3640 = vunpack.c.l.b16 %v3555
        %v3641 = vunpack.c.h.b16 %v3555
        %v3642 = vunpack.c.l.b16 %v3556
        %v3643 = vunpack.c.h.b16 %v3556
        %v3644 = vunpack.c.l.b16 %v3557
        %v3645 = vunpack.c.h.b16 %v3557
        %v3646 = vunpack.c.l.b16 %v3558
        %v3647 = vunpack.c.h.b16 %v3558
        %v3648 = vunpack.c.l.b16 %v3559
        %v3649 = vunpack.c.h.b16 %v3559
        %v3650 = vunpack.c.l.b16 %v3560
        %v3651 = vunpack.c.h.b16 %v3560
        %v3652 = vunpack.c.l.b16 %v3561
        %v3653 = vunpack.c.h.b16 %v3561
        %v3654 = vunpack.c.l.b16 %v3562
        %v3655 = vunpack.c.h.b16 %v3562
        %v3656 = vunpack.c.l.b16 %v3563
        %v3657 = vunpack.c.h.b16 %v3563
        %v3658 = vunpack.c.l.b16 %v3564
        %v3659 = vunpack.c.h.b16 %v3564
        %v3660 = vunpack.c.l.b16 %v3565
        %v3661 = vunpack.c.h.b16 %v3565
        %v3662 = vpack.c.b16 %v3600, %v3598
        %v3663 = vpack.c.b16 %v3601, %v3599
        %v3664 = vpack.c.b16 %v3604, %v3602
        %v3665 = vpack.c.b16 %v3605, %v3603
        %v3666 = vpack.c.b16 %v3608, %v3606
        %v3667 = vpack.c.b16 %v3609, %v3607
        %v3668 = vpack.c.b16 %v3612, %v3610
        %v3669 = vpack.c.b16 %v3613, %v3611
        %v3670 = vpack.c.b16 %v3616, %v3614
        %v3671 = vpack.c.b16 %v3617, %v3615
        %v3672 = vpack.c.b16 %v3620, %v3618
        %v3673 = vpack.c.b16 %v3621, %v3619
        %v3674 = vpack.c.b16 %v3624, %v3622
        %v3675 = vpack.c.b16 %v3625, %v3623
        %v3676 = vpack.c.b16 %v3628, %v3626
        %v3677 = vpack.c.b16 %v3629, %v3627
        %v3678 = vpack.c.b16 %v3632, %v3630
        %v3679 = vpack.c.b16 %v3633, %v3631
        %v3680 = vpack.c.b16 %v3636, %v3634
        %v3681 = vpack.c.b16 %v3637, %v3635
        %v3682 = vpack.c.b16 %v3640, %v3638
        %v3683 = vpack.c.b16 %v3641, %v3639
        %v3684 = vpack.c.b16 %v3644, %v3642
        %v3685 = vpack.c.b16 %v3645, %v3643
        %v3686 = vpack.c.b16 %v3648, %v3646
        %v3687 = vpack.c.b16 %v3649, %v3647
        %v3688 = vpack.c.b16 %v3652, %v3650
        %v3689 = vpack.c.b16 %v3653, %v3651
        %v3690 = vpack.c.b16 %v3656, %v3654
        %v3691 = vpack.c.b16 %v3657, %v3655
        %v3692 = vpack.c.b16 %v3660, %v3658
        %v3693 = vpack.c.b16 %v3661, %v3659
        %3726 = vmatprep.subr.bf16.mxu0 %v3677
        %3727 = vmatpush1.bf16.msra.mxu0 %v3676
        %3728 = vmatprep.subr.bf16.mxu0 %v3675
        %3729 = vmatpush1.bf16.msra.mxu0 %v3674
        %3730 = vmatprep.subr.bf16.mxu0 %v3673
        %3731 = vmatpush1.bf16.msra.mxu0 %v3672
        %3732 = vmatprep.subr.bf16.mxu0 %v3671
        %3733 = vmatpush1.bf16.msra.mxu0 %v3670
        %3734 = vmatprep.subr.bf16.mxu0 %v3669
        %3735 = vmatpush1.bf16.msra.mxu0 %v3668
        %3736 = vmatprep.subr.bf16.mxu0 %v3667
        %3737 = vmatpush1.bf16.msra.mxu0 %v3666
        %3738 = vmatprep.subr.bf16.mxu0 %v3665
        %3739 = vmatpush1.bf16.msra.mxu0 %v3664
        %3740 = vmatprep.subr.bf16.mxu0 %v3663
        %3741 = vmatpush1.bf16.msra.mxu0 %v3662
        %3742 = vmatprep.subr.bf16.mxu0 %v3693
        %3743 = vmatpush2.bf16.msra.mxu0 %v3692
        %3744 = vmatprep.subr.bf16.mxu0 %v3691
        %3745 = vmatpush2.bf16.msra.mxu0 %v3690
        %3746 = vmatprep.subr.bf16.mxu0 %v3689
        %3747 = vmatpush2.bf16.msra.mxu0 %v3688
        %3748 = vmatprep.subr.bf16.mxu0 %v3687
        %3749 = vmatpush2.bf16.msra.mxu0 %v3686
        %3750 = vmatprep.subr.bf16.mxu0 %v3685
        %3751 = vmatpush2.bf16.msra.mxu0 %v3684
        %3752 = vmatprep.subr.bf16.mxu0 %v3683
        %3753 = vmatpush2.bf16.msra.mxu0 %v3682
        %3754 = vmatprep.subr.bf16.mxu0 %v3681
        %3755 = vmatpush2.bf16.msra.mxu0 %v3680
        %3756 = vmatprep.subr.bf16.mxu0 %v3679
        %3757 = vmatpush2.bf16.msra.mxu0 %v3678
        %3758 = vmatprep.mubr.bf16.mxu0 %v3533
        %3759 = vmatmul.mubr.bf16.gmra.mxu0 %v3532
        %v3760 = vpop.f32.mrf.mxu0
        %v3761 = vadd.f32 0.0, %v3760
        %v3762 = vpop.f32.mrf.mxu0
        %v3763 = vadd.f32 0.0, %v3762
        %v3764 = vpop.f32.mrf.mxu0
        %v3765 = vpop.f32.mrf.mxu0
        %3766 = vdwg.mxu0
        %v3768 = vshrl.u32 %v3496, 16
        %v3770 = vrot.slane %v3768, 3
        %v3771 = vshll.u32 %v3496, 16
        %v3773 = vrot.slane %v3771, 4
        %v3774 = vor.u32 %v3770, %v3773
        %v3776 = vshrl.u32 %v3497, 16
        %v3778 = vrot.slane %v3776, 3
        %v3779 = vshll.u32 %v3497, 16
        %v3781 = vrot.slane %v3779, 4
        %v3782 = vor.u32 %v3778, %v3781
        %v3817 = vunpack.c.l.b16 %v3498
        %v3818 = vunpack.c.h.b16 %v3498
        %v3819 = vunpack.c.l.b16 %v3499
        %v3820 = vunpack.c.h.b16 %v3499
        %v3821 = vunpack.c.l.b16 %v3500
        %v3822 = vunpack.c.h.b16 %v3500
        %v3823 = vunpack.c.l.b16 %v3501
        %v3824 = vunpack.c.h.b16 %v3501
        %v3825 = vunpack.c.l.b16 %v3502
        %v3826 = vunpack.c.h.b16 %v3502
        %v3827 = vunpack.c.l.b16 %v3503
        %v3828 = vunpack.c.h.b16 %v3503
        %v3829 = vunpack.c.l.b16 %v3504
        %v3830 = vunpack.c.h.b16 %v3504
        %v3831 = vunpack.c.l.b16 %v3505
        %v3832 = vunpack.c.h.b16 %v3505
        %v3833 = vunpack.c.l.b16 %v3506
        %v3834 = vunpack.c.h.b16 %v3506
        %v3835 = vunpack.c.l.b16 %v3507
        %v3836 = vunpack.c.h.b16 %v3507
        %v3837 = vunpack.c.l.b16 %v3508
        %v3838 = vunpack.c.h.b16 %v3508
        %v3839 = vunpack.c.l.b16 %v3509
        %v3840 = vunpack.c.h.b16 %v3509
        %v3841 = vunpack.c.l.b16 %v3510
        %v3842 = vunpack.c.h.b16 %v3510
        %v3843 = vunpack.c.l.b16 %v3511
        %v3844 = vunpack.c.h.b16 %v3511
        %v3845 = vunpack.c.l.b16 %v3512
        %v3846 = vunpack.c.h.b16 %v3512
        %v3847 = vunpack.c.l.b16 %v3513
        %v3848 = vunpack.c.h.b16 %v3513
        %v3849 = vunpack.c.l.b16 %v3514
        %v3850 = vunpack.c.h.b16 %v3514
        %v3851 = vunpack.c.l.b16 %v3515
        %v3852 = vunpack.c.h.b16 %v3515
        %v3853 = vunpack.c.l.b16 %v3516
        %v3854 = vunpack.c.h.b16 %v3516
        %v3855 = vunpack.c.l.b16 %v3517
        %v3856 = vunpack.c.h.b16 %v3517
        %v3857 = vunpack.c.l.b16 %v3518
        %v3858 = vunpack.c.h.b16 %v3518
        %v3859 = vunpack.c.l.b16 %v3519
        %v3860 = vunpack.c.h.b16 %v3519
        %v3861 = vunpack.c.l.b16 %v3520
        %v3862 = vunpack.c.h.b16 %v3520
        %v3863 = vunpack.c.l.b16 %v3521
        %v3864 = vunpack.c.h.b16 %v3521
        %v3865 = vunpack.c.l.b16 %v3522
        %v3866 = vunpack.c.h.b16 %v3522
        %v3867 = vunpack.c.l.b16 %v3523
        %v3868 = vunpack.c.h.b16 %v3523
        %v3869 = vunpack.c.l.b16 %v3524
        %v3870 = vunpack.c.h.b16 %v3524
        %v3871 = vunpack.c.l.b16 %v3525
        %v3872 = vunpack.c.h.b16 %v3525
        %v3873 = vunpack.c.l.b16 %v3526
        %v3874 = vunpack.c.h.b16 %v3526
        %v3875 = vunpack.c.l.b16 %v3527
        %v3876 = vunpack.c.h.b16 %v3527
        %v3877 = vunpack.c.l.b16 %v3528
        %v3878 = vunpack.c.h.b16 %v3528
        %v3879 = vunpack.c.l.b16 %v3529
        %v3880 = vunpack.c.h.b16 %v3529
        %v3881 = vpack.c.b16 %v3819, %v3817
        %v3882 = vpack.c.b16 %v3820, %v3818
        %v3883 = vpack.c.b16 %v3823, %v3821
        %v3884 = vpack.c.b16 %v3824, %v3822
        %v3885 = vpack.c.b16 %v3827, %v3825
        %v3886 = vpack.c.b16 %v3828, %v3826
        %v3887 = vpack.c.b16 %v3831, %v3829
        %v3888 = vpack.c.b16 %v3832, %v3830
        %v3889 = vpack.c.b16 %v3835, %v3833
        %v3890 = vpack.c.b16 %v3836, %v3834
        %v3891 = vpack.c.b16 %v3839, %v3837
        %v3892 = vpack.c.b16 %v3840, %v3838
        %v3893 = vpack.c.b16 %v3843, %v3841
        %v3894 = vpack.c.b16 %v3844, %v3842
        %v3895 = vpack.c.b16 %v3847, %v3845
        %v3896 = vpack.c.b16 %v3848, %v3846
        %v3897 = vpack.c.b16 %v3851, %v3849
        %v3898 = vpack.c.b16 %v3852, %v3850
        %v3899 = vpack.c.b16 %v3855, %v3853
        %v3900 = vpack.c.b16 %v3856, %v3854
        %v3901 = vpack.c.b16 %v3859, %v3857
        %v3902 = vpack.c.b16 %v3860, %v3858
        %v3903 = vpack.c.b16 %v3863, %v3861
        %v3904 = vpack.c.b16 %v3864, %v3862
        %v3905 = vpack.c.b16 %v3867, %v3865
        %v3906 = vpack.c.b16 %v3868, %v3866
        %v3907 = vpack.c.b16 %v3871, %v3869
        %v3908 = vpack.c.b16 %v3872, %v3870
        %v3909 = vpack.c.b16 %v3875, %v3873
        %v3910 = vpack.c.b16 %v3876, %v3874
        %v3911 = vpack.c.b16 %v3879, %v3877
        %v3912 = vpack.c.b16 %v3880, %v3878
        %3945 = vmatprep.subr.bf16.mxu0 %v3896
        %3946 = vmatpush1.bf16.msra.mxu0 %v3895
        %3947 = vmatprep.subr.bf16.mxu0 %v3894
        %3948 = vmatpush1.bf16.msra.mxu0 %v3893
        %3949 = vmatprep.subr.bf16.mxu0 %v3892
        %3950 = vmatpush1.bf16.msra.mxu0 %v3891
        %3951 = vmatprep.subr.bf16.mxu0 %v3890
        %3952 = vmatpush1.bf16.msra.mxu0 %v3889
        %3953 = vmatprep.subr.bf16.mxu0 %v3888
        %3954 = vmatpush1.bf16.msra.mxu0 %v3887
        %3955 = vmatprep.subr.bf16.mxu0 %v3886
        %3956 = vmatpush1.bf16.msra.mxu0 %v3885
        %3957 = vmatprep.subr.bf16.mxu0 %v3884
        %3958 = vmatpush1.bf16.msra.mxu0 %v3883
        %3959 = vmatprep.subr.bf16.mxu0 %v3882
        %3960 = vmatpush1.bf16.msra.mxu0 %v3881
        %3961 = vmatprep.subr.bf16.mxu0 %v3912
        %3962 = vmatpush2.bf16.msra.mxu0 %v3911
        %3963 = vmatprep.subr.bf16.mxu0 %v3910
        %3964 = vmatpush2.bf16.msra.mxu0 %v3909
        %3965 = vmatprep.subr.bf16.mxu0 %v3908
        %3966 = vmatpush2.bf16.msra.mxu0 %v3907
        %3967 = vmatprep.subr.bf16.mxu0 %v3906
        %3968 = vmatpush2.bf16.msra.mxu0 %v3905
        %3969 = vmatprep.subr.bf16.mxu0 %v3904
        %3970 = vmatpush2.bf16.msra.mxu0 %v3903
        %3971 = vmatprep.subr.bf16.mxu0 %v3902
        %3972 = vmatpush2.bf16.msra.mxu0 %v3901
        %3973 = vmatprep.subr.bf16.mxu0 %v3900
        %3974 = vmatpush2.bf16.msra.mxu0 %v3899
        %3975 = vmatprep.subr.bf16.mxu0 %v3898
        %3976 = vmatpush2.bf16.msra.mxu0 %v3897
        %3977 = vmatprep.mubr.bf16.mxu0 %v3782
        %3978 = vmatmul.mubr.bf16.gmra.mxu0 %v3774
        %v3979 = vpop.f32.mrf.mxu0
        %v3980 = vadd.f32 %v3761, %v3979
        %v3981 = vpop.f32.mrf.mxu0
        %v3982 = vadd.f32 %v3763, %v3981
        %v3983 = vpop.f32.mrf.mxu0
        %v3984 = vpop.f32.mrf.mxu0
        %3985 = vdwg.mxu0
        %v3986 = vld [vmem:[#allocation5 + $0x10] sm:$0xfe]
        %v3987 = vld [vmem:[#allocation5 + $0x18] sm:$0xfe]
        %v3988 = vld [vmem:[#allocation5 + $0x20] sm:$0x1]
        %v3989 = vld [vmem:[#allocation5 + $0x28] sm:$0x1]
        %v3990 = vpack.c.bf16 %v3988, %v3986
        %v3991 = vpack.c.bf16 %v3989, %v3987
        %v3992 = vld [vmem:[#allocation38] sm:$0xff]
        %v3993 = vld [vmem:[#allocation38 + $0x8] sm:$0xff]
        %v3994 = vld [vmem:[#allocation38 + $0x10] sm:$0xff]
        %v3995 = vld [vmem:[#allocation38 + $0x18] sm:$0xff]
        %v3996 = vld [vmem:[#allocation38 + $0x20] sm:$0xff]
        %v3997 = vld [vmem:[#allocation38 + $0x28] sm:$0xff]
        %v3998 = vld [vmem:[#allocation38 + $0x30] sm:$0xff]
        %v3999 = vld [vmem:[#allocation38 + $0x38] sm:$0xff]
        %v4000 = vld [vmem:[#allocation38 + $0x40] sm:$0xff]
        %v4001 = vld [vmem:[#allocation38 + $0x48] sm:$0xff]
        %v4002 = vld [vmem:[#allocation38 + $0x50] sm:$0xff]
        %v4003 = vld [vmem:[#allocation38 + $0x58] sm:$0xff]
        %v4004 = vld [vmem:[#allocation38 + $0x60] sm:$0xff]
        %v4005 = vld [vmem:[#allocation38 + $0x68] sm:$0xff]
        %v4006 = vld [vmem:[#allocation38 + $0x70] sm:$0xff]
        %v4007 = vld [vmem:[#allocation38 + $0x78] sm:$0xff]
        %v4008 = vld [vmem:[#allocation38 + $0x80] sm:$0xff]
        %v4009 = vld [vmem:[#allocation38 + $0x88] sm:$0xff]
        %v4010 = vld [vmem:[#allocation38 + $0x90] sm:$0xff]
        %v4011 = vld [vmem:[#allocation38 + $0x98] sm:$0xff]
        %v4012 = vld [vmem:[#allocation38 + $0xa0] sm:$0xff]
        %v4013 = vld [vmem:[#allocation38 + $0xa8] sm:$0xff]
        %v4014 = vld [vmem:[#allocation38 + $0xb0] sm:$0xff]
        %v4015 = vld [vmem:[#allocation38 + $0xb8] sm:$0xff]
        %v4016 = vld [vmem:[#allocation38 + $0xc0] sm:$0xff]
        %v4017 = vld [vmem:[#allocation38 + $0xc8] sm:$0xff]
        %v4018 = vld [vmem:[#allocation38 + $0xd0] sm:$0xff]
        %v4019 = vld [vmem:[#allocation38 + $0xd8] sm:$0xff]
        %v4020 = vld [vmem:[#allocation38 + $0xe0] sm:$0xff]
        %v4021 = vld [vmem:[#allocation38 + $0xe8] sm:$0xff]
        %v4022 = vld [vmem:[#allocation38 + $0xf0] sm:$0xff]
        %v4023 = vld [vmem:[#allocation38 + $0xf8] sm:$0xff]
        %v4025 = vshrl.u32 %v3990, 16
        %v4027 = vshll.u32 %v3990, 16
        %v4029 = vrot.slane %v4027, 1
        %v4030 = vor.u32 %v4025, %v4029
        %v4032 = vshrl.u32 %v3991, 16
        %v4034 = vshll.u32 %v3991, 16
        %v4036 = vrot.slane %v4034, 1
        %v4037 = vor.u32 %v4032, %v4036
        %v4072 = vunpack.c.l.b16 %v3992
        %v4073 = vunpack.c.h.b16 %v3992
        %v4074 = vunpack.c.l.b16 %v3993
        %v4075 = vunpack.c.h.b16 %v3993
        %v4076 = vunpack.c.l.b16 %v3994
        %v4077 = vunpack.c.h.b16 %v3994
        %v4078 = vunpack.c.l.b16 %v3995
        %v4079 = vunpack.c.h.b16 %v3995
        %v4080 = vunpack.c.l.b16 %v3996
        %v4081 = vunpack.c.h.b16 %v3996
        %v4082 = vunpack.c.l.b16 %v3997
        %v4083 = vunpack.c.h.b16 %v3997
        %v4084 = vunpack.c.l.b16 %v3998
        %v4085 = vunpack.c.h.b16 %v3998
        %v4086 = vunpack.c.l.b16 %v3999
        %v4087 = vunpack.c.h.b16 %v3999
        %v4088 = vunpack.c.l.b16 %v4000
        %v4089 = vunpack.c.h.b16 %v4000
        %v4090 = vunpack.c.l.b16 %v4001
        %v4091 = vunpack.c.h.b16 %v4001
        %v4092 = vunpack.c.l.b16 %v4002
        %v4093 = vunpack.c.h.b16 %v4002
        %v4094 = vunpack.c.l.b16 %v4003
        %v4095 = vunpack.c.h.b16 %v4003
        %v4096 = vunpack.c.l.b16 %v4004
        %v4097 = vunpack.c.h.b16 %v4004
        %v4098 = vunpack.c.l.b16 %v4005
        %v4099 = vunpack.c.h.b16 %v4005
        %v4100 = vunpack.c.l.b16 %v4006
        %v4101 = vunpack.c.h.b16 %v4006
        %v4102 = vunpack.c.l.b16 %v4007
        %v4103 = vunpack.c.h.b16 %v4007
        %v4104 = vunpack.c.l.b16 %v4008
        %v4105 = vunpack.c.h.b16 %v4008
        %v4106 = vunpack.c.l.b16 %v4009
        %v4107 = vunpack.c.h.b16 %v4009
        %v4108 = vunpack.c.l.b16 %v4010
        %v4109 = vunpack.c.h.b16 %v4010
        %v4110 = vunpack.c.l.b16 %v4011
        %v4111 = vunpack.c.h.b16 %v4011
        %v4112 = vunpack.c.l.b16 %v4012
        %v4113 = vunpack.c.h.b16 %v4012
        %v4114 = vunpack.c.l.b16 %v4013
        %v4115 = vunpack.c.h.b16 %v4013
        %v4116 = vunpack.c.l.b16 %v4014
        %v4117 = vunpack.c.h.b16 %v4014
        %v4118 = vunpack.c.l.b16 %v4015
        %v4119 = vunpack.c.h.b16 %v4015
        %v4120 = vunpack.c.l.b16 %v4016
        %v4121 = vunpack.c.h.b16 %v4016
        %v4122 = vunpack.c.l.b16 %v4017
        %v4123 = vunpack.c.h.b16 %v4017
        %v4124 = vunpack.c.l.b16 %v4018
        %v4125 = vunpack.c.h.b16 %v4018
        %v4126 = vunpack.c.l.b16 %v4019
        %v4127 = vunpack.c.h.b16 %v4019
        %v4128 = vunpack.c.l.b16 %v4020
        %v4129 = vunpack.c.h.b16 %v4020
        %v4130 = vunpack.c.l.b16 %v4021
        %v4131 = vunpack.c.h.b16 %v4021
        %v4132 = vunpack.c.l.b16 %v4022
        %v4133 = vunpack.c.h.b16 %v4022
        %v4134 = vunpack.c.l.b16 %v4023
        %v4135 = vunpack.c.h.b16 %v4023
        %v4136 = vpack.c.b16 %v4074, %v4072
        %v4137 = vpack.c.b16 %v4075, %v4073
        %v4138 = vpack.c.b16 %v4078, %v4076
        %v4139 = vpack.c.b16 %v4079, %v4077
        %v4140 = vpack.c.b16 %v4082, %v4080
        %v4141 = vpack.c.b16 %v4083, %v4081
        %v4142 = vpack.c.b16 %v4086, %v4084
        %v4143 = vpack.c.b16 %v4087, %v4085
        %v4144 = vpack.c.b16 %v4090, %v4088
        %v4145 = vpack.c.b16 %v4091, %v4089
        %v4146 = vpack.c.b16 %v4094, %v4092
        %v4147 = vpack.c.b16 %v4095, %v4093
        %v4148 = vpack.c.b16 %v4098, %v4096
        %v4149 = vpack.c.b16 %v4099, %v4097
        %v4150 = vpack.c.b16 %v4102, %v4100
        %v4151 = vpack.c.b16 %v4103, %v4101
        %v4152 = vpack.c.b16 %v4106, %v4104
        %v4153 = vpack.c.b16 %v4107, %v4105
        %v4154 = vpack.c.b16 %v4110, %v4108
        %v4155 = vpack.c.b16 %v4111, %v4109
        %v4156 = vpack.c.b16 %v4114, %v4112
        %v4157 = vpack.c.b16 %v4115, %v4113
        %v4158 = vpack.c.b16 %v4118, %v4116
        %v4159 = vpack.c.b16 %v4119, %v4117
        %v4160 = vpack.c.b16 %v4122, %v4120
        %v4161 = vpack.c.b16 %v4123, %v4121
        %v4162 = vpack.c.b16 %v4126, %v4124
        %v4163 = vpack.c.b16 %v4127, %v4125
        %v4164 = vpack.c.b16 %v4130, %v4128
        %v4165 = vpack.c.b16 %v4131, %v4129
        %v4166 = vpack.c.b16 %v4134, %v4132
        %v4167 = vpack.c.b16 %v4135, %v4133
        %4200 = vmatprep.subr.bf16.mxu0 %v4151
        %4201 = vmatpush1.bf16.msra.mxu0 %v4150
        %4202 = vmatprep.subr.bf16.mxu0 %v4149
        %4203 = vmatpush1.bf16.msra.mxu0 %v4148
        %4204 = vmatprep.subr.bf16.mxu0 %v4147
        %4205 = vmatpush1.bf16.msra.mxu0 %v4146
        %4206 = vmatprep.subr.bf16.mxu0 %v4145
        %4207 = vmatpush1.bf16.msra.mxu0 %v4144
        %4208 = vmatprep.subr.bf16.mxu0 %v4143
        %4209 = vmatpush1.bf16.msra.mxu0 %v4142
        %4210 = vmatprep.subr.bf16.mxu0 %v4141
        %4211 = vmatpush1.bf16.msra.mxu0 %v4140
        %4212 = vmatprep.subr.bf16.mxu0 %v4139
        %4213 = vmatpush1.bf16.msra.mxu0 %v4138
        %4214 = vmatprep.subr.bf16.mxu0 %v4137
        %4215 = vmatpush1.bf16.msra.mxu0 %v4136
        %4216 = vmatprep.subr.bf16.mxu0 %v4167
        %4217 = vmatpush2.bf16.msra.mxu0 %v4166
        %4218 = vmatprep.subr.bf16.mxu0 %v4165
        %4219 = vmatpush2.bf16.msra.mxu0 %v4164
        %4220 = vmatprep.subr.bf16.mxu0 %v4163
        %4221 = vmatpush2.bf16.msra.mxu0 %v4162
        %4222 = vmatprep.subr.bf16.mxu0 %v4161
        %4223 = vmatpush2.bf16.msra.mxu0 %v4160
        %4224 = vmatprep.subr.bf16.mxu0 %v4159
        %4225 = vmatpush2.bf16.msra.mxu0 %v4158
        %4226 = vmatprep.subr.bf16.mxu0 %v4157
        %4227 = vmatpush2.bf16.msra.mxu0 %v4156
        %4228 = vmatprep.subr.bf16.mxu0 %v4155
        %4229 = vmatpush2.bf16.msra.mxu0 %v4154
        %4230 = vmatprep.subr.bf16.mxu0 %v4153
        %4231 = vmatpush2.bf16.msra.mxu0 %v4152
        %4232 = vmatprep.mubr.bf16.mxu0 %v4037
        %4233 = vmatmul.mubr.bf16.gmra.mxu0 %v4030
        %v4234 = vpop.f32.mrf.mxu0
        %v4235 = vadd.f32 0.0, %v4234
        %v4236 = vpop.f32.mrf.mxu0
        %v4237 = vadd.f32 0.0, %v4236
        %v4238 = vpop.f32.mrf.mxu0
        %v4239 = vpop.f32.mrf.mxu0
        %4240 = vdwg.mxu0
        %v4241 = vadd.f32 %v3980, %v4235
        %v4242 = vadd.f32 %v3982, %v4237
        %v4243 = vld [vmem:[#allocation40] sm:$0x3]
        %v4245 = vlaneseq
        %v4246 = vshrl.u32 %v4245, 7
        %v4247 = vsub.s32 0, %v4246
        %v4248 = vrot.slane %v4243, %v4247
        %v4249 = vlaneseq
        %v4250 = vshrl.u32 %v4249, 7
        %v4251 = vsub.s32 1, %v4250
        %v4252 = vrot.slane %v4243, %v4251
        %v4255 = vadd.f32 %v4241, %v4248
        %v4256 = vadd.f32 %v4242, %v4252
        %4257 = vst [vmem:[%s1553] sm:$0xff] %v4255
        %4258 = vst [vmem:[%s1553 + $0x8] sm:$0xff] %v4256
        %4259 = vst [vmem:[%s1560] sm:$0xf] %v3179
        %4260 = vst.msk [vmem:[%s1567] sm:$0x3] %vm2398, %v2639
        %s4261 = sand.u32 %s859, 1
        %s4262 = scalar_lea.sflag [#allocation10], %s4261
        %s4263 = sand.u32 %s859, 1
        %s4264 = smul.addr %s4263, 16
        %s4265 = scalar_lea.vmem [#allocation55], %s4264
        %s4266 = sand.u32 %s111, 1
        %s4267 = scalar_lea.sflag [#allocation57], %s4266
        %s4268 = sand.u32 %s885, 1
        %s4269 = smul.addr %s4268, 4
        %s4270 = scalar_lea.vmem [#allocation56], %s4269
        %s4271 = sand.u32 %s111, 1
        %s4272 = scalar_lea.sflag [#allocation57], %s4271
        %s4273 = sand.u32 %s911, 1
        %s4274 = smul.addr %s4273, 2
        %s4275 = scalar_lea.vmem [#allocation58], %s4274
        // Predicated region
        $region281: #{tpu_custom_call.1} parent=159 // pred_check
          %p4276 = pneg %p869
        $region282: #{tpu_custom_call.1} parent=159 // pred_check_branch
          %4278 = sbr.rel (%p4276) target = $region284
        $region283: #{tpu_custom_call.1} parent=159 // pred_region
          %s4280 = ssub.s32 256, 256
          %4281 = vsyncadd %s4262, %s4280
          %s4282 = smul.addr %s111, 2
          %s4283 = smul.addr %s4282, 128
          %s4284 = scalar_lea.hbm %s71, %s4283
          %s4286 = sshll.u32 %s4265, 4
          %s4287 = int_to_ptr.vmem [resolvable:$true] %s4286
          %4289 = dma.vmem_to_hbm [thread:$0]  %s4287, 256, %s4284, %s4262
        $region284: #{tpu_custom_call.1} parent=159 // pred_fallthru
          _
        // Predicated region
        $region285: #{tpu_custom_call.1} parent=159 // pred_check
          %p4290 = pneg %p895
        $region286: #{tpu_custom_call.1} parent=159 // pred_check_branch
          %4292 = sbr.rel (%p4290) target = $region288
        $region287: #{tpu_custom_call.1} parent=159 // pred_region
          %s4294 = ssub.s32 64, 64
          %4295 = vsyncadd %s4267, %s4294
          %s4296 = smul.addr %s111, 64
          %s4297 = scalar_lea.hbm %s73, %s4296
          %s4299 = sshll.u32 %s4270, 4
          %s4300 = int_to_ptr.vmem [resolvable:$true] %s4299
          %4302 = dma.vmem_to_hbm [thread:$0]  %s4300, 64, %s4297, %s4267
        $region288: #{tpu_custom_call.1} parent=159 // pred_fallthru
          _
        // Predicated region
        $region289: #{tpu_custom_call.1} parent=159 // pred_check
          %p4303 = pneg %p921
        $region290: #{tpu_custom_call.1} parent=159 // pred_check_branch
          %4305 = sbr.rel (%p4303) target = $region292
        $region291: #{tpu_custom_call.1} parent=159 // pred_region
          %s4307 = ssub.s32 32, 32
          %4308 = vsyncadd %s4272, %s4307
          %s4309 = smul.addr %s111, 32
          %s4310 = scalar_lea.hbm %s75, %s4309
          %s4312 = sshll.u32 %s4275, 4
          %s4313 = int_to_ptr.vmem [resolvable:$true] %s4312
          %4315 = dma.vmem_to_hbm [thread:$0]  %s4313, 32, %s4310, %s4272
        $region292: #{tpu_custom_call.1} parent=159 // pred_fallthru
          _
      $region160: #{tpu_custom_call.1} parent=5 // pred_fallthru
        _
      %p4316 = scmp.le.s32.totalorder 2, %s106
      // Predicated region
      $region293: #{tpu_custom_call.1} parent=5 // pred_check
        %p4317 = pneg %p4316
      $region294: #{tpu_custom_call.1} parent=5 // pred_check_branch
        %4319 = sbr.rel (%p4317) target = $region296
      $region295: #{tpu_custom_call.1} parent=5 // pred_region
        %s4320 = ssub.s32 %s106, 2
        // Predicated region
        $region297: #{tpu_custom_call.1} parent=295 // pred_check
          %p4321 = pneg %p875
        $region298: #{tpu_custom_call.1} parent=295 // pred_check_branch
          %4323 = sbr.rel (%p4321) target = $region300
        $region299: #{tpu_custom_call.1} parent=295 // pred_region
          %s4324 = sand.u32 %s860, 1
          %s4325 = scalar_lea.sflag [#allocation10], %s4324
          %s4326 = sand.u32 %s860, 1
          %s4327 = smul.addr %s4326, 16
          %s4328 = scalar_lea.vmem [#allocation55], %s4327
          %4329 = dma.done %s4325, 256
        $region300: #{tpu_custom_call.1} parent=295 // pred_fallthru
          _
        // Predicated region
        $region301: #{tpu_custom_call.1} parent=295 // pred_check
          %p4330 = pneg %p901
        $region302: #{tpu_custom_call.1} parent=295 // pred_check_branch
          %4332 = sbr.rel (%p4330) target = $region304
        $region303: #{tpu_custom_call.1} parent=295 // pred_region
          %s4333 = sand.u32 %s112, 1
          %s4334 = scalar_lea.sflag [#allocation57], %s4333
          %s4335 = sand.u32 %s886, 1
          %s4336 = smul.addr %s4335, 4
          %s4337 = scalar_lea.vmem [#allocation56], %s4336
          %4338 = dma.done %s4334, 64
        $region304: #{tpu_custom_call.1} parent=295 // pred_fallthru
          _
        // Predicated region
        $region305: #{tpu_custom_call.1} parent=295 // pred_check
          %p4339 = pneg %p927
        $region306: #{tpu_custom_call.1} parent=295 // pred_check_branch
          %4341 = sbr.rel (%p4339) target = $region308
        $region307: #{tpu_custom_call.1} parent=295 // pred_region
          %s4342 = sand.u32 %s112, 1
          %s4343 = scalar_lea.sflag [#allocation57], %s4342
          %s4344 = sand.u32 %s912, 1
          %s4345 = smul.addr %s4344, 2
          %s4346 = scalar_lea.vmem [#allocation58], %s4345
          %4347 = dma.done %s4343, 32
        $region308: #{tpu_custom_call.1} parent=295 // pred_fallthru
          _
      $region296: #{tpu_custom_call.1} parent=5 // pred_fallthru
        _
    $region6: #{tpu_custom_call.1} parent=1 // loop_footer
      %s110 = sadd.s32 1, %s106
    $region7: #{tpu_custom_call.1} parent=1 // loop_footer_branch
      %105 = sbr.rel target = $region3
    $region8: #{tpu_custom_call.1} parent=1 // loop_exit
      _
    %4348 = vsyncpa [#allocation9], 1
    %s4349 = scalar_lea.sflag [#allocation9], 1
    %4350 = vsyncpa %s4349, 1
    %4351 = vsyncpa [#allocation12], 1
    %4352 = vsyncpa [#allocation15], 1
    %4353 = vsyncpa [#allocation18], 1
    %4354 = vsyncpa [#allocation21], 1
    %4355 = vsyncpa [#allocation24], 1
    %4356 = vsyncpa [#allocation27], 1
    %4357 = vsyncpa [#allocation30], 1
    %4358 = vsyncpa [#allocation33], 1
    %4359 = vsyncpa [#allocation36], 1
    %4360 = vsyncpa [#allocation39], 1
    %4361 = vsyncpa [#allocation42], 1
    %4362 = vsyncpa [#allocation45], 1
    %4363 = vsyncpa [#allocation48], 1
    %4364 = vsyncpa [#allocation51], 1
    %4365 = vsyncpa [#allocation54], 1
    %4366 = vsyncpa [#allocation10], 1
    %s4367 = scalar_lea.sflag [#allocation10], 1
    %4368 = vsyncpa %s4367, 1
    %4369 = vsyncpa [#allocation57], 1
    %s4370 = scalar_lea.sflag [#allocation57], 1
    %4371 = vsyncpa %s4370, 1

</llo_original>
